<compile_context>
chip_gen: v7x
topology: tpu7x:2x2x1
jax: 0.10.0
libtpu: 0.0.40
codegen_flags: <defaults>
</compile_context>

<pallas_src>
import functools

import jax
import jax.numpy as jnp
from jax.experimental import pallas as pl
from jax.experimental.pallas import tpu as pltpu

_ROW_TARGET = 512  # target rows (sublanes) per tile for elementwise kernels


# --------------------------- tiling helpers ---------------------------------

def _round_up(x, m):
    return (x + m - 1) // m * m


def _pick_rows_tile(m, target=_ROW_TARGET):
    """Return (padded_rows, tile). Tile is 8-aligned and never unbounded."""
    if m <= target:
        r = _round_up(m, 8)
        return r, r
    mp = _round_up(m, target)
    return mp, target


def _largest_divisor_le(n, cap):
    cap = max(1, min(n, cap))
    for t in range(cap, 0, -1):
        if n % t == 0:
            return t
    return 1


def _pick_cout_tile(cout):
    for t in (256, 128):
        if cout % t == 0:
            return t
    return cout  # full dim is always a legal block extent


# --------------------------- kernel 1: ConvTranspose2d(2,2) + skip ----------
# View of the up-sampled tensor: (N,2H,2W,C) == reshape(N*H, 2, W, 2*C)  [free reshape],
# where the last dim packs the two horizontal sub-pixels [j=0 | j=1].  The kernel writes
# that layout directly and fuses bias + skip-sum / channel-concat in the epilogue.

def _up_combine_kernel(*refs, mode):
    if mode == "none":
        x_ref, w_ref, b_ref, o_ref = refs
        skip_ref = None
    else:
        x_ref, w_ref, b_ref, skip_ref, o_ref = refs

    tr, wdim, cin = x_ref.shape
    cup = w_ref.shape[-1]
    xm = x_ref[...].astype(jnp.bfloat16).reshape(tr * wdim, cin)   # bf16 MXU operand
    bias = b_ref[...]                                              # (1, cup) f32

    for i in range(2):  # vertical sub-pixel
        y0 = jnp.dot(xm, w_ref[2 * i + 0], preferred_element_type=jnp.float32) + bias
        y1 = jnp.dot(xm, w_ref[2 * i + 1], preferred_element_type=jnp.float32) + bias
        y0 = y0.reshape(tr, wdim, cup)
        y1 = y1.reshape(tr, wdim, cup)
        if mode == "sum":
            row = jnp.concatenate([y0, y1], axis=-1) + skip_ref[:, i, :, :]
            out = row.astype(o_ref.dtype)
        elif mode == "concat":
            csk = skip_ref.shape[-1] // 2
            sk = skip_ref[:, i, :, :].astype(o_ref.dtype)
            out = jnp.concatenate(
                [y0.astype(o_ref.dtype), sk[..., :csk],
                 y1.astype(o_ref.dtype), sk[..., csk:]], axis=-1)
        else:  # "none": plain up-sample (used only on the odd-size fallback path)
            out = jnp.concatenate([y0, y1], axis=-1).astype(o_ref.dtype)
        o_ref[:, i, :, :] = out


def conv_transpose2x2_combine(x_nhwc, w_iokk, bias, skip_nhwc, mode):
    """ConvTranspose2d(k=2, s=2) fused with bias + skip sum/concat. Returns NHWC bf16."""
    n, h, w, cin = x_nhwc.shape
    cup = w_iokk.shape[1]
    # PyTorch weight (Cin, Cout, 2, 2) -> (4, Cin, Cout), index = 2*i + j
    w4 = jnp.transpose(w_iokk, (2, 3, 0, 1)).reshape(4, cin, cup).astype(jnp.bfloat16)

    nh = n * h
    x3 = x_nhwc.reshape(nh, w, cin)
    tr = _largest_divisor_le(nh, max(1, _ROW_TARGET // max(w, 1)))
    grid = (nh // tr,)

    in_specs = [
        pl.BlockSpec((tr, w, cin), lambda r: (r, 0, 0)),
        pl.BlockSpec((4, cin, cup), lambda r: (0, 0, 0)),
        pl.BlockSpec((1, cup), lambda r: (0, 0)),
    ]
    args = [x3, w4, bias.reshape(1, cup).astype(jnp.float32)]

    if mode == "none":
        c_out = cup
    else:
        csk = skip_nhwc.shape[-1]
        c_out = cup if mode == "sum" else cup + csk
        skip4 = skip_nhwc.reshape(nh, 2, w, 2 * csk)      # free reshape of (N,2H,2W,Csk)
        in_specs.append(pl.BlockSpec((tr, 2, w, 2 * csk), lambda r: (r, 0, 0, 0)))
        args.append(skip4)

    out4 = pl.pallas_call(
        functools.partial(_up_combine_kernel, mode=mode),
        out_shape=jax.ShapeDtypeStruct((nh, 2, w, 2 * c_out), jnp.bfloat16),
        grid=grid,
        in_specs=in_specs,
        out_specs=pl.BlockSpec((tr, 2, w, 2 * c_out), lambda r: (r, 0, 0, 0)),
        compiler_params=pltpu.CompilerParams(dimension_semantics=("parallel",)),
    )(*args)
    return out4.reshape(n, 2 * h, 2 * w, c_out)            # free reshape


# --------------------------- kernel 2: direct 3x3 conv + BN statistics ------

def _conv3x3_stats_kernel(x_ref, w_ref, b_ref, y_ref, stats_ref):
    n = pl.program_id(1)                 # batch axis ('arbitrary': stats accumulate over it)
    h2, w2, tn = y_ref.shape
    cin = x_ref.shape[-1]

    x = x_ref[...]                       # (h2+2, w2+2, cin) bf16, zero-padded borders
    acc = jnp.zeros((h2 * w2, tn), jnp.float32)
    for kh in range(3):
        for kw in range(3):
            window = x[kh:kh + h2, kw:kw + w2, :].reshape(h2 * w2, cin)
            acc = acc + jnp.dot(window, w_ref[kh, kw],
                                preferred_element_type=jnp.float32)
    acc = acc + b_ref[...]               # conv bias (1, tn)
    y_ref[...] = acc.reshape(h2, w2, tn).astype(y_ref.dtype)

    # fused BatchNorm statistics (f32, from the f32 accumulator, before the bf16 store)
    @pl.when(n == 0)
    def _init():
        stats_ref[...] = jnp.zeros_like(stats_ref)

    s1 = jnp.sum(acc, axis=0, keepdims=True)
    s2 = jnp.sum(acc * acc, axis=0, keepdims=True)
    stats_ref[...] += jnp.concatenate([s1, s2], axis=0)


def conv3x3_bn_stats(x_nhwc, w_oihw, bias):
    """3x3 / stride 1 / pad 1 conv. Returns (y bf16 NHWC, stats[2, Cout] = per-channel sum, sumsq)."""
    n, h, w, cin = x_nhwc.shape
    cout = w_oihw.shape[0]
    xpad = jnp.pad(x_nhwc.astype(jnp.bfloat16), ((0, 0), (1, 1), (1, 1), (0, 0)))
    w_hwio = jnp.transpose(w_oihw, (2, 3, 1, 0)).astype(jnp.bfloat16)   # (3,3,Cin,Cout)
    tn = _pick_cout_tile(cout)

    y, stats = pl.pallas_call(
        _conv3x3_stats_kernel,
        out_shape=(jax.ShapeDtypeStruct((n, h, w, cout), jnp.bfloat16),
                   jax.ShapeDtypeStruct((2, cout), jnp.float32)),
        grid=(cout // tn, n),
        in_specs=[
            pl.BlockSpec((None, h + 2, w + 2, cin), lambda j, b: (b, 0, 0, 0)),
            pl.BlockSpec((3, 3, cin, tn), lambda j, b: (0, 0, 0, j)),
            pl.BlockSpec((1, tn), lambda j, b: (0, j)),
        ],
        out_specs=(
            pl.BlockSpec((None, h, w, tn), lambda j, b: (b, 0, 0, j)),
            pl.BlockSpec((2, tn), lambda j, b: (0, j)),   # accumulator across batch axis
        ),
        compiler_params=pltpu.CompilerParams(
            dimension_semantics=("parallel", "arbitrary")),
    )(xpad, w_hwio, bias.reshape(1, cout).astype(jnp.float32))
    return y, stats


# --------------------------- kernel 3: BatchNorm apply + ReLU ----------------

def _bn_relu_kernel(y_ref, stats_ref, g_ref, b_ref, o_ref, *, inv_count, eps):
    mean = stats_ref[0:1, :] * inv_count
    var = stats_ref[1:2, :] * inv_count - mean * mean     # biased batch variance (training mode)
    scale = g_ref[...] * jax.lax.rsqrt(var + eps)
    shift = b_ref[...] - mean * scale
    y = y_ref[...].astype(jnp.float32)
    o_ref[...] = jnp.maximum(y * scale + shift, 0.0)


def batchnorm_relu(y_nhwc, stats, gamma, beta, eps=1e-5):
    n, h, w, c = y_nhwc.shape
    m = n * h * w
    y2 = y_nhwc.reshape(m, c)
    mp, tm = _pick_rows_tile(m)
    if mp != m:
        y2 = jnp.pad(y2, ((0, mp - m), (0, 0)))
    out = pl.pallas_call(
        functools.partial(_bn_relu_kernel, inv_count=1.0 / float(m), eps=eps),
        out_shape=jax.ShapeDtypeStruct((mp, c), jnp.float32),
        grid=(mp // tm,),
        in_specs=[
            pl.BlockSpec((tm, c), lambda i: (i, 0)),
            pl.BlockSpec((2, c), lambda i: (0, 0)),
            pl.BlockSpec((1, c), lambda i: (0, 0)),
            pl.BlockSpec((1, c), lambda i: (0, 0)),
        ],
        out_specs=pl.BlockSpec((tm, c), lambda i: (i, 0)),
        compiler_params=pltpu.CompilerParams(dimension_semantics=("parallel",)),
    )(y2, stats, gamma.reshape(1, c).astype(jnp.float32),
      beta.reshape(1, c).astype(jnp.float32))
    if mp != m:
        out = out[:m]
    return out.reshape(n, h, w, c)


# --------------------------- kernel 4: unfused skip combine (fallback) -------

def _combine_kernel(a_ref, b_ref, o_ref, *, mode):
    if mode == "sum":
        o_ref[...] = (a_ref[...].astype(jnp.float32)
                      + b_ref[...].astype(jnp.float32)).astype(o_ref.dtype)
    else:
        o_ref[...] = jnp.concatenate(
            [a_ref[...].astype(o_ref.dtype), b_ref[...].astype(o_ref.dtype)], axis=-1)


def combine_skip(a_nhwc, skip_nhwc, mode):
    n, h, w, ca = a_nhwc.shape
    cb = skip_nhwc.shape[-1]
    m = n * h * w
    a2 = a_nhwc.reshape(m, ca)
    b2 = skip_nhwc.reshape(m, cb)
    mp, tm = _pick_rows_tile(m)
    if mp != m:
        a2 = jnp.pad(a2, ((0, mp - m), (0, 0)))
        b2 = jnp.pad(b2, ((0, mp - m), (0, 0)))
    c_out = ca if mode == "sum" else ca + cb
    out = pl.pallas_call(
        functools.partial(_combine_kernel, mode=mode),
        out_shape=jax.ShapeDtypeStruct((mp, c_out), jnp.bfloat16),
        grid=(mp // tm,),
        in_specs=[pl.BlockSpec((tm, ca), lambda i: (i, 0)),
                  pl.BlockSpec((tm, cb), lambda i: (i, 0))],
        out_specs=pl.BlockSpec((tm, c_out), lambda i: (i, 0)),
        compiler_params=pltpu.CompilerParams(dimension_semantics=("parallel",)),
    )(a2, b2)
    if mp != m:
        out = out[:m]
    return out.reshape(n, h, w, c_out)


# --------------------------- DecoderBlock forward ----------------------------

def decoder_block_forward(params, x_nchw, skip_nchw, mode):
    assert mode in ("sum", "concat")
    x = jnp.transpose(x_nchw, (0, 2, 3, 1)).astype(jnp.float32)        # NCHW -> NHWC (glue)
    skip = jnp.transpose(skip_nchw, (0, 2, 3, 1)).astype(jnp.float32)
    n, h, w, _ = x.shape
    hs, ws = skip.shape[1], skip.shape[2]
    h_pad, w_pad = hs - 2 * h, ws - 2 * w

    if h_pad == 0 and w_pad == 0:
        # common (even-size) path: up-sample, bias and skip combine fully fused
        s = conv_transpose2x2_combine(x, params["up_w"], params["up_b"], skip, mode)
    else:
        # TODO(synk): odd skip sizes take an unfused path; reflect pad stays plain-JAX glue.
        up = conv_transpose2x2_combine(x, params["up_w"], params["up_b"], None, "none")
        up = jnp.pad(up.astype(jnp.float32),
                     ((0, 0), (h_pad // 2, h_pad - h_pad // 2),
                      (w_pad // 2, w_pad - w_pad // 2), (0, 0)), mode="reflect")
        s = combine_skip(up, skip, mode)

    y, stats = conv3x3_bn_stats(s, params["conv_w"], params["conv_b"])
    out = batchnorm_relu(y, stats, params["bn_g"], params["bn_b"])
    return jnp.transpose(out, (0, 3, 1, 2))                            # NHWC -> NCHW


# --------------------------- deterministic params ----------------------------

def init_params(in_channels, out_channels, mode, key):
    ks = jax.random.split(key, 6)

    def nrm(k, shape, scale=0.1):
        return scale * jax.random.normal(k, shape, dtype=jnp.float32)

    up_out = out_channels if mode == "sum" else in_channels // 2
    conv_in = out_channels if mode == "sum" else in_channels
    return {
        "up_w": nrm(ks[0], (in_channels, up_out, 2, 2)),     # ConvTranspose2d weight (Cin,Cout,2,2)
        "up_b": nrm(ks[1], (up_out,)),
        "conv_w": nrm(ks[2], (out_channels, conv_in, 3, 3)),  # Conv2d weight (Cout,Cin,3,3)
        "conv_b": nrm(ks[3], (out_channels,)),
        "bn_g": 1.0 + nrm(ks[4], (out_channels,)),
        "bn_b": nrm(ks[5], (out_channels,)),
    }


# --------------------------- driver ------------------------------------------

if __name__ == "__main__":
    key = jax.random.PRNGKey(0)
    kx, ks, kp1, kp2 = jax.random.split(key, 4)

    in_ch, out_ch = 128, 64
    x = jax.random.normal(kx, (2, in_ch, 8, 8), dtype=jnp.float32)          # NCHW
    x_skip = jax.random.normal(ks, (2, out_ch, 16, 16), dtype=jnp.float32)  # out_ch == in_ch // 2

    fwd = jax.jit(decoder_block_forward, static_argnames="mode")

    params_sum = init_params(in_ch, out_ch, "sum", kp1)
    out_sum = jax.block_until_ready(fwd(params_sum, x, x_skip, mode="sum"))
    assert out_sum.shape == (2, out_ch, 16, 16), out_sum.shape
    assert bool(jnp.all(jnp.isfinite(out_sum)))

    params_cat = init_params(in_ch, out_ch, "concat", kp2)
    out_cat = jax.block_until_ready(fwd(params_cat, x, x_skip, mode="concat"))
    assert out_cat.shape == (2, out_ch, 16, 16), out_cat.shape
    assert bool(jnp.all(jnp.isfinite(out_cat)))

    print("KERNEL_OK")
</pallas_src>

<mosaic_0001>
module attributes {stable_mosaic.version = 11 : i64} {
  func.func @_up_combine_kernel(%arg0: i32, %arg1: memref<16x8x128xf32, #tpu.memory_space<vmem>>, %arg2: memref<4x128x64xbf16, #tpu.memory_space<vmem>>, %arg3: memref<1x64xf32, #tpu.memory_space<vmem>>, %arg4: memref<16x2x8x128xf32, #tpu.memory_space<vmem>>, %arg5: memref<16x2x8x128xbf16, #tpu.memory_space<vmem>>) attributes {dimension_semantics = [#tpu.dimension_semantics<parallel>], iteration_bounds = array<i64: 1>, scalar_prefetch = 0 : i64, scratch_operands = 0 : i64, tpu.core_type = #tpu.core_type<tc>, window_params = [{transform_indices = @transform_0, window_bounds = array<i64: 16, 8, 128>}, {pipeline_mode = #tpu.pipeline_mode<synchronous>, transform_indices = @transform_1, window_bounds = array<i64: 4, 128, 64>}, {pipeline_mode = #tpu.pipeline_mode<synchronous>, transform_indices = @transform_2, window_bounds = array<i64: 1, 64>}, {transform_indices = @transform_3, window_bounds = array<i64: 16, 2, 8, 128>}, {transform_indices = @transform_4, window_bounds = array<i64: 16, 2, 8, 128>}]} {
    %c0 = arith.constant 0 : index
    %c0_0 = arith.constant 0 : index
    %c0_1 = arith.constant 0 : index
    %0 = vector.load %arg1[%c0, %c0_0, %c0_1] : memref<16x8x128xf32, #tpu.memory_space<vmem>>, vector<16x8x128xf32>
    %1 = arith.truncf %0 : vector<16x8x128xf32> to vector<16x8x128xbf16>
    %2 = vector.shape_cast %1 : vector<16x8x128xbf16> to vector<128x128xbf16>
    %c0_2 = arith.constant 0 : index
    %c0_3 = arith.constant 0 : index
    %3 = vector.load %arg3[%c0_2, %c0_3] : memref<1x64xf32, #tpu.memory_space<vmem>>, vector<1x64xf32>
    %c0_4 = arith.constant 0 : index
    %c0_5 = arith.constant 0 : index
    %c0_6 = arith.constant 0 : index
    %4 = vector.load %arg2[%c0_4, %c0_5, %c0_6] : memref<4x128x64xbf16, #tpu.memory_space<vmem>>, vector<1x128x64xbf16>
    %5 = vector.shape_cast %4 : vector<1x128x64xbf16> to vector<128x64xbf16>
    %cst = arith.constant dense<0.000000e+00> : vector<128x64xf32>
    %6 = tpu.matmul %2, %5, %cst {dimension_numbers = #tpu.dot_dimension_numbers<[1], [0], [0], [1], [0, 0, 1, 1], [], []>} : vector<128x128xbf16>, vector<128x64xbf16>, vector<128x64xf32> -> vector<128x64xf32>
    %7 = vector.broadcast %3 : vector<1x64xf32> to vector<128x64xf32>
    %8 = arith.addf %6, %7 : vector<128x64xf32>
    %c1 = arith.constant 1 : index
    %c0_7 = arith.constant 0 : index
    %c0_8 = arith.constant 0 : index
    %9 = vector.load %arg2[%c1, %c0_7, %c0_8] : memref<4x128x64xbf16, #tpu.memory_space<vmem>>, vector<1x128x64xbf16>
    %10 = vector.shape_cast %9 : vector<1x128x64xbf16> to vector<128x64xbf16>
    %cst_9 = arith.constant dense<0.000000e+00> : vector<128x64xf32>
    %11 = tpu.matmul %2, %10, %cst_9 {dimension_numbers = #tpu.dot_dimension_numbers<[1], [0], [0], [1], [0, 0, 1, 1], [], []>} : vector<128x128xbf16>, vector<128x64xbf16>, vector<128x64xf32> -> vector<128x64xf32>
    %12 = vector.broadcast %3 : vector<1x64xf32> to vector<128x64xf32>
    %13 = arith.addf %11, %12 : vector<128x64xf32>
    %14 = vector.shape_cast %8 : vector<128x64xf32> to vector<16x8x64xf32>
    %15 = vector.shape_cast %13 : vector<128x64xf32> to vector<16x8x64xf32>
    %16 = tpu.concatenate %14, %15 in 2 : vector<16x8x64xf32>, vector<16x8x64xf32> -> vector<16x8x128xf32>
    %c0_10 = arith.constant 0 : index
    %c0_11 = arith.constant 0 : index
    %c0_12 = arith.constant 0 : index
    %c0_13 = arith.constant 0 : index
    %17 = vector.load %arg4[%c0_10, %c0_11, %c0_12, %c0_13] : memref<16x2x8x128xf32, #tpu.memory_space<vmem>>, vector<16x1x8x128xf32>
    %18 = vector.shape_cast %17 : vector<16x1x8x128xf32> to vector<16x8x128xf32>
    %19 = arith.addf %16, %18 : vector<16x8x128xf32>
    %20 = arith.truncf %19 : vector<16x8x128xf32> to vector<16x8x128xbf16>
    %c0_14 = arith.constant 0 : index
    %c0_15 = arith.constant 0 : index
    %c0_16 = arith.constant 0 : index
    %c0_17 = arith.constant 0 : index
    %21 = vector.load %arg5[%c0_14, %c0_15, %c0_16, %c0_17] : memref<16x2x8x128xbf16, #tpu.memory_space<vmem>>, vector<16x1x8x128xbf16>
    %22 = vector.shape_cast %21 : vector<16x1x8x128xbf16> to vector<16x8x128xbf16>
    %23 = vector.shape_cast %20 : vector<16x8x128xbf16> to vector<16x1x8x128xbf16>
    tpu.vector_store %arg5[%c0_14, %c0_15, %c0_16, %c0_17], %23 {strides = array<i32>} : memref<16x2x8x128xbf16, #tpu.memory_space<vmem>>, vector<16x1x8x128xbf16>,
    %c2 = arith.constant 2 : index
    %c0_18 = arith.constant 0 : index
    %c0_19 = arith.constant 0 : index
    %24 = vector.load %arg2[%c2, %c0_18, %c0_19] : memref<4x128x64xbf16, #tpu.memory_space<vmem>>, vector<1x128x64xbf16>
    %25 = vector.shape_cast %24 : vector<1x128x64xbf16> to vector<128x64xbf16>
    %cst_20 = arith.constant dense<0.000000e+00> : vector<128x64xf32>
    %26 = tpu.matmul %2, %25, %cst_20 {dimension_numbers = #tpu.dot_dimension_numbers<[1], [0], [0], [1], [0, 0, 1, 1], [], []>} : vector<128x128xbf16>, vector<128x64xbf16>, vector<128x64xf32> -> vector<128x64xf32>
    %27 = vector.broadcast %3 : vector<1x64xf32> to vector<128x64xf32>
    %28 = arith.addf %26, %27 : vector<128x64xf32>
    %c3 = arith.constant 3 : index
    %c0_21 = arith.constant 0 : index
    %c0_22 = arith.constant 0 : index
    %29 = vector.load %arg2[%c3, %c0_21, %c0_22] : memref<4x128x64xbf16, #tpu.memory_space<vmem>>, vector<1x128x64xbf16>
    %30 = vector.shape_cast %29 : vector<1x128x64xbf16> to vector<128x64xbf16>
    %cst_23 = arith.constant dense<0.000000e+00> : vector<128x64xf32>
    %31 = tpu.matmul %2, %30, %cst_23 {dimension_numbers = #tpu.dot_dimension_numbers<[1], [0], [0], [1], [0, 0, 1, 1], [], []>} : vector<128x128xbf16>, vector<128x64xbf16>, vector<128x64xf32> -> vector<128x64xf32>
    %32 = vector.broadcast %3 : vector<1x64xf32> to vector<128x64xf32>
    %33 = arith.addf %31, %32 : vector<128x64xf32>
    %34 = vector.shape_cast %28 : vector<128x64xf32> to vector<16x8x64xf32>
    %35 = vector.shape_cast %33 : vector<128x64xf32> to vector<16x8x64xf32>
    %36 = tpu.concatenate %34, %35 in 2 : vector<16x8x64xf32>, vector<16x8x64xf32> -> vector<16x8x128xf32>
    %c0_24 = arith.constant 0 : index
    %c1_25 = arith.constant 1 : index
    %c0_26 = arith.constant 0 : index
    %c0_27 = arith.constant 0 : index
    %37 = vector.load %arg4[%c0_24, %c1_25, %c0_26, %c0_27] : memref<16x2x8x128xf32, #tpu.memory_space<vmem>>, vector<16x1x8x128xf32>
    %38 = vector.shape_cast %37 : vector<16x1x8x128xf32> to vector<16x8x128xf32>
    %39 = arith.addf %36, %38 : vector<16x8x128xf32>
    %40 = arith.truncf %39 : vector<16x8x128xf32> to vector<16x8x128xbf16>
    %c0_28 = arith.constant 0 : index
    %c1_29 = arith.constant 1 : index
    %c0_30 = arith.constant 0 : index
    %c0_31 = arith.constant 0 : index
    %41 = vector.load %arg5[%c0_28, %c1_29, %c0_30, %c0_31] : memref<16x2x8x128xbf16, #tpu.memory_space<vmem>>, vector<16x1x8x128xbf16>
    %42 = vector.shape_cast %41 : vector<16x1x8x128xbf16> to vector<16x8x128xbf16>
    %43 = vector.shape_cast %40 : vector<16x8x128xbf16> to vector<16x1x8x128xbf16>
    tpu.vector_store %arg5[%c0_28, %c1_29, %c0_30, %c0_31], %43 {strides = array<i32>} : memref<16x2x8x128xbf16, #tpu.memory_space<vmem>>, vector<16x1x8x128xbf16>,
    return
  }
  func.func @transform_0(%arg0: i32) -> (i32, i32, i32) {
    %c0_i32 = arith.constant 0 : i32
    %c0_i32_0 = arith.constant 0 : i32
    %c0_i32_1 = arith.constant 0 : i32
    return %arg0, %c0_i32, %c0_i32_0 : i32, i32, i32
  }
  func.func @transform_1(%arg0: i32) -> (i32, i32, i32) {
    %c0_i32 = arith.constant 0 : i32
    %c0_i32_0 = arith.constant 0 : i32
    %c0_i32_1 = arith.constant 0 : i32
    %c0_i32_2 = arith.constant 0 : i32
    return %c0_i32, %c0_i32_0, %c0_i32_1 : i32, i32, i32
  }
  func.func @transform_2(%arg0: i32) -> (i32, i32) {
    %c0_i32 = arith.constant 0 : i32
    %c0_i32_0 = arith.constant 0 : i32
    %c0_i32_1 = arith.constant 0 : i32
    return %c0_i32, %c0_i32_0 : i32, i32
  }
  func.func @transform_3(%arg0: i32) -> (i32, i32, i32, i32) {
    %c0_i32 = arith.constant 0 : i32
    %c0_i32_0 = arith.constant 0 : i32
    %c0_i32_1 = arith.constant 0 : i32
    %c0_i32_2 = arith.constant 0 : i32
    return %arg0, %c0_i32, %c0_i32_0, %c0_i32_1 : i32, i32, i32, i32
  }
  func.func @transform_4(%arg0: i32) -> (i32, i32, i32, i32) {
    %c0_i32 = arith.constant 0 : i32
    %c0_i32_0 = arith.constant 0 : i32
    %c0_i32_1 = arith.constant 0 : i32
    %c0_i32_2 = arith.constant 0 : i32
    return %arg0, %c0_i32, %c0_i32_0, %c0_i32_1 : i32, i32, i32, i32
  }
}

module attributes {stable_mosaic.version = 11 : i64} {
  func.func @_conv3x3_stats_kernel(%arg0: i32, %arg1: i32, %arg2: memref<1x18x18x64xbf16, #tpu.memory_space<vmem>>, %arg3: memref<3x3x64x64xbf16, #tpu.memory_space<vmem>>, %arg4: memref<1x64xf32, #tpu.memory_space<vmem>>, %arg5: memref<1x16x16x64xbf16, #tpu.memory_space<vmem>>, %arg6: memref<2x64xf32, #tpu.memory_space<vmem>>) attributes {dimension_semantics = [#tpu.dimension_semantics<parallel>, #tpu.dimension_semantics<arbitrary>], iteration_bounds = array<i64: 1, 2>, scalar_prefetch = 0 : i64, scratch_operands = 0 : i64, tpu.core_type = #tpu.core_type<tc>, window_params = [{transform_indices = @transform_0, window_bounds = array<i64: 1, 18, 18, 64>}, {transform_indices = @transform_1, window_bounds = array<i64: 3, 3, 64, 64>}, {transform_indices = @transform_2, window_bounds = array<i64: 1, 64>}, {transform_indices = @transform_3, window_bounds = array<i64: 1, 16, 16, 64>}, {transform_indices = @transform_4, window_bounds = array<i64: 2, 64>}]} {
    %c0 = arith.constant 0 : index
    %c0_0 = arith.constant 0 : index
    %c0_1 = arith.constant 0 : index
    %c0_2 = arith.constant 0 : index
    %0 = vector.load %arg2[%c0, %c0_0, %c0_1, %c0_2] : memref<1x18x18x64xbf16, #tpu.memory_space<vmem>>, vector<1x18x18x64xbf16>
    %1 = vector.shape_cast %0 : vector<1x18x18x64xbf16> to vector<18x18x64xbf16>
    %cst = arith.constant 0.000000e+00 : f32
    %2 = vector.broadcast %cst : f32 to vector<256x64xf32>
    %3 = vector.extract_strided_slice %1 {offsets = [0, 0, 0], sizes = [16, 16, 64], strides = [1, 1, 1]} : vector<18x18x64xbf16> to vector<16x16x64xbf16>
    %4 = vector.shape_cast %3 : vector<16x16x64xbf16> to vector<256x64xbf16>
    %c0_3 = arith.constant 0 : index
    %c0_4 = arith.constant 0 : index
    %c0_5 = arith.constant 0 : index
    %c0_6 = arith.constant 0 : index
    %5 = vector.load %arg3[%c0_3, %c0_4, %c0_5, %c0_6] : memref<3x3x64x64xbf16, #tpu.memory_space<vmem>>, vector<1x1x64x64xbf16>
    %6 = vector.shape_cast %5 : vector<1x1x64x64xbf16> to vector<64x64xbf16>
    %cst_7 = arith.constant dense<0.000000e+00> : vector<256x64xf32>
    %7 = tpu.matmul %4, %6, %cst_7 {dimension_numbers = #tpu.dot_dimension_numbers<[1], [0], [0], [1], [0, 0, 1, 1], [], []>} : vector<256x64xbf16>, vector<64x64xbf16>, vector<256x64xf32> -> vector<256x64xf32>
    %8 = arith.addf %2, %7 : vector<256x64xf32>
    %9 = vector.extract_strided_slice %1 {offsets = [0, 1, 0], sizes = [16, 16, 64], strides = [1, 1, 1]} : vector<18x18x64xbf16> to vector<16x16x64xbf16>
    %10 = vector.shape_cast %9 : vector<16x16x64xbf16> to vector<256x64xbf16>
    %c0_8 = arith.constant 0 : index
    %c1 = arith.constant 1 : index
    %c0_9 = arith.constant 0 : index
    %c0_10 = arith.constant 0 : index
    %11 = vector.load %arg3[%c0_8, %c1, %c0_9, %c0_10] : memref<3x3x64x64xbf16, #tpu.memory_space<vmem>>, vector<1x1x64x64xbf16>
    %12 = vector.shape_cast %11 : vector<1x1x64x64xbf16> to vector<64x64xbf16>
    %cst_11 = arith.constant dense<0.000000e+00> : vector<256x64xf32>
    %13 = tpu.matmul %10, %12, %cst_11 {dimension_numbers = #tpu.dot_dimension_numbers<[1], [0], [0], [1], [0, 0, 1, 1], [], []>} : vector<256x64xbf16>, vector<64x64xbf16>, vector<256x64xf32> -> vector<256x64xf32>
    %14 = arith.addf %8, %13 : vector<256x64xf32>
    %15 = vector.extract_strided_slice %1 {offsets = [0, 2, 0], sizes = [16, 16, 64], strides = [1, 1, 1]} : vector<18x18x64xbf16> to vector<16x16x64xbf16>
    %16 = vector.shape_cast %15 : vector<16x16x64xbf16> to vector<256x64xbf16>
    %c0_12 = arith.constant 0 : index
    %c2 = arith.constant 2 : index
    %c0_13 = arith.constant 0 : index
    %c0_14 = arith.constant 0 : index
    %17 = vector.load %arg3[%c0_12, %c2, %c0_13, %c0_14] : memref<3x3x64x64xbf16, #tpu.memory_space<vmem>>, vector<1x1x64x64xbf16>
    %18 = vector.shape_cast %17 : vector<1x1x64x64xbf16> to vector<64x64xbf16>
    %cst_15 = arith.constant dense<0.000000e+00> : vector<256x64xf32>
    %19 = tpu.matmul %16, %18, %cst_15 {dimension_numbers = #tpu.dot_dimension_numbers<[1], [0], [0], [1], [0, 0, 1, 1], [], []>} : vector<256x64xbf16>, vector<64x64xbf16>, vector<256x64xf32> -> vector<256x64xf32>
    %20 = arith.addf %14, %19 : vector<256x64xf32>
    %21 = vector.extract_strided_slice %1 {offsets = [1, 0, 0], sizes = [16, 16, 64], strides = [1, 1, 1]} : vector<18x18x64xbf16> to vector<16x16x64xbf16>
    %22 = vector.shape_cast %21 : vector<16x16x64xbf16> to vector<256x64xbf16>
    %c1_16 = arith.constant 1 : index
    %c0_17 = arith.constant 0 : index
    %c0_18 = arith.constant 0 : index
    %c0_19 = arith.constant 0 : index
    %23 = vector.load %arg3[%c1_16, %c0_17, %c0_18, %c0_19] : memref<3x3x64x64xbf16, #tpu.memory_space<vmem>>, vector<1x1x64x64xbf16>
    %24 = vector.shape_cast %23 : vector<1x1x64x64xbf16> to vector<64x64xbf16>
    %cst_20 = arith.constant dense<0.000000e+00> : vector<256x64xf32>
    %25 = tpu.matmul %22, %24, %cst_20 {dimension_numbers = #tpu.dot_dimension_numbers<[1], [0], [0], [1], [0, 0, 1, 1], [], []>} : vector<256x64xbf16>, vector<64x64xbf16>, vector<256x64xf32> -> vector<256x64xf32>
    %26 = arith.addf %20, %25 : vector<256x64xf32>
    %27 = vector.extract_strided_slice %1 {offsets = [1, 1, 0], sizes = [16, 16, 64], strides = [1, 1, 1]} : vector<18x18x64xbf16> to vector<16x16x64xbf16>
    %28 = vector.shape_cast %27 : vector<16x16x64xbf16> to vector<256x64xbf16>
    %c1_21 = arith.constant 1 : index
    %c1_22 = arith.constant 1 : index
    %c0_23 = arith.constant 0 : index
    %c0_24 = arith.constant 0 : index
    %29 = vector.load %arg3[%c1_21, %c1_22, %c0_23, %c0_24] : memref<3x3x64x64xbf16, #tpu.memory_space<vmem>>, vector<1x1x64x64xbf16>
    %30 = vector.shape_cast %29 : vector<1x1x64x64xbf16> to vector<64x64xbf16>
    %cst_25 = arith.constant dense<0.000000e+00> : vector<256x64xf32>
    %31 = tpu.matmul %28, %30, %cst_25 {dimension_numbers = #tpu.dot_dimension_numbers<[1], [0], [0], [1], [0, 0, 1, 1], [], []>} : vector<256x64xbf16>, vector<64x64xbf16>, vector<256x64xf32> -> vector<256x64xf32>
    %32 = arith.addf %26, %31 : vector<256x64xf32>
    %33 = vector.extract_strided_slice %1 {offsets = [1, 2, 0], sizes = [16, 16, 64], strides = [1, 1, 1]} : vector<18x18x64xbf16> to vector<16x16x64xbf16>
    %34 = vector.shape_cast %33 : vector<16x16x64xbf16> to vector<256x64xbf16>
    %c1_26 = arith.constant 1 : index
    %c2_27 = arith.constant 2 : index
    %c0_28 = arith.constant 0 : index
    %c0_29 = arith.constant 0 : index
    %35 = vector.load %arg3[%c1_26, %c2_27, %c0_28, %c0_29] : memref<3x3x64x64xbf16, #tpu.memory_space<vmem>>, vector<1x1x64x64xbf16>
    %36 = vector.shape_cast %35 : vector<1x1x64x64xbf16> to vector<64x64xbf16>
    %cst_30 = arith.constant dense<0.000000e+00> : vector<256x64xf32>
    %37 = tpu.matmul %34, %36, %cst_30 {dimension_numbers = #tpu.dot_dimension_numbers<[1], [0], [0], [1], [0, 0, 1, 1], [], []>} : vector<256x64xbf16>, vector<64x64xbf16>, vector<256x64xf32> -> vector<256x64xf32>
    %38 = arith.addf %32, %37 : vector<256x64xf32>
    %39 = vector.extract_strided_slice %1 {offsets = [2, 0, 0], sizes = [16, 16, 64], strides = [1, 1, 1]} : vector<18x18x64xbf16> to vector<16x16x64xbf16>
    %40 = vector.shape_cast %39 : vector<16x16x64xbf16> to vector<256x64xbf16>
    %c2_31 = arith.constant 2 : index
    %c0_32 = arith.constant 0 : index
    %c0_33 = arith.constant 0 : index
    %c0_34 = arith.constant 0 : index
    %41 = vector.load %arg3[%c2_31, %c0_32, %c0_33, %c0_34] : memref<3x3x64x64xbf16, #tpu.memory_space<vmem>>, vector<1x1x64x64xbf16>
    %42 = vector.shape_cast %41 : vector<1x1x64x64xbf16> to vector<64x64xbf16>
    %cst_35 = arith.constant dense<0.000000e+00> : vector<256x64xf32>
    %43 = tpu.matmul %40, %42, %cst_35 {dimension_numbers = #tpu.dot_dimension_numbers<[1], [0], [0], [1], [0, 0, 1, 1], [], []>} : vector<256x64xbf16>, vector<64x64xbf16>, vector<256x64xf32> -> vector<256x64xf32>
    %44 = arith.addf %38, %43 : vector<256x64xf32>
    %45 = vector.extract_strided_slice %1 {offsets = [2, 1, 0], sizes = [16, 16, 64], strides = [1, 1, 1]} : vector<18x18x64xbf16> to vector<16x16x64xbf16>
    %46 = vector.shape_cast %45 : vector<16x16x64xbf16> to vector<256x64xbf16>
    %c2_36 = arith.constant 2 : index
    %c1_37 = arith.constant 1 : index
    %c0_38 = arith.constant 0 : index
    %c0_39 = arith.constant 0 : index
    %47 = vector.load %arg3[%c2_36, %c1_37, %c0_38, %c0_39] : memref<3x3x64x64xbf16, #tpu.memory_space<vmem>>, vector<1x1x64x64xbf16>
    %48 = vector.shape_cast %47 : vector<1x1x64x64xbf16> to vector<64x64xbf16>
    %cst_40 = arith.constant dense<0.000000e+00> : vector<256x64xf32>
    %49 = tpu.matmul %46, %48, %cst_40 {dimension_numbers = #tpu.dot_dimension_numbers<[1], [0], [0], [1], [0, 0, 1, 1], [], []>} : vector<256x64xbf16>, vector<64x64xbf16>, vector<256x64xf32> -> vector<256x64xf32>
    %50 = arith.addf %44, %49 : vector<256x64xf32>
    %51 = vector.extract_strided_slice %1 {offsets = [2, 2, 0], sizes = [16, 16, 64], strides = [1, 1, 1]} : vector<18x18x64xbf16> to vector<16x16x64xbf16>
    %52 = vector.shape_cast %51 : vector<16x16x64xbf16> to vector<256x64xbf16>
    %c2_41 = arith.constant 2 : index
    %c2_42 = arith.constant 2 : index
    %c0_43 = arith.constant 0 : index
    %c0_44 = arith.constant 0 : index
    %53 = vector.load %arg3[%c2_41, %c2_42, %c0_43, %c0_44] : memref<3x3x64x64xbf16, #tpu.memory_space<vmem>>, vector<1x1x64x64xbf16>
    %54 = vector.shape_cast %53 : vector<1x1x64x64xbf16> to vector<64x64xbf16>
    %cst_45 = arith.constant dense<0.000000e+00> : vector<256x64xf32>
    %55 = tpu.matmul %52, %54, %cst_45 {dimension_numbers = #tpu.dot_dimension_numbers<[1], [0], [0], [1], [0, 0, 1, 1], [], []>} : vector<256x64xbf16>, vector<64x64xbf16>, vector<256x64xf32> -> vector<256x64xf32>
    %56 = arith.addf %50, %55 : vector<256x64xf32>
    %c0_46 = arith.constant 0 : index
    %c0_47 = arith.constant 0 : index
    %57 = vector.load %arg4[%c0_46, %c0_47] : memref<1x64xf32, #tpu.memory_space<vmem>>, vector<1x64xf32>
    %58 = vector.broadcast %57 : vector<1x64xf32> to vector<256x64xf32>
    %59 = arith.addf %56, %58 : vector<256x64xf32>
    %60 = vector.shape_cast %59 : vector<256x64xf32> to vector<16x16x64xf32>
    %61 = arith.truncf %60 : vector<16x16x64xf32> to vector<16x16x64xbf16>
    %c0_48 = arith.constant 0 : index
    %c0_49 = arith.constant 0 : index
    %c0_50 = arith.constant 0 : index
    %c0_51 = arith.constant 0 : index
    %62 = vector.load %arg5[%c0_48, %c0_49, %c0_50, %c0_51] : memref<1x16x16x64xbf16, #tpu.memory_space<vmem>>, vector<1x16x16x64xbf16>
    %63 = vector.shape_cast %62 : vector<1x16x16x64xbf16> to vector<16x16x64xbf16>
    %64 = vector.shape_cast %61 : vector<16x16x64xbf16> to vector<1x16x16x64xbf16>
    tpu.vector_store %arg5[%c0_48, %c0_49, %c0_50, %c0_51], %64 {strides = array<i32>} : memref<1x16x16x64xbf16, #tpu.memory_space<vmem>>, vector<1x16x16x64xbf16>,
    %c0_i32 = arith.constant 0 : i32
    %65 = arith.cmpi eq, %arg1, %c0_i32 : i32
    %66 = arith.extui %65 : i1 to i32
    %c0_i32_52 = arith.constant 0 : i32
    %67 = arith.cmpi ne, %66, %c0_i32_52 : i32
    scf.if %67 {
      %cst_59 = arith.constant 0.000000e+00 : f32
      %77 = vector.broadcast %cst_59 : f32 to vector<2x64xf32>
      %c0_60 = arith.constant 0 : index
      %c0_61 = arith.constant 0 : index
      %78 = vector.load %arg6[%c0_60, %c0_61] : memref<2x64xf32, #tpu.memory_space<vmem>>, vector<2x64xf32>
      tpu.vector_store %arg6[%c0_60, %c0_61], %77 {strides = array<i32>} : memref<2x64xf32, #tpu.memory_space<vmem>>, vector<2x64xf32>,
    } else {
    }
    %cst_53 = arith.constant dense<0.000000e+00> : vector<64xf32>
    %68 = vector.multi_reduction <add>, %59, %cst_53 [0] : vector<256x64xf32> to vector<64xf32>
    %69 = vector.shape_cast %68 : vector<64xf32> to vector<1x64xf32>
    %70 = arith.mulf %59, %59 : vector<256x64xf32>
    %cst_54 = arith.constant dense<0.000000e+00> : vector<64xf32>
    %71 = vector.multi_reduction <add>, %70, %cst_54 [0] : vector<256x64xf32> to vector<64xf32>
    %72 = vector.shape_cast %71 : vector<64xf32> to vector<1x64xf32>
    %c0_55 = arith.constant 0 : index
    %c0_56 = arith.constant 0 : index
    %73 = vector.load %arg6[%c0_55, %c0_56] : memref<2x64xf32, #tpu.memory_space<vmem>>, vector<2x64xf32>
    %74 = tpu.concatenate %69, %72 in 0 : vector<1x64xf32>, vector<1x64xf32> -> vector<2x64xf32>
    %75 = arith.addf %73, %74 : vector<2x64xf32>
    %c0_57 = arith.constant 0 : index
    %c0_58 = arith.constant 0 : index
    %76 = vector.load %arg6[%c0_57, %c0_58] : memref<2x64xf32, #tpu.memory_space<vmem>>, vector<2x64xf32>
    tpu.vector_store %arg6[%c0_57, %c0_58], %75 {strides = array<i32>} : memref<2x64xf32, #tpu.memory_space<vmem>>, vector<2x64xf32>,
    return
  }
  func.func @transform_0(%arg0: i32, %arg1: i32) -> (i32, i32, i32, i32) {
    %c0_i32 = arith.constant 0 : i32
    %c0_i32_0 = arith.constant 0 : i32
    %c0_i32_1 = arith.constant 0 : i32
    %c0_i32_2 = arith.constant 0 : i32
    return %arg1, %c0_i32, %c0_i32_0, %c0_i32_1 : i32, i32, i32, i32
  }
  func.func @transform_1(%arg0: i32, %arg1: i32) -> (i32, i32, i32, i32) {
    %c0_i32 = arith.constant 0 : i32
    %c0_i32_0 = arith.constant 0 : i32
    %c0_i32_1 = arith.constant 0 : i32
    %c0_i32_2 = arith.constant 0 : i32
    return %c0_i32, %c0_i32_0, %c0_i32_1, %arg0 : i32, i32, i32, i32
  }
  func.func @transform_2(%arg0: i32, %arg1: i32) -> (i32, i32) {
    %c0_i32 = arith.constant 0 : i32
    %c0_i32_0 = arith.constant 0 : i32
    return %c0_i32, %arg0 : i32, i32
  }
  func.func @transform_3(%arg0: i32, %arg1: i32) -> (i32, i32, i32, i32) {
    %c0_i32 = arith.constant 0 : i32
    %c0_i32_0 = arith.constant 0 : i32
    %c0_i32_1 = arith.constant 0 : i32
    return %arg1, %c0_i32, %c0_i32_0, %arg0 : i32, i32, i32, i32
  }
  func.func @transform_4(%arg0: i32, %arg1: i32) -> (i32, i32) {
    %c0_i32 = arith.constant 0 : i32
    %c0_i32_0 = arith.constant 0 : i32
    return %c0_i32, %arg0 : i32, i32
  }
}

module attributes {stable_mosaic.version = 11 : i64} {
  func.func @_bn_relu_kernel(%arg0: i32, %arg1: memref<512x64xbf16, #tpu.memory_space<vmem>>, %arg2: memref<2x64xf32, #tpu.memory_space<vmem>>, %arg3: memref<1x64xf32, #tpu.memory_space<vmem>>, %arg4: memref<1x64xf32, #tpu.memory_space<vmem>>, %arg5: memref<512x64xf32, #tpu.memory_space<vmem>>) attributes {dimension_semantics = [#tpu.dimension_semantics<parallel>], iteration_bounds = array<i64: 1>, scalar_prefetch = 0 : i64, scratch_operands = 0 : i64, tpu.core_type = #tpu.core_type<tc>, window_params = [{transform_indices = @transform_0, window_bounds = array<i64: 512, 64>}, {pipeline_mode = #tpu.pipeline_mode<synchronous>, transform_indices = @transform_1, window_bounds = array<i64: 2, 64>}, {pipeline_mode = #tpu.pipeline_mode<synchronous>, transform_indices = @transform_2, window_bounds = array<i64: 1, 64>}, {pipeline_mode = #tpu.pipeline_mode<synchronous>, transform_indices = @transform_3, window_bounds = array<i64: 1, 64>}, {transform_indices = @transform_4, window_bounds = array<i64: 512, 64>}]} {
    %c0 = arith.constant 0 : index
    %c0_0 = arith.constant 0 : index
    %0 = vector.load %arg2[%c0, %c0_0] : memref<2x64xf32, #tpu.memory_space<vmem>>, vector<1x64xf32>
    %cst = arith.constant 0.001953125 : f32
    %1 = vector.broadcast %cst : f32 to vector<1x64xf32>
    %2 = arith.mulf %0, %1 : vector<1x64xf32>
    %c1 = arith.constant 1 : index
    %c0_1 = arith.constant 0 : index
    %3 = vector.load %arg2[%c1, %c0_1] : memref<2x64xf32, #tpu.memory_space<vmem>>, vector<1x64xf32>
    %cst_2 = arith.constant 0.001953125 : f32
    %4 = vector.broadcast %cst_2 : f32 to vector<1x64xf32>
    %5 = arith.mulf %3, %4 : vector<1x64xf32>
    %6 = arith.mulf %2, %2 : vector<1x64xf32>
    %7 = arith.subf %5, %6 : vector<1x64xf32>
    %c0_3 = arith.constant 0 : index
    %c0_4 = arith.constant 0 : index
    %8 = vector.load %arg3[%c0_3, %c0_4] : memref<1x64xf32, #tpu.memory_space<vmem>>, vector<1x64xf32>
    %cst_5 = arith.constant 9.99999974E-6 : f32
    %9 = vector.broadcast %cst_5 : f32 to vector<1x64xf32>
    %10 = arith.addf %7, %9 : vector<1x64xf32>
    %11 = math.rsqrt %10 : vector<1x64xf32>
    %12 = arith.mulf %8, %11 : vector<1x64xf32>
    %c0_6 = arith.constant 0 : index
    %c0_7 = arith.constant 0 : index
    %13 = vector.load %arg4[%c0_6, %c0_7] : memref<1x64xf32, #tpu.memory_space<vmem>>, vector<1x64xf32>
    %14 = arith.mulf %2, %12 : vector<1x64xf32>
    %15 = arith.subf %13, %14 : vector<1x64xf32>
    %c0_8 = arith.constant 0 : index
    %c0_9 = arith.constant 0 : index
    %16 = vector.load %arg1[%c0_8, %c0_9] : memref<512x64xbf16, #tpu.memory_space<vmem>>, vector<512x64xbf16>
    %17 = arith.extf %16 : vector<512x64xbf16> to vector<512x64xf32>
    %18 = vector.broadcast %12 : vector<1x64xf32> to vector<512x64xf32>
    %19 = arith.mulf %17, %18 : vector<512x64xf32>
    %20 = vector.broadcast %15 : vector<1x64xf32> to vector<512x64xf32>
    %21 = arith.addf %19, %20 : vector<512x64xf32>
    %cst_10 = arith.constant 0.000000e+00 : f32
    %22 = vector.broadcast %cst_10 : f32 to vector<512x64xf32>
    %23 = arith.maximumf %21, %22 : vector<512x64xf32>
    %c0_11 = arith.constant 0 : index
    %c0_12 = arith.constant 0 : index
    %24 = vector.load %arg5[%c0_11, %c0_12] : memref<512x64xf32, #tpu.memory_space<vmem>>, vector<512x64xf32>
    tpu.vector_store %arg5[%c0_11, %c0_12], %23 {strides = array<i32>} : memref<512x64xf32, #tpu.memory_space<vmem>>, vector<512x64xf32>,
    return
  }
  func.func @transform_0(%arg0: i32) -> (i32, i32) {
    %c0_i32 = arith.constant 0 : i32
    %c0_i32_0 = arith.constant 0 : i32
    return %arg0, %c0_i32 : i32, i32
  }
  func.func @transform_1(%arg0: i32) -> (i32, i32) {
    %c0_i32 = arith.constant 0 : i32
    %c0_i32_0 = arith.constant 0 : i32
    %c0_i32_1 = arith.constant 0 : i32
    return %c0_i32, %c0_i32_0 : i32, i32
  }
  func.func @transform_2(%arg0: i32) -> (i32, i32) {
    %c0_i32 = arith.constant 0 : i32
    %c0_i32_0 = arith.constant 0 : i32
    %c0_i32_1 = arith.constant 0 : i32
    return %c0_i32, %c0_i32_0 : i32, i32
  }
  func.func @transform_3(%arg0: i32) -> (i32, i32) {
    %c0_i32 = arith.constant 0 : i32
    %c0_i32_0 = arith.constant 0 : i32
    %c0_i32_1 = arith.constant 0 : i32
    return %c0_i32, %c0_i32_0 : i32, i32
  }
  func.func @transform_4(%arg0: i32) -> (i32, i32) {
    %c0_i32 = arith.constant 0 : i32
    %c0_i32_0 = arith.constant 0 : i32
    return %arg0, %c0_i32 : i32, i32
  }
}

</mosaic_0001>

<llo_original>
// kernel: decoder_block_forward.3
$region0: #{decoder_block_forward.3}
  #allocation0 [shape = 'u32[]', space=smem, size = 0x4, offset = 0x4, fixed_abs, tag = 'smem constant byte address 0x4 - core index']
  #allocation1 [shape = 'u32[144,128]{1,0:T(1,128)}', space=vmem, size = 0x12000, scoped, tag = 'internal scratch']
  %s0 = inlined_call_operand.vmem [shape: f32[16,8,128], index: 0, kind: input, shape index: {}]
  %s1 = inlined_call_operand.vmem [shape: bf16[4,128,64], index: 1, kind: input, shape index: {}]
  %s2 = inlined_call_operand.vmem [shape: f32[1,64], index: 2, kind: input, shape index: {}]
  %s3 = inlined_call_operand.vmem [shape: f32[16,2,8,128], index: 3, kind: input, shape index: {}]
  %s4 = inlined_call_operand.vmem [shape: bf16[16,2,8,128], index: 4, kind: output, shape index: {}]
  %s5 = sld [smem:[#allocation0]]
  $region26: #{decoder_block_forward.3} parent=0
    _
  %s7 = ssub.s32 1, %s5
  %s8 = scalar_select 0, %s7, %s5
  // Predicated region
  $region2: #{decoder_block_forward.3} parent=0 // pred_check
    _
  $region3: #{decoder_block_forward.3} parent=0 // pred_check_branch
    %10 = sbr.rel (0) target = $region5
  $region4: #{decoder_block_forward.3} parent=0 // pred_region
    _
  $region5: #{decoder_block_forward.3} parent=0 // pred_fallthru
    _
  // Predicated region
  $region6: #{decoder_block_forward.3} parent=0 // pred_check
    _
  $region7: #{decoder_block_forward.3} parent=0 // pred_check_branch
    %12 = sbr.rel (0) target = $region9
  $region8: #{decoder_block_forward.3} parent=0 // pred_region
    _
  $region9: #{decoder_block_forward.3} parent=0 // pred_fallthru
    _
  // Predicated region
  $region10: #{decoder_block_forward.3} parent=0 // pred_check
    _
  $region11: #{decoder_block_forward.3} parent=0 // pred_check_branch
    %14 = sbr.rel (0) target = $region13
  $region12: #{decoder_block_forward.3} parent=0 // pred_region
    _
  $region13: #{decoder_block_forward.3} parent=0 // pred_fallthru
    _
  // Predicated region
  $region14: #{decoder_block_forward.3} parent=0 // pred_check
    _
  $region15: #{decoder_block_forward.3} parent=0 // pred_check_branch
    %16 = sbr.rel (0) target = $region17
  $region16: #{decoder_block_forward.3} parent=0 // pred_region
    _
  $region17: #{decoder_block_forward.3} parent=0 // pred_fallthru
    _
  %v18 = vld [vmem:[%s0] sm:$0xff]
  %v19 = vld [vmem:[%s0 + $0x8] sm:$0xff]
  %v20 = vld [vmem:[%s0 + $0x10] sm:$0xff]
  %v21 = vld [vmem:[%s0 + $0x18] sm:$0xff]
  %v22 = vld [vmem:[%s0 + $0x20] sm:$0xff]
  %v23 = vld [vmem:[%s0 + $0x28] sm:$0xff]
  %v24 = vld [vmem:[%s0 + $0x30] sm:$0xff]
  %v25 = vld [vmem:[%s0 + $0x38] sm:$0xff]
  %v26 = vld [vmem:[%s0 + $0x40] sm:$0xff]
  %v27 = vld [vmem:[%s0 + $0x48] sm:$0xff]
  %v28 = vld [vmem:[%s0 + $0x50] sm:$0xff]
  %v29 = vld [vmem:[%s0 + $0x58] sm:$0xff]
  %v30 = vld [vmem:[%s0 + $0x60] sm:$0xff]
  %v31 = vld [vmem:[%s0 + $0x68] sm:$0xff]
  %v32 = vld [vmem:[%s0 + $0x70] sm:$0xff]
  %v33 = vld [vmem:[%s0 + $0x78] sm:$0xff]
  %v34 = vpack.c.bf16 %v18, %v18
  %v35 = vpack.c.bf16 %v19, %v19
  %v36 = vpack.c.bf16 %v20, %v20
  %v37 = vpack.c.bf16 %v21, %v21
  %v38 = vpack.c.bf16 %v22, %v22
  %v39 = vpack.c.bf16 %v23, %v23
  %v40 = vpack.c.bf16 %v24, %v24
  %v41 = vpack.c.bf16 %v25, %v25
  %v42 = vpack.c.bf16 %v26, %v26
  %v43 = vpack.c.bf16 %v27, %v27
  %v44 = vpack.c.bf16 %v28, %v28
  %v45 = vpack.c.bf16 %v29, %v29
  %v46 = vpack.c.bf16 %v30, %v30
  %v47 = vpack.c.bf16 %v31, %v31
  %v48 = vpack.c.bf16 %v32, %v32
  %v49 = vpack.c.bf16 %v33, %v33
  %v50 = vld [vmem:[%s2] sm:$0x1]
  %v51 = vld [vmem:[%s1] sm:$0xf]
  %v52 = vld [vmem:[%s1 + $0x4] sm:$0xf]
  %v53 = vld [vmem:[%s1 + $0x8] sm:$0xf]
  %v54 = vld [vmem:[%s1 + $0xc] sm:$0xf]
  %v55 = vld [vmem:[%s1 + $0x10] sm:$0xf]
  %v56 = vld [vmem:[%s1 + $0x14] sm:$0xf]
  %v57 = vld [vmem:[%s1 + $0x18] sm:$0xf]
  %v58 = vld [vmem:[%s1 + $0x1c] sm:$0xf]
  %v59 = vld [vmem:[%s1 + $0x20] sm:$0xf]
  %v60 = vld [vmem:[%s1 + $0x24] sm:$0xf]
  %v61 = vld [vmem:[%s1 + $0x28] sm:$0xf]
  %v62 = vld [vmem:[%s1 + $0x2c] sm:$0xf]
  %v63 = vld [vmem:[%s1 + $0x30] sm:$0xf]
  %v64 = vld [vmem:[%s1 + $0x34] sm:$0xf]
  %v65 = vld [vmem:[%s1 + $0x38] sm:$0xf]
  %v66 = vld [vmem:[%s1 + $0x3c] sm:$0xf]
  %v68 = vlaneseq
  %v69 = vshrl.u32 %v68, 7
  %v70 = vsub.s32 0, %v69
  %v71 = vrot.slane %v50, %v70
  %v89 = vunpack.c.l.b16 %v34
  %v90 = vunpack.c.l.b16 %v35
  %v91 = vunpack.c.l.b16 %v36
  %v92 = vunpack.c.l.b16 %v37
  %v93 = vunpack.c.l.b16 %v38
  %v94 = vunpack.c.l.b16 %v39
  %v95 = vunpack.c.l.b16 %v40
  %v96 = vunpack.c.l.b16 %v41
  %v97 = vunpack.c.l.b16 %v42
  %v98 = vunpack.c.l.b16 %v43
  %v99 = vunpack.c.l.b16 %v44
  %v100 = vunpack.c.l.b16 %v45
  %v101 = vunpack.c.l.b16 %v46
  %v102 = vunpack.c.l.b16 %v47
  %v103 = vunpack.c.l.b16 %v48
  %v104 = vunpack.c.l.b16 %v49
  %v105 = vpack.c.b16 %v90, %v89
  %v106 = vpack.c.b16 %v92, %v91
  %v107 = vpack.c.b16 %v94, %v93
  %v108 = vpack.c.b16 %v96, %v95
  %v109 = vpack.c.b16 %v98, %v97
  %v110 = vpack.c.b16 %v100, %v99
  %v111 = vpack.c.b16 %v102, %v101
  %v112 = vpack.c.b16 %v104, %v103
  %v137 = vunpack.c.l.b16 %v51
  %v138 = vunpack.c.l.b16 %v52
  %v139 = vunpack.c.l.b16 %v53
  %v140 = vunpack.c.l.b16 %v54
  %v141 = vunpack.c.l.b16 %v55
  %v142 = vunpack.c.l.b16 %v56
  %v143 = vunpack.c.l.b16 %v57
  %v144 = vunpack.c.l.b16 %v58
  %v145 = vunpack.c.l.b16 %v59
  %v146 = vunpack.c.l.b16 %v60
  %v147 = vunpack.c.l.b16 %v61
  %v148 = vunpack.c.l.b16 %v62
  %v149 = vunpack.c.l.b16 %v63
  %v150 = vunpack.c.l.b16 %v64
  %v151 = vunpack.c.l.b16 %v65
  %v152 = vunpack.c.l.b16 %v66
  %v153 = vpack.c.b16 %v138, %v137
  %v154 = vpack.c.b16 %v140, %v139
  %v155 = vpack.c.b16 %v142, %v141
  %v156 = vpack.c.b16 %v144, %v143
  %v157 = vpack.c.b16 %v146, %v145
  %v158 = vpack.c.b16 %v148, %v147
  %v159 = vpack.c.b16 %v150, %v149
  %v160 = vpack.c.b16 %v152, %v151
  %169 = vmatprep.subr.bf16.mxu0 0
  %170 = vmatpush1.bf16.msra.mxu0 %v153
  %171 = vmatprep.subr.bf16.mxu0 0
  %172 = vmatpush1.bf16.msra.mxu0 %v154
  %173 = vmatprep.subr.bf16.mxu0 0
  %174 = vmatpush1.bf16.msra.mxu0 %v155
  %175 = vmatprep.subr.bf16.mxu0 0
  %176 = vmatpush1.bf16.msra.mxu0 %v156
  %177 = vmatprep.subr.bf16.mxu0 0
  %178 = vmatpush1.bf16.msra.mxu0 %v157
  %179 = vmatprep.subr.bf16.mxu0 0
  %180 = vmatpush1.bf16.msra.mxu0 %v158
  %181 = vmatprep.subr.bf16.mxu0 0
  %182 = vmatpush1.bf16.msra.mxu0 %v159
  %183 = vmatprep.subr.bf16.mxu0 0
  %184 = vmatpush1.bf16.msra.mxu0 %v160
  %185 = vmatprep.subr.bf16.mxu0 0
  %186 = vmatpush1.bf16.msra.mxu0 0
  %187 = vmatprep.subr.bf16.mxu0 0
  %188 = vmatpush1.bf16.msra.mxu0 0
  %189 = vmatprep.subr.bf16.mxu0 0
  %190 = vmatpush1.bf16.msra.mxu0 0
  %191 = vmatprep.subr.bf16.mxu0 0
  %192 = vmatpush1.bf16.msra.mxu0 0
  %193 = vmatprep.subr.bf16.mxu0 0
  %194 = vmatpush1.bf16.msra.mxu0 0
  %195 = vmatprep.subr.bf16.mxu0 0
  %196 = vmatpush1.bf16.msra.mxu0 0
  %197 = vmatprep.subr.bf16.mxu0 0
  %198 = vmatpush1.bf16.msra.mxu0 0
  %199 = vmatprep.subr.bf16.mxu0 0
  %200 = vmatpush1.bf16.msra.mxu0 0
  %201 = vmatprep.mubr.bf16.mxu0 0
  %202 = vmatmul.mubr.bf16.gmra.mrb[0].mxu0 %v105
  %v203 = vpop.f32.mrb[0].mxu0
  %v204 = vadd.f32 %v71, %v203
  %v205 = vpop.f32.mrb[0].mxu0
  %v206 = vpop.f32.mrb[0].mxu0
  %v207 = vadd.f32 %v71, %v206
  %v208 = vpop.f32.mrb[0].mxu0
  %209 = vmatprep.mubr.bf16.mxu0 0
  %210 = vmatmul.mubr.bf16.gmra.mrb[0].mxu0 %v106
  %v211 = vpop.f32.mrb[0].mxu0
  %v212 = vadd.f32 %v71, %v211
  %v213 = vpop.f32.mrb[0].mxu0
  %v214 = vpop.f32.mrb[0].mxu0
  %v215 = vadd.f32 %v71, %v214
  %v216 = vpop.f32.mrb[0].mxu0
  %217 = vmatprep.mubr.bf16.mxu0 0
  %218 = vmatmul.mubr.bf16.gmra.mrb[0].mxu0 %v107
  %v219 = vpop.f32.mrb[0].mxu0
  %v220 = vadd.f32 %v71, %v219
  %v221 = vpop.f32.mrb[0].mxu0
  %v222 = vpop.f32.mrb[0].mxu0
  %v223 = vadd.f32 %v71, %v222
  %v224 = vpop.f32.mrb[0].mxu0
  %225 = vmatprep.mubr.bf16.mxu0 0
  %226 = vmatmul.mubr.bf16.gmra.mrb[0].mxu0 %v108
  %v227 = vpop.f32.mrb[0].mxu0
  %v228 = vadd.f32 %v71, %v227
  %v229 = vpop.f32.mrb[0].mxu0
  %v230 = vpop.f32.mrb[0].mxu0
  %v231 = vadd.f32 %v71, %v230
  %v232 = vpop.f32.mrb[0].mxu0
  %233 = vmatprep.mubr.bf16.mxu0 0
  %234 = vmatmul.mubr.bf16.gmra.mrb[0].mxu0 %v109
  %v235 = vpop.f32.mrb[0].mxu0
  %v236 = vadd.f32 %v71, %v235
  %v237 = vpop.f32.mrb[0].mxu0
  %v238 = vpop.f32.mrb[0].mxu0
  %v239 = vadd.f32 %v71, %v238
  %v240 = vpop.f32.mrb[0].mxu0
  %241 = vmatprep.mubr.bf16.mxu0 0
  %242 = vmatmul.mubr.bf16.gmra.mrb[0].mxu0 %v110
  %v243 = vpop.f32.mrb[0].mxu0
  %v244 = vadd.f32 %v71, %v243
  %v245 = vpop.f32.mrb[0].mxu0
  %v246 = vpop.f32.mrb[0].mxu0
  %v247 = vadd.f32 %v71, %v246
  %v248 = vpop.f32.mrb[0].mxu0
  %249 = vmatprep.mubr.bf16.mxu0 0
  %250 = vmatmul.mubr.bf16.gmra.mrb[0].mxu0 %v111
  %v251 = vpop.f32.mrb[0].mxu0
  %v252 = vadd.f32 %v71, %v251
  %v253 = vpop.f32.mrb[0].mxu0
  %v254 = vpop.f32.mrb[0].mxu0
  %v255 = vadd.f32 %v71, %v254
  %v256 = vpop.f32.mrb[0].mxu0
  %257 = vmatprep.mubr.bf16.mxu0 0
  %258 = vmatmul.mubr.bf16.gmra.mrb[0].mxu0 %v112
  %v259 = vpop.f32.mrb[0].mxu0
  %v260 = vadd.f32 %v71, %v259
  %v261 = vpop.f32.mrb[0].mxu0
  %v262 = vpop.f32.mrb[0].mxu0
  %v263 = vadd.f32 %v71, %v262
  %v264 = vpop.f32.mrb[0].mxu0
  %265 = vdwg.mxu0
  %s266 = scalar_lea.vmem %s1, 64
  %v267 = vld [vmem:[%s266] sm:$0xf]
  %v268 = vld [vmem:[%s266 + $0x4] sm:$0xf]
  %v269 = vld [vmem:[%s266 + $0x8] sm:$0xf]
  %v270 = vld [vmem:[%s266 + $0xc] sm:$0xf]
  %v271 = vld [vmem:[%s266 + $0x10] sm:$0xf]
  %v272 = vld [vmem:[%s266 + $0x14] sm:$0xf]
  %v273 = vld [vmem:[%s266 + $0x18] sm:$0xf]
  %v274 = vld [vmem:[%s266 + $0x1c] sm:$0xf]
  %v275 = vld [vmem:[%s266 + $0x20] sm:$0xf]
  %v276 = vld [vmem:[%s266 + $0x24] sm:$0xf]
  %v277 = vld [vmem:[%s266 + $0x28] sm:$0xf]
  %v278 = vld [vmem:[%s266 + $0x2c] sm:$0xf]
  %v279 = vld [vmem:[%s266 + $0x30] sm:$0xf]
  %v280 = vld [vmem:[%s266 + $0x34] sm:$0xf]
  %v281 = vld [vmem:[%s266 + $0x38] sm:$0xf]
  %v282 = vld [vmem:[%s266 + $0x3c] sm:$0xf]
  %v299 = vunpack.c.l.b16 %v267
  %v300 = vunpack.c.l.b16 %v268
  %v301 = vunpack.c.l.b16 %v269
  %v302 = vunpack.c.l.b16 %v270
  %v303 = vunpack.c.l.b16 %v271
  %v304 = vunpack.c.l.b16 %v272
  %v305 = vunpack.c.l.b16 %v273
  %v306 = vunpack.c.l.b16 %v274
  %v307 = vunpack.c.l.b16 %v275
  %v308 = vunpack.c.l.b16 %v276
  %v309 = vunpack.c.l.b16 %v277
  %v310 = vunpack.c.l.b16 %v278
  %v311 = vunpack.c.l.b16 %v279
  %v312 = vunpack.c.l.b16 %v280
  %v313 = vunpack.c.l.b16 %v281
  %v314 = vunpack.c.l.b16 %v282
  %v315 = vpack.c.b16 %v300, %v299
  %v316 = vpack.c.b16 %v302, %v301
  %v317 = vpack.c.b16 %v304, %v303
  %v318 = vpack.c.b16 %v306, %v305
  %v319 = vpack.c.b16 %v308, %v307
  %v320 = vpack.c.b16 %v310, %v309
  %v321 = vpack.c.b16 %v312, %v311
  %v322 = vpack.c.b16 %v314, %v313
  %331 = vmatprep.subr.bf16.mxu0 0
  %332 = vmatpush1.bf16.msra.mxu0 %v315
  %333 = vmatprep.subr.bf16.mxu0 0
  %334 = vmatpush1.bf16.msra.mxu0 %v316
  %335 = vmatprep.subr.bf16.mxu0 0
  %336 = vmatpush1.bf16.msra.mxu0 %v317
  %337 = vmatprep.subr.bf16.mxu0 0
  %338 = vmatpush1.bf16.msra.mxu0 %v318
  %339 = vmatprep.subr.bf16.mxu0 0
  %340 = vmatpush1.bf16.msra.mxu0 %v319
  %341 = vmatprep.subr.bf16.mxu0 0
  %342 = vmatpush1.bf16.msra.mxu0 %v320
  %343 = vmatprep.subr.bf16.mxu0 0
  %344 = vmatpush1.bf16.msra.mxu0 %v321
  %345 = vmatprep.subr.bf16.mxu0 0
  %346 = vmatpush1.bf16.msra.mxu0 %v322
  %347 = vmatprep.subr.bf16.mxu0 0
  %348 = vmatpush1.bf16.msra.mxu0 0
  %349 = vmatprep.subr.bf16.mxu0 0
  %350 = vmatpush1.bf16.msra.mxu0 0
  %351 = vmatprep.subr.bf16.mxu0 0
  %352 = vmatpush1.bf16.msra.mxu0 0
  %353 = vmatprep.subr.bf16.mxu0 0
  %354 = vmatpush1.bf16.msra.mxu0 0
  %355 = vmatprep.subr.bf16.mxu0 0
  %356 = vmatpush1.bf16.msra.mxu0 0
  %357 = vmatprep.subr.bf16.mxu0 0
  %358 = vmatpush1.bf16.msra.mxu0 0
  %359 = vmatprep.subr.bf16.mxu0 0
  %360 = vmatpush1.bf16.msra.mxu0 0
  %361 = vmatprep.subr.bf16.mxu0 0
  %362 = vmatpush1.bf16.msra.mxu0 0
  %363 = vmatprep.mubr.bf16.mxu0 0
  %364 = vmatmul.mubr.bf16.gmra.mrb[0].mxu0 %v105
  %v365 = vpop.f32.mrb[0].mxu0
  %v366 = vadd.f32 %v71, %v365
  %v367 = vpop.f32.mrb[0].mxu0
  %v368 = vpop.f32.mrb[0].mxu0
  %v369 = vadd.f32 %v71, %v368
  %v370 = vpop.f32.mrb[0].mxu0
  %371 = vmatprep.mubr.bf16.mxu0 0
  %372 = vmatmul.mubr.bf16.gmra.mrb[0].mxu0 %v106
  %v373 = vpop.f32.mrb[0].mxu0
  %v374 = vadd.f32 %v71, %v373
  %v375 = vpop.f32.mrb[0].mxu0
  %v376 = vpop.f32.mrb[0].mxu0
  %v377 = vadd.f32 %v71, %v376
  %v378 = vpop.f32.mrb[0].mxu0
  %379 = vmatprep.mubr.bf16.mxu0 0
  %380 = vmatmul.mubr.bf16.gmra.mrb[0].mxu0 %v107
  %v381 = vpop.f32.mrb[0].mxu0
  %v382 = vadd.f32 %v71, %v381
  %v383 = vpop.f32.mrb[0].mxu0
  %v384 = vpop.f32.mrb[0].mxu0
  %v385 = vadd.f32 %v71, %v384
  %v386 = vpop.f32.mrb[0].mxu0
  %387 = vmatprep.mubr.bf16.mxu0 0
  %388 = vmatmul.mubr.bf16.gmra.mrb[0].mxu0 %v108
  %v389 = vpop.f32.mrb[0].mxu0
  %v390 = vadd.f32 %v71, %v389
  %v391 = vpop.f32.mrb[0].mxu0
  %v392 = vpop.f32.mrb[0].mxu0
  %v393 = vadd.f32 %v71, %v392
  %v394 = vpop.f32.mrb[0].mxu0
  %395 = vmatprep.mubr.bf16.mxu0 0
  %396 = vmatmul.mubr.bf16.gmra.mrb[0].mxu0 %v109
  %v397 = vpop.f32.mrb[0].mxu0
  %v398 = vadd.f32 %v71, %v397
  %v399 = vpop.f32.mrb[0].mxu0
  %v400 = vpop.f32.mrb[0].mxu0
  %v401 = vadd.f32 %v71, %v400
  %v402 = vpop.f32.mrb[0].mxu0
  %403 = vmatprep.mubr.bf16.mxu0 0
  %404 = vmatmul.mubr.bf16.gmra.mrb[0].mxu0 %v110
  %v405 = vpop.f32.mrb[0].mxu0
  %v406 = vadd.f32 %v71, %v405
  %v407 = vpop.f32.mrb[0].mxu0
  %v408 = vpop.f32.mrb[0].mxu0
  %v409 = vadd.f32 %v71, %v408
  %v410 = vpop.f32.mrb[0].mxu0
  %411 = vmatprep.mubr.bf16.mxu0 0
  %412 = vmatmul.mubr.bf16.gmra.mrb[0].mxu0 %v111
  %v413 = vpop.f32.mrb[0].mxu0
  %v414 = vadd.f32 %v71, %v413
  %v415 = vpop.f32.mrb[0].mxu0
  %v416 = vpop.f32.mrb[0].mxu0
  %v417 = vadd.f32 %v71, %v416
  %v418 = vpop.f32.mrb[0].mxu0
  %419 = vmatprep.mubr.bf16.mxu0 0
  %420 = vmatmul.mubr.bf16.gmra.mrb[0].mxu0 %v112
  %v421 = vpop.f32.mrb[0].mxu0
  %v422 = vadd.f32 %v71, %v421
  %v423 = vpop.f32.mrb[0].mxu0
  %v424 = vpop.f32.mrb[0].mxu0
  %v425 = vadd.f32 %v71, %v424
  %v426 = vpop.f32.mrb[0].mxu0
  %427 = vdwg.mxu0
  %444 = vrot.lane.b32.xlu0 %v366, 64
  %v445 = vpop.permute.xlu0 %444
  %446 = vrot.lane.b32.xlu0 %v369, 64
  %v447 = vpop.permute.xlu0 %446
  %448 = vrot.lane.b32.xlu0 %v374, 64
  %v449 = vpop.permute.xlu0 %448
  %450 = vrot.lane.b32.xlu0 %v377, 64
  %v451 = vpop.permute.xlu0 %450
  %452 = vrot.lane.b32.xlu0 %v382, 64
  %v453 = vpop.permute.xlu0 %452
  %454 = vrot.lane.b32.xlu0 %v385, 64
  %v455 = vpop.permute.xlu0 %454
  %456 = vrot.lane.b32.xlu0 %v390, 64
  %v457 = vpop.permute.xlu0 %456
  %458 = vrot.lane.b32.xlu0 %v393, 64
  %v459 = vpop.permute.xlu0 %458
  %460 = vrot.lane.b32.xlu0 %v398, 64
  %v461 = vpop.permute.xlu0 %460
  %462 = vrot.lane.b32.xlu0 %v401, 64
  %v463 = vpop.permute.xlu0 %462
  %464 = vrot.lane.b32.xlu0 %v406, 64
  %v465 = vpop.permute.xlu0 %464
  %466 = vrot.lane.b32.xlu0 %v409, 64
  %v467 = vpop.permute.xlu0 %466
  %468 = vrot.lane.b32.xlu0 %v414, 64
  %v469 = vpop.permute.xlu0 %468
  %470 = vrot.lane.b32.xlu0 %v417, 64
  %v471 = vpop.permute.xlu0 %470
  %472 = vrot.lane.b32.xlu0 %v422, 64
  %v473 = vpop.permute.xlu0 %472
  %474 = vrot.lane.b32.xlu0 %v425, 64
  %v475 = vpop.permute.xlu0 %474
  %vm492 = vcmask 523264
  %v493 = vsel %vm492, %v204, %v445
  %v494 = vsel %vm492, %v207, %v447
  %v495 = vsel %vm492, %v212, %v449
  %v496 = vsel %vm492, %v215, %v451
  %v497 = vsel %vm492, %v220, %v453
  %v498 = vsel %vm492, %v223, %v455
  %v499 = vsel %vm492, %v228, %v457
  %v500 = vsel %vm492, %v231, %v459
  %v501 = vsel %vm492, %v236, %v461
  %v502 = vsel %vm492, %v239, %v463
  %v503 = vsel %vm492, %v244, %v465
  %v504 = vsel %vm492, %v247, %v467
  %v505 = vsel %vm492, %v252, %v469
  %v506 = vsel %vm492, %v255, %v471
  %v507 = vsel %vm492, %v260, %v473
  %v508 = vsel %vm492, %v263, %v475
  %v509 = vld [vmem:[%s3] sm:$0xff]
  %v510 = vld [vmem:[%s3 + $0x10] sm:$0xff]
  %v511 = vld [vmem:[%s3 + $0x20] sm:$0xff]
  %v512 = vld [vmem:[%s3 + $0x30] sm:$0xff]
  %v513 = vld [vmem:[%s3 + $0x40] sm:$0xff]
  %v514 = vld [vmem:[%s3 + $0x50] sm:$0xff]
  %v515 = vld [vmem:[%s3 + $0x60] sm:$0xff]
  %v516 = vld [vmem:[%s3 + $0x70] sm:$0xff]
  %v517 = vld [vmem:[%s3 + $0x80] sm:$0xff]
  %v518 = vld [vmem:[%s3 + $0x90] sm:$0xff]
  %v519 = vld [vmem:[%s3 + $0xa0] sm:$0xff]
  %v520 = vld [vmem:[%s3 + $0xb0] sm:$0xff]
  %v521 = vld [vmem:[%s3 + $0xc0] sm:$0xff]
  %v522 = vld [vmem:[%s3 + $0xd0] sm:$0xff]
  %v523 = vld [vmem:[%s3 + $0xe0] sm:$0xff]
  %v524 = vld [vmem:[%s3 + $0xf0] sm:$0xff]
  %v525 = vadd.f32 %v493, %v509
  %v526 = vadd.f32 %v494, %v510
  %v527 = vadd.f32 %v495, %v511
  %v528 = vadd.f32 %v496, %v512
  %v529 = vadd.f32 %v497, %v513
  %v530 = vadd.f32 %v498, %v514
  %v531 = vadd.f32 %v499, %v515
  %v532 = vadd.f32 %v500, %v516
  %v533 = vadd.f32 %v501, %v517
  %v534 = vadd.f32 %v502, %v518
  %v535 = vadd.f32 %v503, %v519
  %v536 = vadd.f32 %v504, %v520
  %v537 = vadd.f32 %v505, %v521
  %v538 = vadd.f32 %v506, %v522
  %v539 = vadd.f32 %v507, %v523
  %v540 = vadd.f32 %v508, %v524
  %v541 = vpack.c.bf16 %v525, %v525
  %v542 = vpack.c.bf16 %v526, %v526
  %v543 = vpack.c.bf16 %v527, %v527
  %v544 = vpack.c.bf16 %v528, %v528
  %v545 = vpack.c.bf16 %v529, %v529
  %v546 = vpack.c.bf16 %v530, %v530
  %v547 = vpack.c.bf16 %v531, %v531
  %v548 = vpack.c.bf16 %v532, %v532
  %v549 = vpack.c.bf16 %v533, %v533
  %v550 = vpack.c.bf16 %v534, %v534
  %v551 = vpack.c.bf16 %v535, %v535
  %v552 = vpack.c.bf16 %v536, %v536
  %v553 = vpack.c.bf16 %v537, %v537
  %v554 = vpack.c.bf16 %v538, %v538
  %v555 = vpack.c.bf16 %v539, %v539
  %v556 = vpack.c.bf16 %v540, %v540
  %557 = vst [vmem:[%s4] sm:$0xf] %v541
  %558 = vst [vmem:[%s4 + $0x8] sm:$0xf] %v542
  %559 = vst [vmem:[%s4 + $0x10] sm:$0xf] %v543
  %560 = vst [vmem:[%s4 + $0x18] sm:$0xf] %v544
  %561 = vst [vmem:[%s4 + $0x20] sm:$0xf] %v545
  %562 = vst [vmem:[%s4 + $0x28] sm:$0xf] %v546
  %563 = vst [vmem:[%s4 + $0x30] sm:$0xf] %v547
  %564 = vst [vmem:[%s4 + $0x38] sm:$0xf] %v548
  %565 = vst [vmem:[%s4 + $0x40] sm:$0xf] %v549
  %566 = vst [vmem:[%s4 + $0x48] sm:$0xf] %v550
  %567 = vst [vmem:[%s4 + $0x50] sm:$0xf] %v551
  %568 = vst [vmem:[%s4 + $0x58] sm:$0xf] %v552
  %569 = vst [vmem:[%s4 + $0x60] sm:$0xf] %v553
  %570 = vst [vmem:[%s4 + $0x68] sm:$0xf] %v554
  %571 = vst [vmem:[%s4 + $0x70] sm:$0xf] %v555
  %572 = vst [vmem:[%s4 + $0x78] sm:$0xf] %v556
  %s573 = scalar_lea.vmem %s1, 128
  %v574 = vld [vmem:[%s573] sm:$0xf]
  %v575 = vld [vmem:[%s573 + $0x4] sm:$0xf]
  %v576 = vld [vmem:[%s573 + $0x8] sm:$0xf]
  %v577 = vld [vmem:[%s573 + $0xc] sm:$0xf]
  %v578 = vld [vmem:[%s573 + $0x10] sm:$0xf]
  %v579 = vld [vmem:[%s573 + $0x14] sm:$0xf]
  %v580 = vld [vmem:[%s573 + $0x18] sm:$0xf]
  %v581 = vld [vmem:[%s573 + $0x1c] sm:$0xf]
  %v582 = vld [vmem:[%s573 + $0x20] sm:$0xf]
  %v583 = vld [vmem:[%s573 + $0x24] sm:$0xf]
  %v584 = vld [vmem:[%s573 + $0x28] sm:$0xf]
  %v585 = vld [vmem:[%s573 + $0x2c] sm:$0xf]
  %v586 = vld [vmem:[%s573 + $0x30] sm:$0xf]
  %v587 = vld [vmem:[%s573 + $0x34] sm:$0xf]
  %v588 = vld [vmem:[%s573 + $0x38] sm:$0xf]
  %v589 = vld [vmem:[%s573 + $0x3c] sm:$0xf]
  %v606 = vunpack.c.l.b16 %v574
  %v607 = vunpack.c.l.b16 %v575
  %v608 = vunpack.c.l.b16 %v576
  %v609 = vunpack.c.l.b16 %v577
  %v610 = vunpack.c.l.b16 %v578
  %v611 = vunpack.c.l.b16 %v579
  %v612 = vunpack.c.l.b16 %v580
  %v613 = vunpack.c.l.b16 %v581
  %v614 = vunpack.c.l.b16 %v582
  %v615 = vunpack.c.l.b16 %v583
  %v616 = vunpack.c.l.b16 %v584
  %v617 = vunpack.c.l.b16 %v585
  %v618 = vunpack.c.l.b16 %v586
  %v619 = vunpack.c.l.b16 %v587
  %v620 = vunpack.c.l.b16 %v588
  %v621 = vunpack.c.l.b16 %v589
  %v622 = vpack.c.b16 %v607, %v606
  %v623 = vpack.c.b16 %v609, %v608
  %v624 = vpack.c.b16 %v611, %v610
  %v625 = vpack.c.b16 %v613, %v612
  %v626 = vpack.c.b16 %v615, %v614
  %v627 = vpack.c.b16 %v617, %v616
  %v628 = vpack.c.b16 %v619, %v618
  %v629 = vpack.c.b16 %v621, %v620
  %638 = vmatprep.subr.bf16.mxu0 0
  %639 = vmatpush1.bf16.msra.mxu0 %v622
  %640 = vmatprep.subr.bf16.mxu0 0
  %641 = vmatpush1.bf16.msra.mxu0 %v623
  %642 = vmatprep.subr.bf16.mxu0 0
  %643 = vmatpush1.bf16.msra.mxu0 %v624
  %644 = vmatprep.subr.bf16.mxu0 0
  %645 = vmatpush1.bf16.msra.mxu0 %v625
  %646 = vmatprep.subr.bf16.mxu0 0
  %647 = vmatpush1.bf16.msra.mxu0 %v626
  %648 = vmatprep.subr.bf16.mxu0 0
  %649 = vmatpush1.bf16.msra.mxu0 %v627
  %650 = vmatprep.subr.bf16.mxu0 0
  %651 = vmatpush1.bf16.msra.mxu0 %v628
  %652 = vmatprep.subr.bf16.mxu0 0
  %653 = vmatpush1.bf16.msra.mxu0 %v629
  %654 = vmatprep.subr.bf16.mxu0 0
  %655 = vmatpush1.bf16.msra.mxu0 0
  %656 = vmatprep.subr.bf16.mxu0 0
  %657 = vmatpush1.bf16.msra.mxu0 0
  %658 = vmatprep.subr.bf16.mxu0 0
  %659 = vmatpush1.bf16.msra.mxu0 0
  %660 = vmatprep.subr.bf16.mxu0 0
  %661 = vmatpush1.bf16.msra.mxu0 0
  %662 = vmatprep.subr.bf16.mxu0 0
  %663 = vmatpush1.bf16.msra.mxu0 0
  %664 = vmatprep.subr.bf16.mxu0 0
  %665 = vmatpush1.bf16.msra.mxu0 0
  %666 = vmatprep.subr.bf16.mxu0 0
  %667 = vmatpush1.bf16.msra.mxu0 0
  %668 = vmatprep.subr.bf16.mxu0 0
  %669 = vmatpush1.bf16.msra.mxu0 0
  %670 = vmatprep.mubr.bf16.mxu0 0
  %671 = vmatmul.mubr.bf16.gmra.mrb[0].mxu0 %v105
  %v672 = vpop.f32.mrb[0].mxu0
  %v673 = vadd.f32 %v71, %v672
  %v674 = vpop.f32.mrb[0].mxu0
  %v675 = vpop.f32.mrb[0].mxu0
  %v676 = vadd.f32 %v71, %v675
  %v677 = vpop.f32.mrb[0].mxu0
  %678 = vmatprep.mubr.bf16.mxu0 0
  %679 = vmatmul.mubr.bf16.gmra.mrb[0].mxu0 %v106
  %v680 = vpop.f32.mrb[0].mxu0
  %v681 = vadd.f32 %v71, %v680
  %v682 = vpop.f32.mrb[0].mxu0
  %v683 = vpop.f32.mrb[0].mxu0
  %v684 = vadd.f32 %v71, %v683
  %v685 = vpop.f32.mrb[0].mxu0
  %686 = vmatprep.mubr.bf16.mxu0 0
  %687 = vmatmul.mubr.bf16.gmra.mrb[0].mxu0 %v107
  %v688 = vpop.f32.mrb[0].mxu0
  %v689 = vadd.f32 %v71, %v688
  %v690 = vpop.f32.mrb[0].mxu0
  %v691 = vpop.f32.mrb[0].mxu0
  %v692 = vadd.f32 %v71, %v691
  %v693 = vpop.f32.mrb[0].mxu0
  %694 = vmatprep.mubr.bf16.mxu0 0
  %695 = vmatmul.mubr.bf16.gmra.mrb[0].mxu0 %v108
  %v696 = vpop.f32.mrb[0].mxu0
  %v697 = vadd.f32 %v71, %v696
  %v698 = vpop.f32.mrb[0].mxu0
  %v699 = vpop.f32.mrb[0].mxu0
  %v700 = vadd.f32 %v71, %v699
  %v701 = vpop.f32.mrb[0].mxu0
  %702 = vmatprep.mubr.bf16.mxu0 0
  %703 = vmatmul.mubr.bf16.gmra.mrb[0].mxu0 %v109
  %v704 = vpop.f32.mrb[0].mxu0
  %v705 = vadd.f32 %v71, %v704
  %v706 = vpop.f32.mrb[0].mxu0
  %v707 = vpop.f32.mrb[0].mxu0
  %v708 = vadd.f32 %v71, %v707
  %v709 = vpop.f32.mrb[0].mxu0
  %710 = vmatprep.mubr.bf16.mxu0 0
  %711 = vmatmul.mubr.bf16.gmra.mrb[0].mxu0 %v110
  %v712 = vpop.f32.mrb[0].mxu0
  %v713 = vadd.f32 %v71, %v712
  %v714 = vpop.f32.mrb[0].mxu0
  %v715 = vpop.f32.mrb[0].mxu0
  %v716 = vadd.f32 %v71, %v715
  %v717 = vpop.f32.mrb[0].mxu0
  %718 = vmatprep.mubr.bf16.mxu0 0
  %719 = vmatmul.mubr.bf16.gmra.mrb[0].mxu0 %v111
  %v720 = vpop.f32.mrb[0].mxu0
  %v721 = vadd.f32 %v71, %v720
  %v722 = vpop.f32.mrb[0].mxu0
  %v723 = vpop.f32.mrb[0].mxu0
  %v724 = vadd.f32 %v71, %v723
  %v725 = vpop.f32.mrb[0].mxu0
  %726 = vmatprep.mubr.bf16.mxu0 0
  %727 = vmatmul.mubr.bf16.gmra.mrb[0].mxu0 %v112
  %v728 = vpop.f32.mrb[0].mxu0
  %v729 = vadd.f32 %v71, %v728
  %v730 = vpop.f32.mrb[0].mxu0
  %v731 = vpop.f32.mrb[0].mxu0
  %v732 = vadd.f32 %v71, %v731
  %v733 = vpop.f32.mrb[0].mxu0
  %734 = vdwg.mxu0
  %s735 = scalar_lea.vmem %s1, 192
  %v736 = vld [vmem:[%s735] sm:$0xf]
  %v737 = vld [vmem:[%s735 + $0x4] sm:$0xf]
  %v738 = vld [vmem:[%s735 + $0x8] sm:$0xf]
  %v739 = vld [vmem:[%s735 + $0xc] sm:$0xf]
  %v740 = vld [vmem:[%s735 + $0x10] sm:$0xf]
  %v741 = vld [vmem:[%s735 + $0x14] sm:$0xf]
  %v742 = vld [vmem:[%s735 + $0x18] sm:$0xf]
  %v743 = vld [vmem:[%s735 + $0x1c] sm:$0xf]
  %v744 = vld [vmem:[%s735 + $0x20] sm:$0xf]
  %v745 = vld [vmem:[%s735 + $0x24] sm:$0xf]
  %v746 = vld [vmem:[%s735 + $0x28] sm:$0xf]
  %v747 = vld [vmem:[%s735 + $0x2c] sm:$0xf]
  %v748 = vld [vmem:[%s735 + $0x30] sm:$0xf]
  %v749 = vld [vmem:[%s735 + $0x34] sm:$0xf]
  %v750 = vld [vmem:[%s735 + $0x38] sm:$0xf]
  %v751 = vld [vmem:[%s735 + $0x3c] sm:$0xf]
  %v768 = vunpack.c.l.b16 %v736
  %v769 = vunpack.c.l.b16 %v737
  %v770 = vunpack.c.l.b16 %v738
  %v771 = vunpack.c.l.b16 %v739
  %v772 = vunpack.c.l.b16 %v740
  %v773 = vunpack.c.l.b16 %v741
  %v774 = vunpack.c.l.b16 %v742
  %v775 = vunpack.c.l.b16 %v743
  %v776 = vunpack.c.l.b16 %v744
  %v777 = vunpack.c.l.b16 %v745
  %v778 = vunpack.c.l.b16 %v746
  %v779 = vunpack.c.l.b16 %v747
  %v780 = vunpack.c.l.b16 %v748
  %v781 = vunpack.c.l.b16 %v749
  %v782 = vunpack.c.l.b16 %v750
  %v783 = vunpack.c.l.b16 %v751
  %v784 = vpack.c.b16 %v769, %v768
  %v785 = vpack.c.b16 %v771, %v770
  %v786 = vpack.c.b16 %v773, %v772
  %v787 = vpack.c.b16 %v775, %v774
  %v788 = vpack.c.b16 %v777, %v776
  %v789 = vpack.c.b16 %v779, %v778
  %v790 = vpack.c.b16 %v781, %v780
  %v791 = vpack.c.b16 %v783, %v782
  %800 = vmatprep.subr.bf16.mxu0 0
  %801 = vmatpush1.bf16.msra.mxu0 %v784
  %802 = vmatprep.subr.bf16.mxu0 0
  %803 = vmatpush1.bf16.msra.mxu0 %v785
  %804 = vmatprep.subr.bf16.mxu0 0
  %805 = vmatpush1.bf16.msra.mxu0 %v786
  %806 = vmatprep.subr.bf16.mxu0 0
  %807 = vmatpush1.bf16.msra.mxu0 %v787
  %808 = vmatprep.subr.bf16.mxu0 0
  %809 = vmatpush1.bf16.msra.mxu0 %v788
  %810 = vmatprep.subr.bf16.mxu0 0
  %811 = vmatpush1.bf16.msra.mxu0 %v789
  %812 = vmatprep.subr.bf16.mxu0 0
  %813 = vmatpush1.bf16.msra.mxu0 %v790
  %814 = vmatprep.subr.bf16.mxu0 0
  %815 = vmatpush1.bf16.msra.mxu0 %v791
  %816 = vmatprep.subr.bf16.mxu0 0
  %817 = vmatpush1.bf16.msra.mxu0 0
  %818 = vmatprep.subr.bf16.mxu0 0
  %819 = vmatpush1.bf16.msra.mxu0 0
  %820 = vmatprep.subr.bf16.mxu0 0
  %821 = vmatpush1.bf16.msra.mxu0 0
  %822 = vmatprep.subr.bf16.mxu0 0
  %823 = vmatpush1.bf16.msra.mxu0 0
  %824 = vmatprep.subr.bf16.mxu0 0
  %825 = vmatpush1.bf16.msra.mxu0 0
  %826 = vmatprep.subr.bf16.mxu0 0
  %827 = vmatpush1.bf16.msra.mxu0 0
  %828 = vmatprep.subr.bf16.mxu0 0
  %829 = vmatpush1.bf16.msra.mxu0 0
  %830 = vmatprep.subr.bf16.mxu0 0
  %831 = vmatpush1.bf16.msra.mxu0 0
  %832 = vmatprep.mubr.bf16.mxu0 0
  %833 = vmatmul.mubr.bf16.gmra.mrb[0].mxu0 %v105
  %v834 = vpop.f32.mrb[0].mxu0
  %v835 = vadd.f32 %v71, %v834
  %v836 = vpop.f32.mrb[0].mxu0
  %v837 = vpop.f32.mrb[0].mxu0
  %v838 = vadd.f32 %v71, %v837
  %v839 = vpop.f32.mrb[0].mxu0
  %840 = vmatprep.mubr.bf16.mxu0 0
  %841 = vmatmul.mubr.bf16.gmra.mrb[0].mxu0 %v106
  %v842 = vpop.f32.mrb[0].mxu0
  %v843 = vadd.f32 %v71, %v842
  %v844 = vpop.f32.mrb[0].mxu0
  %v845 = vpop.f32.mrb[0].mxu0
  %v846 = vadd.f32 %v71, %v845
  %v847 = vpop.f32.mrb[0].mxu0
  %848 = vmatprep.mubr.bf16.mxu0 0
  %849 = vmatmul.mubr.bf16.gmra.mrb[0].mxu0 %v107
  %v850 = vpop.f32.mrb[0].mxu0
  %v851 = vadd.f32 %v71, %v850
  %v852 = vpop.f32.mrb[0].mxu0
  %v853 = vpop.f32.mrb[0].mxu0
  %v854 = vadd.f32 %v71, %v853
  %v855 = vpop.f32.mrb[0].mxu0
  %856 = vmatprep.mubr.bf16.mxu0 0
  %857 = vmatmul.mubr.bf16.gmra.mrb[0].mxu0 %v108
  %v858 = vpop.f32.mrb[0].mxu0
  %v859 = vadd.f32 %v71, %v858
  %v860 = vpop.f32.mrb[0].mxu0
  %v861 = vpop.f32.mrb[0].mxu0
  %v862 = vadd.f32 %v71, %v861
  %v863 = vpop.f32.mrb[0].mxu0
  %864 = vmatprep.mubr.bf16.mxu0 0
  %865 = vmatmul.mubr.bf16.gmra.mrb[0].mxu0 %v109
  %v866 = vpop.f32.mrb[0].mxu0
  %v867 = vadd.f32 %v71, %v866
  %v868 = vpop.f32.mrb[0].mxu0
  %v869 = vpop.f32.mrb[0].mxu0
  %v870 = vadd.f32 %v71, %v869
  %v871 = vpop.f32.mrb[0].mxu0
  %872 = vmatprep.mubr.bf16.mxu0 0
  %873 = vmatmul.mubr.bf16.gmra.mrb[0].mxu0 %v110
  %v874 = vpop.f32.mrb[0].mxu0
  %v875 = vadd.f32 %v71, %v874
  %v876 = vpop.f32.mrb[0].mxu0
  %v877 = vpop.f32.mrb[0].mxu0
  %v878 = vadd.f32 %v71, %v877
  %v879 = vpop.f32.mrb[0].mxu0
  %880 = vmatprep.mubr.bf16.mxu0 0
  %881 = vmatmul.mubr.bf16.gmra.mrb[0].mxu0 %v111
  %v882 = vpop.f32.mrb[0].mxu0
  %v883 = vadd.f32 %v71, %v882
  %v884 = vpop.f32.mrb[0].mxu0
  %v885 = vpop.f32.mrb[0].mxu0
  %v886 = vadd.f32 %v71, %v885
  %v887 = vpop.f32.mrb[0].mxu0
  %888 = vmatprep.mubr.bf16.mxu0 0
  %889 = vmatmul.mubr.bf16.gmra.mrb[0].mxu0 %v112
  %v890 = vpop.f32.mrb[0].mxu0
  %v891 = vadd.f32 %v71, %v890
  %v892 = vpop.f32.mrb[0].mxu0
  %v893 = vpop.f32.mrb[0].mxu0
  %v894 = vadd.f32 %v71, %v893
  %v895 = vpop.f32.mrb[0].mxu0
  %896 = vdwg.mxu0
  %913 = vrot.lane.b32.xlu0 %v835, 64
  %v914 = vpop.permute.xlu0 %913
  %915 = vrot.lane.b32.xlu0 %v838, 64
  %v916 = vpop.permute.xlu0 %915
  %917 = vrot.lane.b32.xlu0 %v843, 64
  %v918 = vpop.permute.xlu0 %917
  %919 = vrot.lane.b32.xlu0 %v846, 64
  %v920 = vpop.permute.xlu0 %919
  %921 = vrot.lane.b32.xlu0 %v851, 64
  %v922 = vpop.permute.xlu0 %921
  %923 = vrot.lane.b32.xlu0 %v854, 64
  %v924 = vpop.permute.xlu0 %923
  %925 = vrot.lane.b32.xlu0 %v859, 64
  %v926 = vpop.permute.xlu0 %925
  %927 = vrot.lane.b32.xlu0 %v862, 64
  %v928 = vpop.permute.xlu0 %927
  %929 = vrot.lane.b32.xlu0 %v867, 64
  %v930 = vpop.permute.xlu0 %929
  %931 = vrot.lane.b32.xlu0 %v870, 64
  %v932 = vpop.permute.xlu0 %931
  %933 = vrot.lane.b32.xlu0 %v875, 64
  %v934 = vpop.permute.xlu0 %933
  %935 = vrot.lane.b32.xlu0 %v878, 64
  %v936 = vpop.permute.xlu0 %935
  %937 = vrot.lane.b32.xlu0 %v883, 64
  %v938 = vpop.permute.xlu0 %937
  %939 = vrot.lane.b32.xlu0 %v886, 64
  %v940 = vpop.permute.xlu0 %939
  %941 = vrot.lane.b32.xlu0 %v891, 64
  %v942 = vpop.permute.xlu0 %941
  %943 = vrot.lane.b32.xlu0 %v894, 64
  %v944 = vpop.permute.xlu0 %943
  %v961 = vsel %vm492, %v673, %v914
  %v962 = vsel %vm492, %v676, %v916
  %v963 = vsel %vm492, %v681, %v918
  %v964 = vsel %vm492, %v684, %v920
  %v965 = vsel %vm492, %v689, %v922
  %v966 = vsel %vm492, %v692, %v924
  %v967 = vsel %vm492, %v697, %v926
  %v968 = vsel %vm492, %v700, %v928
  %v969 = vsel %vm492, %v705, %v930
  %v970 = vsel %vm492, %v708, %v932
  %v971 = vsel %vm492, %v713, %v934
  %v972 = vsel %vm492, %v716, %v936
  %v973 = vsel %vm492, %v721, %v938
  %v974 = vsel %vm492, %v724, %v940
  %v975 = vsel %vm492, %v729, %v942
  %v976 = vsel %vm492, %v732, %v944
  %s977 = scalar_lea.vmem %s3, 8
  %v978 = vld [vmem:[%s977] sm:$0xff]
  %v979 = vld [vmem:[%s977 + $0x10] sm:$0xff]
  %v980 = vld [vmem:[%s977 + $0x20] sm:$0xff]
  %v981 = vld [vmem:[%s977 + $0x30] sm:$0xff]
  %v982 = vld [vmem:[%s977 + $0x40] sm:$0xff]
  %v983 = vld [vmem:[%s977 + $0x50] sm:$0xff]
  %v984 = vld [vmem:[%s977 + $0x60] sm:$0xff]
  %v985 = vld [vmem:[%s977 + $0x70] sm:$0xff]
  %v986 = vld [vmem:[%s977 + $0x80] sm:$0xff]
  %v987 = vld [vmem:[%s977 + $0x90] sm:$0xff]
  %v988 = vld [vmem:[%s977 + $0xa0] sm:$0xff]
  %v989 = vld [vmem:[%s977 + $0xb0] sm:$0xff]
  %v990 = vld [vmem:[%s977 + $0xc0] sm:$0xff]
  %v991 = vld [vmem:[%s977 + $0xd0] sm:$0xff]
  %v992 = vld [vmem:[%s977 + $0xe0] sm:$0xff]
  %v993 = vld [vmem:[%s977 + $0xf0] sm:$0xff]
  %v994 = vadd.f32 %v961, %v978
  %v995 = vadd.f32 %v962, %v979
  %v996 = vadd.f32 %v963, %v980
  %v997 = vadd.f32 %v964, %v981
  %v998 = vadd.f32 %v965, %v982
  %v999 = vadd.f32 %v966, %v983
  %v1000 = vadd.f32 %v967, %v984
  %v1001 = vadd.f32 %v968, %v985
  %v1002 = vadd.f32 %v969, %v986
  %v1003 = vadd.f32 %v970, %v987
  %v1004 = vadd.f32 %v971, %v988
  %v1005 = vadd.f32 %v972, %v989
  %v1006 = vadd.f32 %v973, %v990
  %v1007 = vadd.f32 %v974, %v991
  %v1008 = vadd.f32 %v975, %v992
  %v1009 = vadd.f32 %v976, %v993
  %v1010 = vpack.c.bf16 %v994, %v994
  %v1011 = vpack.c.bf16 %v995, %v995
  %v1012 = vpack.c.bf16 %v996, %v996
  %v1013 = vpack.c.bf16 %v997, %v997
  %v1014 = vpack.c.bf16 %v998, %v998
  %v1015 = vpack.c.bf16 %v999, %v999
  %v1016 = vpack.c.bf16 %v1000, %v1000
  %v1017 = vpack.c.bf16 %v1001, %v1001
  %v1018 = vpack.c.bf16 %v1002, %v1002
  %v1019 = vpack.c.bf16 %v1003, %v1003
  %v1020 = vpack.c.bf16 %v1004, %v1004
  %v1021 = vpack.c.bf16 %v1005, %v1005
  %v1022 = vpack.c.bf16 %v1006, %v1006
  %v1023 = vpack.c.bf16 %v1007, %v1007
  %v1024 = vpack.c.bf16 %v1008, %v1008
  %v1025 = vpack.c.bf16 %v1009, %v1009
  %s1026 = scalar_lea.vmem %s4, 4
  %1027 = vst [vmem:[%s1026] sm:$0xf] %v1010
  %1028 = vst [vmem:[%s1026 + $0x8] sm:$0xf] %v1011
  %1029 = vst [vmem:[%s1026 + $0x10] sm:$0xf] %v1012
  %1030 = vst [vmem:[%s1026 + $0x18] sm:$0xf] %v1013
  %1031 = vst [vmem:[%s1026 + $0x20] sm:$0xf] %v1014
  %1032 = vst [vmem:[%s1026 + $0x28] sm:$0xf] %v1015
  %1033 = vst [vmem:[%s1026 + $0x30] sm:$0xf] %v1016
  %1034 = vst [vmem:[%s1026 + $0x38] sm:$0xf] %v1017
  %1035 = vst [vmem:[%s1026 + $0x40] sm:$0xf] %v1018
  %1036 = vst [vmem:[%s1026 + $0x48] sm:$0xf] %v1019
  %1037 = vst [vmem:[%s1026 + $0x50] sm:$0xf] %v1020
  %1038 = vst [vmem:[%s1026 + $0x58] sm:$0xf] %v1021
  %1039 = vst [vmem:[%s1026 + $0x60] sm:$0xf] %v1022
  %1040 = vst [vmem:[%s1026 + $0x68] sm:$0xf] %v1023
  %1041 = vst [vmem:[%s1026 + $0x70] sm:$0xf] %v1024
  %1042 = vst [vmem:[%s1026 + $0x78] sm:$0xf] %v1025
  // Predicated region
  $region18: #{decoder_block_forward.3} parent=0 // pred_check
    _
  $region19: #{decoder_block_forward.3} parent=0 // pred_check_branch
    %1044 = sbr.rel (0) target = $region21
  $region20: #{decoder_block_forward.3} parent=0 // pred_region
    _
  $region21: #{decoder_block_forward.3} parent=0 // pred_fallthru
    _
  // Predicated region
  $region22: #{decoder_block_forward.3} parent=0 // pred_check
    _
  $region23: #{decoder_block_forward.3} parent=0 // pred_check_branch
    %1046 = sbr.rel (0) target = $region25
  $region24: #{decoder_block_forward.3} parent=0 // pred_region
    _
  $region25: #{decoder_block_forward.3} parent=0 // pred_fallthru
    _

// kernel: decoder_block_forward.5
$region0: #{decoder_block_forward.5}
  #allocation0 [shape = 'u32[]', space=smem, size = 0x4, offset = 0x4, fixed_abs, tag = 'smem constant byte address 0x4 - core index']
  #allocation1 [shape = 'u32[144,128]{1,0:T(1,128)}', space=vmem, size = 0x12000, scoped, tag = 'internal scratch']
  %s0 = inlined_call_operand.vmem [shape: bf16[512,64], index: 0, kind: input, shape index: {}]
  %s1 = inlined_call_operand.vmem [shape: f32[2,64], index: 1, kind: input, shape index: {}]
  %s2 = inlined_call_operand.vmem [shape: f32[1,64], index: 2, kind: input, shape index: {}]
  %s3 = inlined_call_operand.vmem [shape: f32[1,64], index: 3, kind: input, shape index: {}]
  %s4 = inlined_call_operand.hbm [shape: f32[512,64], index: 4, kind: output, shape index: {}]
  %s5 = sld [smem:[#allocation0]]
  $region26: #{decoder_block_forward.5} parent=0
    _
  %s7 = ssub.s32 1, %s5
  %s8 = scalar_select 0, %s7, %s5
  $region1: #{decoder_block_forward.5} parent=0
    #allocation2 [shape = 'u8[262144]{0}', space=vmem, size = 0x40000, scoped, tag = 'output window, operand 0, single buffered']
    #allocation3 [shape = 's32[1]{0}', space=sflag, size = 0x4, scoped, tag = 'scoped memory for decoder_block_forward.5']
    %9 = vsyncpa [#allocation3], 0
    // Predicated region
    $region2: #{decoder_block_forward.5} parent=1 // pred_check
      _
    $region3: #{decoder_block_forward.5} parent=1 // pred_check_branch
      %11 = sbr.rel (0) target = $region5
    $region4: #{decoder_block_forward.5} parent=1 // pred_region
      _
    $region5: #{decoder_block_forward.5} parent=1 // pred_fallthru
      _
    // Predicated region
    $region6: #{decoder_block_forward.5} parent=1 // pred_check
      _
    $region7: #{decoder_block_forward.5} parent=1 // pred_check_branch
      %13 = sbr.rel (0) target = $region9
    $region8: #{decoder_block_forward.5} parent=1 // pred_region
      _
    $region9: #{decoder_block_forward.5} parent=1 // pred_fallthru
      _
    // Predicated region
    $region10: #{decoder_block_forward.5} parent=1 // pred_check
      _
    $region11: #{decoder_block_forward.5} parent=1 // pred_check_branch
      %15 = sbr.rel (0) target = $region13
    $region12: #{decoder_block_forward.5} parent=1 // pred_region
      _
    $region13: #{decoder_block_forward.5} parent=1 // pred_fallthru
      _
    // Predicated region
    $region14: #{decoder_block_forward.5} parent=1 // pred_check
      _
    $region15: #{decoder_block_forward.5} parent=1 // pred_check_branch
      %17 = sbr.rel (0) target = $region17
    $region16: #{decoder_block_forward.5} parent=1 // pred_region
      _
    $region17: #{decoder_block_forward.5} parent=1 // pred_fallthru
      _
    %v18 = vld [vmem:[%s1] sm:$0x1]
    %v19 = vmul.f32 %v18, 0.001953125
    %v20 = vld [vmem:[%s1 + $0x1] sm:$0x1]
    %v21 = vmul.f32 %v20, 0.001953125
    %v22 = vmul.f32 %v19, %v19
    %v23 = vsub.f32 %v21, %v22
    %v24 = vld [vmem:[%s2] sm:$0x1]
    %v25 = vadd.f32 %v23, 1e-05
    %v26 = vrsqrt.pop %v25
    %v27 = vmul.f32 %v24, %v26
    %v28 = vld [vmem:[%s3] sm:$0x1]
    %v29 = vmul.f32 %v19, %v27
    %v30 = vsub.f32 %v28, %v29
    %v31 = vld [vmem:[%s0] sm:$0xf]
    %v32 = vld [vmem:[%s0 + $0x4] sm:$0xf]
    %v33 = vld [vmem:[%s0 + $0x8] sm:$0xf]
    %v34 = vld [vmem:[%s0 + $0xc] sm:$0xf]
    %v35 = vld [vmem:[%s0 + $0x10] sm:$0xf]
    %v36 = vld [vmem:[%s0 + $0x14] sm:$0xf]
    %v37 = vld [vmem:[%s0 + $0x18] sm:$0xf]
    %v38 = vld [vmem:[%s0 + $0x1c] sm:$0xf]
    %v39 = vld [vmem:[%s0 + $0x20] sm:$0xf]
    %v40 = vld [vmem:[%s0 + $0x24] sm:$0xf]
    %v41 = vld [vmem:[%s0 + $0x28] sm:$0xf]
    %v42 = vld [vmem:[%s0 + $0x2c] sm:$0xf]
    %v43 = vld [vmem:[%s0 + $0x30] sm:$0xf]
    %v44 = vld [vmem:[%s0 + $0x34] sm:$0xf]
    %v45 = vld [vmem:[%s0 + $0x38] sm:$0xf]
    %v46 = vld [vmem:[%s0 + $0x3c] sm:$0xf]
    %v47 = vld [vmem:[%s0 + $0x40] sm:$0xf]
    %v48 = vld [vmem:[%s0 + $0x44] sm:$0xf]
    %v49 = vld [vmem:[%s0 + $0x48] sm:$0xf]
    %v50 = vld [vmem:[%s0 + $0x4c] sm:$0xf]
    %v51 = vld [vmem:[%s0 + $0x50] sm:$0xf]
    %v52 = vld [vmem:[%s0 + $0x54] sm:$0xf]
    %v53 = vld [vmem:[%s0 + $0x58] sm:$0xf]
    %v54 = vld [vmem:[%s0 + $0x5c] sm:$0xf]
    %v55 = vld [vmem:[%s0 + $0x60] sm:$0xf]
    %v56 = vld [vmem:[%s0 + $0x64] sm:$0xf]
    %v57 = vld [vmem:[%s0 + $0x68] sm:$0xf]
    %v58 = vld [vmem:[%s0 + $0x6c] sm:$0xf]
    %v59 = vld [vmem:[%s0 + $0x70] sm:$0xf]
    %v60 = vld [vmem:[%s0 + $0x74] sm:$0xf]
    %v61 = vld [vmem:[%s0 + $0x78] sm:$0xf]
    %v62 = vld [vmem:[%s0 + $0x7c] sm:$0xf]
    %v63 = vld [vmem:[%s0 + $0x80] sm:$0xf]
    %v64 = vld [vmem:[%s0 + $0x84] sm:$0xf]
    %v65 = vld [vmem:[%s0 + $0x88] sm:$0xf]
    %v66 = vld [vmem:[%s0 + $0x8c] sm:$0xf]
    %v67 = vld [vmem:[%s0 + $0x90] sm:$0xf]
    %v68 = vld [vmem:[%s0 + $0x94] sm:$0xf]
    %v69 = vld [vmem:[%s0 + $0x98] sm:$0xf]
    %v70 = vld [vmem:[%s0 + $0x9c] sm:$0xf]
    %v71 = vld [vmem:[%s0 + $0xa0] sm:$0xf]
    %v72 = vld [vmem:[%s0 + $0xa4] sm:$0xf]
    %v73 = vld [vmem:[%s0 + $0xa8] sm:$0xf]
    %v74 = vld [vmem:[%s0 + $0xac] sm:$0xf]
    %v75 = vld [vmem:[%s0 + $0xb0] sm:$0xf]
    %v76 = vld [vmem:[%s0 + $0xb4] sm:$0xf]
    %v77 = vld [vmem:[%s0 + $0xb8] sm:$0xf]
    %v78 = vld [vmem:[%s0 + $0xbc] sm:$0xf]
    %v79 = vld [vmem:[%s0 + $0xc0] sm:$0xf]
    %v80 = vld [vmem:[%s0 + $0xc4] sm:$0xf]
    %v81 = vld [vmem:[%s0 + $0xc8] sm:$0xf]
    %v82 = vld [vmem:[%s0 + $0xcc] sm:$0xf]
    %v83 = vld [vmem:[%s0 + $0xd0] sm:$0xf]
    %v84 = vld [vmem:[%s0 + $0xd4] sm:$0xf]
    %v85 = vld [vmem:[%s0 + $0xd8] sm:$0xf]
    %v86 = vld [vmem:[%s0 + $0xdc] sm:$0xf]
    %v87 = vld [vmem:[%s0 + $0xe0] sm:$0xf]
    %v88 = vld [vmem:[%s0 + $0xe4] sm:$0xf]
    %v89 = vld [vmem:[%s0 + $0xe8] sm:$0xf]
    %v90 = vld [vmem:[%s0 + $0xec] sm:$0xf]
    %v91 = vld [vmem:[%s0 + $0xf0] sm:$0xf]
    %v92 = vld [vmem:[%s0 + $0xf4] sm:$0xf]
    %v93 = vld [vmem:[%s0 + $0xf8] sm:$0xf]
    %v94 = vld [vmem:[%s0 + $0xfc] sm:$0xf]
    %v95 = vunpack.c.l.bf16 %v31
    %v96 = vunpack.c.l.bf16 %v32
    %v97 = vunpack.c.l.bf16 %v33
    %v98 = vunpack.c.l.bf16 %v34
    %v99 = vunpack.c.l.bf16 %v35
    %v100 = vunpack.c.l.bf16 %v36
    %v101 = vunpack.c.l.bf16 %v37
    %v102 = vunpack.c.l.bf16 %v38
    %v103 = vunpack.c.l.bf16 %v39
    %v104 = vunpack.c.l.bf16 %v40
    %v105 = vunpack.c.l.bf16 %v41
    %v106 = vunpack.c.l.bf16 %v42
    %v107 = vunpack.c.l.bf16 %v43
    %v108 = vunpack.c.l.bf16 %v44
    %v109 = vunpack.c.l.bf16 %v45
    %v110 = vunpack.c.l.bf16 %v46
    %v111 = vunpack.c.l.bf16 %v47
    %v112 = vunpack.c.l.bf16 %v48
    %v113 = vunpack.c.l.bf16 %v49
    %v114 = vunpack.c.l.bf16 %v50
    %v115 = vunpack.c.l.bf16 %v51
    %v116 = vunpack.c.l.bf16 %v52
    %v117 = vunpack.c.l.bf16 %v53
    %v118 = vunpack.c.l.bf16 %v54
    %v119 = vunpack.c.l.bf16 %v55
    %v120 = vunpack.c.l.bf16 %v56
    %v121 = vunpack.c.l.bf16 %v57
    %v122 = vunpack.c.l.bf16 %v58
    %v123 = vunpack.c.l.bf16 %v59
    %v124 = vunpack.c.l.bf16 %v60
    %v125 = vunpack.c.l.bf16 %v61
    %v126 = vunpack.c.l.bf16 %v62
    %v127 = vunpack.c.l.bf16 %v63
    %v128 = vunpack.c.l.bf16 %v64
    %v129 = vunpack.c.l.bf16 %v65
    %v130 = vunpack.c.l.bf16 %v66
    %v131 = vunpack.c.l.bf16 %v67
    %v132 = vunpack.c.l.bf16 %v68
    %v133 = vunpack.c.l.bf16 %v69
    %v134 = vunpack.c.l.bf16 %v70
    %v135 = vunpack.c.l.bf16 %v71
    %v136 = vunpack.c.l.bf16 %v72
    %v137 = vunpack.c.l.bf16 %v73
    %v138 = vunpack.c.l.bf16 %v74
    %v139 = vunpack.c.l.bf16 %v75
    %v140 = vunpack.c.l.bf16 %v76
    %v141 = vunpack.c.l.bf16 %v77
    %v142 = vunpack.c.l.bf16 %v78
    %v143 = vunpack.c.l.bf16 %v79
    %v144 = vunpack.c.l.bf16 %v80
    %v145 = vunpack.c.l.bf16 %v81
    %v146 = vunpack.c.l.bf16 %v82
    %v147 = vunpack.c.l.bf16 %v83
    %v148 = vunpack.c.l.bf16 %v84
    %v149 = vunpack.c.l.bf16 %v85
    %v150 = vunpack.c.l.bf16 %v86
    %v151 = vunpack.c.l.bf16 %v87
    %v152 = vunpack.c.l.bf16 %v88
    %v153 = vunpack.c.l.bf16 %v89
    %v154 = vunpack.c.l.bf16 %v90
    %v155 = vunpack.c.l.bf16 %v91
    %v156 = vunpack.c.l.bf16 %v92
    %v157 = vunpack.c.l.bf16 %v93
    %v158 = vunpack.c.l.bf16 %v94
    %v160 = vlaneseq
    %v161 = vshrl.u32 %v160, 7
    %v162 = vsub.s32 0, %v161
    %v163 = vrot.slane %v27, %v162
    %v165 = vmul.f32 %v95, %v163
    %v166 = vmul.f32 %v96, %v163
    %v167 = vmul.f32 %v97, %v163
    %v168 = vmul.f32 %v98, %v163
    %v169 = vmul.f32 %v99, %v163
    %v170 = vmul.f32 %v100, %v163
    %v171 = vmul.f32 %v101, %v163
    %v172 = vmul.f32 %v102, %v163
    %v173 = vmul.f32 %v103, %v163
    %v174 = vmul.f32 %v104, %v163
    %v175 = vmul.f32 %v105, %v163
    %v176 = vmul.f32 %v106, %v163
    %v177 = vmul.f32 %v107, %v163
    %v178 = vmul.f32 %v108, %v163
    %v179 = vmul.f32 %v109, %v163
    %v180 = vmul.f32 %v110, %v163
    %v181 = vmul.f32 %v111, %v163
    %v182 = vmul.f32 %v112, %v163
    %v183 = vmul.f32 %v113, %v163
    %v184 = vmul.f32 %v114, %v163
    %v185 = vmul.f32 %v115, %v163
    %v186 = vmul.f32 %v116, %v163
    %v187 = vmul.f32 %v117, %v163
    %v188 = vmul.f32 %v118, %v163
    %v189 = vmul.f32 %v119, %v163
    %v190 = vmul.f32 %v120, %v163
    %v191 = vmul.f32 %v121, %v163
    %v192 = vmul.f32 %v122, %v163
    %v193 = vmul.f32 %v123, %v163
    %v194 = vmul.f32 %v124, %v163
    %v195 = vmul.f32 %v125, %v163
    %v196 = vmul.f32 %v126, %v163
    %v197 = vmul.f32 %v127, %v163
    %v198 = vmul.f32 %v128, %v163
    %v199 = vmul.f32 %v129, %v163
    %v200 = vmul.f32 %v130, %v163
    %v201 = vmul.f32 %v131, %v163
    %v202 = vmul.f32 %v132, %v163
    %v203 = vmul.f32 %v133, %v163
    %v204 = vmul.f32 %v134, %v163
    %v205 = vmul.f32 %v135, %v163
    %v206 = vmul.f32 %v136, %v163
    %v207 = vmul.f32 %v137, %v163
    %v208 = vmul.f32 %v138, %v163
    %v209 = vmul.f32 %v139, %v163
    %v210 = vmul.f32 %v140, %v163
    %v211 = vmul.f32 %v141, %v163
    %v212 = vmul.f32 %v142, %v163
    %v213 = vmul.f32 %v143, %v163
    %v214 = vmul.f32 %v144, %v163
    %v215 = vmul.f32 %v145, %v163
    %v216 = vmul.f32 %v146, %v163
    %v217 = vmul.f32 %v147, %v163
    %v218 = vmul.f32 %v148, %v163
    %v219 = vmul.f32 %v149, %v163
    %v220 = vmul.f32 %v150, %v163
    %v221 = vmul.f32 %v151, %v163
    %v222 = vmul.f32 %v152, %v163
    %v223 = vmul.f32 %v153, %v163
    %v224 = vmul.f32 %v154, %v163
    %v225 = vmul.f32 %v155, %v163
    %v226 = vmul.f32 %v156, %v163
    %v227 = vmul.f32 %v157, %v163
    %v228 = vmul.f32 %v158, %v163
    %v230 = vlaneseq
    %v231 = vshrl.u32 %v230, 7
    %v232 = vsub.s32 0, %v231
    %v233 = vrot.slane %v30, %v232
    %v235 = vadd.f32 %v165, %v233
    %v236 = vadd.f32 %v166, %v233
    %v237 = vadd.f32 %v167, %v233
    %v238 = vadd.f32 %v168, %v233
    %v239 = vadd.f32 %v169, %v233
    %v240 = vadd.f32 %v170, %v233
    %v241 = vadd.f32 %v171, %v233
    %v242 = vadd.f32 %v172, %v233
    %v243 = vadd.f32 %v173, %v233
    %v244 = vadd.f32 %v174, %v233
    %v245 = vadd.f32 %v175, %v233
    %v246 = vadd.f32 %v176, %v233
    %v247 = vadd.f32 %v177, %v233
    %v248 = vadd.f32 %v178, %v233
    %v249 = vadd.f32 %v179, %v233
    %v250 = vadd.f32 %v180, %v233
    %v251 = vadd.f32 %v181, %v233
    %v252 = vadd.f32 %v182, %v233
    %v253 = vadd.f32 %v183, %v233
    %v254 = vadd.f32 %v184, %v233
    %v255 = vadd.f32 %v185, %v233
    %v256 = vadd.f32 %v186, %v233
    %v257 = vadd.f32 %v187, %v233
    %v258 = vadd.f32 %v188, %v233
    %v259 = vadd.f32 %v189, %v233
    %v260 = vadd.f32 %v190, %v233
    %v261 = vadd.f32 %v191, %v233
    %v262 = vadd.f32 %v192, %v233
    %v263 = vadd.f32 %v193, %v233
    %v264 = vadd.f32 %v194, %v233
    %v265 = vadd.f32 %v195, %v233
    %v266 = vadd.f32 %v196, %v233
    %v267 = vadd.f32 %v197, %v233
    %v268 = vadd.f32 %v198, %v233
    %v269 = vadd.f32 %v199, %v233
    %v270 = vadd.f32 %v200, %v233
    %v271 = vadd.f32 %v201, %v233
    %v272 = vadd.f32 %v202, %v233
    %v273 = vadd.f32 %v203, %v233
    %v274 = vadd.f32 %v204, %v233
    %v275 = vadd.f32 %v205, %v233
    %v276 = vadd.f32 %v206, %v233
    %v277 = vadd.f32 %v207, %v233
    %v278 = vadd.f32 %v208, %v233
    %v279 = vadd.f32 %v209, %v233
    %v280 = vadd.f32 %v210, %v233
    %v281 = vadd.f32 %v211, %v233
    %v282 = vadd.f32 %v212, %v233
    %v283 = vadd.f32 %v213, %v233
    %v284 = vadd.f32 %v214, %v233
    %v285 = vadd.f32 %v215, %v233
    %v286 = vadd.f32 %v216, %v233
    %v287 = vadd.f32 %v217, %v233
    %v288 = vadd.f32 %v218, %v233
    %v289 = vadd.f32 %v219, %v233
    %v290 = vadd.f32 %v220, %v233
    %v291 = vadd.f32 %v221, %v233
    %v292 = vadd.f32 %v222, %v233
    %v293 = vadd.f32 %v223, %v233
    %v294 = vadd.f32 %v224, %v233
    %v295 = vadd.f32 %v225, %v233
    %v296 = vadd.f32 %v226, %v233
    %v297 = vadd.f32 %v227, %v233
    %v298 = vadd.f32 %v228, %v233
    %v299 = vmax.f32 %v235, 0.0
    %v300 = vmax.f32 %v236, 0.0
    %v301 = vmax.f32 %v237, 0.0
    %v302 = vmax.f32 %v238, 0.0
    %v303 = vmax.f32 %v239, 0.0
    %v304 = vmax.f32 %v240, 0.0
    %v305 = vmax.f32 %v241, 0.0
    %v306 = vmax.f32 %v242, 0.0
    %v307 = vmax.f32 %v243, 0.0
    %v308 = vmax.f32 %v244, 0.0
    %v309 = vmax.f32 %v245, 0.0
    %v310 = vmax.f32 %v246, 0.0
    %v311 = vmax.f32 %v247, 0.0
    %v312 = vmax.f32 %v248, 0.0
    %v313 = vmax.f32 %v249, 0.0
    %v314 = vmax.f32 %v250, 0.0
    %v315 = vmax.f32 %v251, 0.0
    %v316 = vmax.f32 %v252, 0.0
    %v317 = vmax.f32 %v253, 0.0
    %v318 = vmax.f32 %v254, 0.0
    %v319 = vmax.f32 %v255, 0.0
    %v320 = vmax.f32 %v256, 0.0
    %v321 = vmax.f32 %v257, 0.0
    %v322 = vmax.f32 %v258, 0.0
    %v323 = vmax.f32 %v259, 0.0
    %v324 = vmax.f32 %v260, 0.0
    %v325 = vmax.f32 %v261, 0.0
    %v326 = vmax.f32 %v262, 0.0
    %v327 = vmax.f32 %v263, 0.0
    %v328 = vmax.f32 %v264, 0.0
    %v329 = vmax.f32 %v265, 0.0
    %v330 = vmax.f32 %v266, 0.0
    %v331 = vmax.f32 %v267, 0.0
    %v332 = vmax.f32 %v268, 0.0
    %v333 = vmax.f32 %v269, 0.0
    %v334 = vmax.f32 %v270, 0.0
    %v335 = vmax.f32 %v271, 0.0
    %v336 = vmax.f32 %v272, 0.0
    %v337 = vmax.f32 %v273, 0.0
    %v338 = vmax.f32 %v274, 0.0
    %v339 = vmax.f32 %v275, 0.0
    %v340 = vmax.f32 %v276, 0.0
    %v341 = vmax.f32 %v277, 0.0
    %v342 = vmax.f32 %v278, 0.0
    %v343 = vmax.f32 %v279, 0.0
    %v344 = vmax.f32 %v280, 0.0
    %v345 = vmax.f32 %v281, 0.0
    %v346 = vmax.f32 %v282, 0.0
    %v347 = vmax.f32 %v283, 0.0
    %v348 = vmax.f32 %v284, 0.0
    %v349 = vmax.f32 %v285, 0.0
    %v350 = vmax.f32 %v286, 0.0
    %v351 = vmax.f32 %v287, 0.0
    %v352 = vmax.f32 %v288, 0.0
    %v353 = vmax.f32 %v289, 0.0
    %v354 = vmax.f32 %v290, 0.0
    %v355 = vmax.f32 %v291, 0.0
    %v356 = vmax.f32 %v292, 0.0
    %v357 = vmax.f32 %v293, 0.0
    %v358 = vmax.f32 %v294, 0.0
    %v359 = vmax.f32 %v295, 0.0
    %v360 = vmax.f32 %v296, 0.0
    %v361 = vmax.f32 %v297, 0.0
    %v362 = vmax.f32 %v298, 0.0
    %vm363 = vcmask 523264
    %364 = vst.msk [vmem:[#allocation2] sm:$0xff] %vm363, %v299
    %365 = vst.msk [vmem:[#allocation2 + $0x8] sm:$0xff] %vm363, %v300
    %366 = vst.msk [vmem:[#allocation2 + $0x10] sm:$0xff] %vm363, %v301
    %367 = vst.msk [vmem:[#allocation2 + $0x18] sm:$0xff] %vm363, %v302
    %368 = vst.msk [vmem:[#allocation2 + $0x20] sm:$0xff] %vm363, %v303
    %369 = vst.msk [vmem:[#allocation2 + $0x28] sm:$0xff] %vm363, %v304
    %370 = vst.msk [vmem:[#allocation2 + $0x30] sm:$0xff] %vm363, %v305
    %371 = vst.msk [vmem:[#allocation2 + $0x38] sm:$0xff] %vm363, %v306
    %372 = vst.msk [vmem:[#allocation2 + $0x40] sm:$0xff] %vm363, %v307
    %373 = vst.msk [vmem:[#allocation2 + $0x48] sm:$0xff] %vm363, %v308
    %374 = vst.msk [vmem:[#allocation2 + $0x50] sm:$0xff] %vm363, %v309
    %375 = vst.msk [vmem:[#allocation2 + $0x58] sm:$0xff] %vm363, %v310
    %376 = vst.msk [vmem:[#allocation2 + $0x60] sm:$0xff] %vm363, %v311
    %377 = vst.msk [vmem:[#allocation2 + $0x68] sm:$0xff] %vm363, %v312
    %378 = vst.msk [vmem:[#allocation2 + $0x70] sm:$0xff] %vm363, %v313
    %379 = vst.msk [vmem:[#allocation2 + $0x78] sm:$0xff] %vm363, %v314
    %380 = vst.msk [vmem:[#allocation2 + $0x80] sm:$0xff] %vm363, %v315
    %381 = vst.msk [vmem:[#allocation2 + $0x88] sm:$0xff] %vm363, %v316
    %382 = vst.msk [vmem:[#allocation2 + $0x90] sm:$0xff] %vm363, %v317
    %383 = vst.msk [vmem:[#allocation2 + $0x98] sm:$0xff] %vm363, %v318
    %384 = vst.msk [vmem:[#allocation2 + $0xa0] sm:$0xff] %vm363, %v319
    %385 = vst.msk [vmem:[#allocation2 + $0xa8] sm:$0xff] %vm363, %v320
    %386 = vst.msk [vmem:[#allocation2 + $0xb0] sm:$0xff] %vm363, %v321
    %387 = vst.msk [vmem:[#allocation2 + $0xb8] sm:$0xff] %vm363, %v322
    %388 = vst.msk [vmem:[#allocation2 + $0xc0] sm:$0xff] %vm363, %v323
    %389 = vst.msk [vmem:[#allocation2 + $0xc8] sm:$0xff] %vm363, %v324
    %390 = vst.msk [vmem:[#allocation2 + $0xd0] sm:$0xff] %vm363, %v325
    %391 = vst.msk [vmem:[#allocation2 + $0xd8] sm:$0xff] %vm363, %v326
    %392 = vst.msk [vmem:[#allocation2 + $0xe0] sm:$0xff] %vm363, %v327
    %393 = vst.msk [vmem:[#allocation2 + $0xe8] sm:$0xff] %vm363, %v328
    %394 = vst.msk [vmem:[#allocation2 + $0xf0] sm:$0xff] %vm363, %v329
    %395 = vst.msk [vmem:[#allocation2 + $0xf8] sm:$0xff] %vm363, %v330
    %396 = vst.msk [vmem:[#allocation2 + $0x100] sm:$0xff] %vm363, %v331
    %397 = vst.msk [vmem:[#allocation2 + $0x108] sm:$0xff] %vm363, %v332
    %398 = vst.msk [vmem:[#allocation2 + $0x110] sm:$0xff] %vm363, %v333
    %399 = vst.msk [vmem:[#allocation2 + $0x118] sm:$0xff] %vm363, %v334
    %400 = vst.msk [vmem:[#allocation2 + $0x120] sm:$0xff] %vm363, %v335
    %401 = vst.msk [vmem:[#allocation2 + $0x128] sm:$0xff] %vm363, %v336
    %402 = vst.msk [vmem:[#allocation2 + $0x130] sm:$0xff] %vm363, %v337
    %403 = vst.msk [vmem:[#allocation2 + $0x138] sm:$0xff] %vm363, %v338
    %404 = vst.msk [vmem:[#allocation2 + $0x140] sm:$0xff] %vm363, %v339
    %405 = vst.msk [vmem:[#allocation2 + $0x148] sm:$0xff] %vm363, %v340
    %406 = vst.msk [vmem:[#allocation2 + $0x150] sm:$0xff] %vm363, %v341
    %407 = vst.msk [vmem:[#allocation2 + $0x158] sm:$0xff] %vm363, %v342
    %408 = vst.msk [vmem:[#allocation2 + $0x160] sm:$0xff] %vm363, %v343
    %409 = vst.msk [vmem:[#allocation2 + $0x168] sm:$0xff] %vm363, %v344
    %410 = vst.msk [vmem:[#allocation2 + $0x170] sm:$0xff] %vm363, %v345
    %411 = vst.msk [vmem:[#allocation2 + $0x178] sm:$0xff] %vm363, %v346
    %412 = vst.msk [vmem:[#allocation2 + $0x180] sm:$0xff] %vm363, %v347
    %413 = vst.msk [vmem:[#allocation2 + $0x188] sm:$0xff] %vm363, %v348
    %414 = vst.msk [vmem:[#allocation2 + $0x190] sm:$0xff] %vm363, %v349
    %415 = vst.msk [vmem:[#allocation2 + $0x198] sm:$0xff] %vm363, %v350
    %416 = vst.msk [vmem:[#allocation2 + $0x1a0] sm:$0xff] %vm363, %v351
    %417 = vst.msk [vmem:[#allocation2 + $0x1a8] sm:$0xff] %vm363, %v352
    %418 = vst.msk [vmem:[#allocation2 + $0x1b0] sm:$0xff] %vm363, %v353
    %419 = vst.msk [vmem:[#allocation2 + $0x1b8] sm:$0xff] %vm363, %v354
    %420 = vst.msk [vmem:[#allocation2 + $0x1c0] sm:$0xff] %vm363, %v355
    %421 = vst.msk [vmem:[#allocation2 + $0x1c8] sm:$0xff] %vm363, %v356
    %422 = vst.msk [vmem:[#allocation2 + $0x1d0] sm:$0xff] %vm363, %v357
    %423 = vst.msk [vmem:[#allocation2 + $0x1d8] sm:$0xff] %vm363, %v358
    %424 = vst.msk [vmem:[#allocation2 + $0x1e0] sm:$0xff] %vm363, %v359
    %425 = vst.msk [vmem:[#allocation2 + $0x1e8] sm:$0xff] %vm363, %v360
    %426 = vst.msk [vmem:[#allocation2 + $0x1f0] sm:$0xff] %vm363, %v361
    %427 = vst.msk [vmem:[#allocation2 + $0x1f8] sm:$0xff] %vm363, %v362
    // Predicated region
    $region18: #{decoder_block_forward.5} parent=1 // pred_check
      _
    $region19: #{decoder_block_forward.5} parent=1 // pred_check_branch
      %429 = sbr.rel (0) target = $region21
    $region20: #{decoder_block_forward.5} parent=1 // pred_region
      %s431 = ssub.s32 8192, 8192
      %432 = vsyncadd [#allocation3], %s431
      %s433 = sshll.u32 [#allocation2], 4
      %s434 = int_to_ptr.vmem [resolvable:$true] %s433
      %439 = dma.vmem_to_hbm [thread:$0]  %s434, 8192, %s4, [#allocation3], 128, 128, 8
    $region21: #{decoder_block_forward.5} parent=1 // pred_fallthru
      _
    // Predicated region
    $region22: #{decoder_block_forward.5} parent=1 // pred_check
      _
    $region23: #{decoder_block_forward.5} parent=1 // pred_check_branch
      %441 = sbr.rel (0) target = $region25
    $region24: #{decoder_block_forward.5} parent=1 // pred_region
      %442 = dma.done [#allocation3], 8192
    $region25: #{decoder_block_forward.5} parent=1 // pred_fallthru
      _
    %443 = vsyncpa [#allocation3], 1

// kernel: decoder_block_forward.4
$region0: #{decoder_block_forward.4}
  #allocation0 [shape = 'u32[]', space=smem, size = 0x4, offset = 0x4, fixed_abs, tag = 'smem constant byte address 0x4 - core index']
  #allocation1 [shape = 'u32[144,128]{1,0:T(1,128)}', space=vmem, size = 0x12000, scoped, tag = 'internal scratch']
  %s0 = inlined_call_operand.vmem [shape: bf16[2,18,18,64], index: 0, kind: input, shape index: {}]
  %s1 = inlined_call_operand.vmem [shape: bf16[3,3,64,64], index: 1, kind: input, shape index: {}]
  %s2 = inlined_call_operand.vmem [shape: f32[1,64], index: 2, kind: input, shape index: {}]
  %s3 = inlined_call_operand.vmem [shape: bf16[2,16,16,64], index: 3, kind: output, shape index: {0}]
  %s4 = inlined_call_operand.vmem [shape: f32[2,64], index: 4, kind: output, shape index: {1}]
  %5 = xla_tuple %s3, %s4
  %s6 = sld [smem:[#allocation0]]
  $region57: #{decoder_block_forward.4} parent=0
    _
  %s8 = ssub.s32 1, %s6
  %s9 = scalar_select 0, %s8, %s6
  loop: start=0, step=1, limit=4
  $region2: #{decoder_block_forward.4} parent=0 // loop_pre_header
    _
  $region3: #{decoder_block_forward.4} parent=0 // loop_header
    %s11 = sphi 0, %s15
    %p12 = scmp.ge.s32.totalorder %s11, 4
    %s18 = sphi 0, %s30
    %s19 = sphi 0, %s26
    %s20 = sphi 0, %s18
    %s21 = sphi 0, %s19
    %s22 = sphi 0, %s20
    %s23 = sphi 0, %s21
    %s33 = sphi 0, %s35
    %s36 = sphi 0, %s33
    %s37 = sphi 0, %s36
    %s53 = sphi 0, %s37
    %s59 = sphi 0, %s61
    %s62 = sphi 0, %s59
    %s63 = sphi 0, %s62
    %s79 = sphi 0, %s63
    %s85 = sphi 0, %s87
    %s88 = sphi 0, %s85
    %s89 = sphi 0, %s88
    %s105 = sphi 0, %s89
    %s113 = sphi 0, %s115
    %s116 = sphi 0, %s113
    %s117 = sphi 0, %s116
    %s133 = sphi 0, %s117
    %s139 = sphi 0, %s141
    %s142 = sphi 0, %s139
    %s143 = sphi 0, %s142
    %s159 = sphi 0, %s143
  $region4: #{decoder_block_forward.4} parent=0 // loop_header_branch
    %14 = sbr.rel (%p12) target = $region8
  $region5: #{decoder_block_forward.4} parent=0 // loop_body
    %s16 = ssub.s32 %s11, 1
    %s17 = ssub.s32 %s11, 2
    %s24 = sadd.s32 1, %s19
    %p25 = scmp.ge.s32.totalorder %s24, 2
    %s26 = scalar_select %p25, 0, %s24
    %s27 = sadd.s32 1, %s18
    %s28 = scalar_select %p25, %s27, %s18
    %p29 = scmp.ge.s32.totalorder %s28, 1
    %s30 = scalar_select %p29, 0, %s28
    %s31 = ssub.s32 %s19, %s26
    %p32 = scmp.eq.s32.totalorder %s31, 0
    %s34 = sadd.s32 %s33, 1
    %s35 = scalar_select %p32, %s33, %s34
    %p38 = pneg %p32
    %p39 = scmp.eq.s32.totalorder %s11, 1
    %p40 = por %p38, %p39
    %p41 = scmp.ne.s32.totalorder %s33, %s36
    %p42 = scmp.eq.s32.totalorder %s11, 0
    %p43 = por %p41, %p42
    %p44 = scmp.ne.s32.totalorder %s33, %s36
    %p45 = scmp.eq.s32.totalorder %s16, 1
    %p46 = por %p44, %p45
    %p47 = scmp.ne.s32.totalorder %s36, %s37
    %p48 = scmp.eq.s32.totalorder %s16, 0
    %p49 = por %p47, %p48
    %p50 = scmp.ne.s32.totalorder %s36, %s37
    %p51 = scmp.eq.s32.totalorder %s17, 1
    %p52 = por %p50, %p51
    %p54 = scmp.ne.s32.totalorder %s37, %s53
    %p55 = scmp.eq.s32.totalorder %s17, 0
    %p56 = por %p54, %p55
    %s57 = ssub.s32 %s18, %s30
    %p58 = scmp.eq.s32.totalorder %s57, 0
    %s60 = sadd.s32 %s59, 1
    %s61 = scalar_select %p58, %s59, %s60
    %p64 = pneg %p58
    %p65 = scmp.eq.s32.totalorder %s11, 1
    %p66 = por %p64, %p65
    %p67 = scmp.ne.s32.totalorder %s59, %s62
    %p68 = scmp.eq.s32.totalorder %s11, 0
    %p69 = por %p67, %p68
    %p70 = scmp.ne.s32.totalorder %s59, %s62
    %p71 = scmp.eq.s32.totalorder %s16, 1
    %p72 = por %p70, %p71
    %p73 = scmp.ne.s32.totalorder %s62, %s63
    %p74 = scmp.eq.s32.totalorder %s16, 0
    %p75 = por %p73, %p74
    %p76 = scmp.ne.s32.totalorder %s62, %s63
    %p77 = scmp.eq.s32.totalorder %s17, 1
    %p78 = por %p76, %p77
    %p80 = scmp.ne.s32.totalorder %s63, %s79
    %p81 = scmp.eq.s32.totalorder %s17, 0
    %p82 = por %p80, %p81
    %s83 = ssub.s32 %s18, %s30
    %p84 = scmp.eq.s32.totalorder %s83, 0
    %s86 = sadd.s32 %s85, 1
    %s87 = scalar_select %p84, %s85, %s86
    %p90 = pneg %p84
    %p91 = scmp.eq.s32.totalorder %s11, 1
    %p92 = por %p90, %p91
    %p93 = scmp.ne.s32.totalorder %s85, %s88
    %p94 = scmp.eq.s32.totalorder %s11, 0
    %p95 = por %p93, %p94
    %p96 = scmp.ne.s32.totalorder %s85, %s88
    %p97 = scmp.eq.s32.totalorder %s16, 1
    %p98 = por %p96, %p97
    %p99 = scmp.ne.s32.totalorder %s88, %s89
    %p100 = scmp.eq.s32.totalorder %s16, 0
    %p101 = por %p99, %p100
    %p102 = scmp.ne.s32.totalorder %s88, %s89
    %p103 = scmp.eq.s32.totalorder %s17, 1
    %p104 = por %p102, %p103
    %p106 = scmp.ne.s32.totalorder %s89, %s105
    %p107 = scmp.eq.s32.totalorder %s17, 0
    %p108 = por %p106, %p107
    %s109 = ssub.s32 %s19, %s26
    %s110 = ssub.s32 %s18, %s30
    %s111 = sor.u32 %s109, %s110
    %p112 = scmp.eq.s32.totalorder %s111, 0
    %s114 = sadd.s32 %s113, 1
    %s115 = scalar_select %p112, %s113, %s114
    %p118 = pneg %p112
    %p119 = scmp.eq.s32.totalorder %s11, 1
    %p120 = por %p118, %p119
    %p121 = scmp.ne.s32.totalorder %s113, %s116
    %p122 = scmp.eq.s32.totalorder %s11, 0
    %p123 = por %p121, %p122
    %p124 = scmp.ne.s32.totalorder %s113, %s116
    %p125 = scmp.eq.s32.totalorder %s16, 1
    %p126 = por %p124, %p125
    %p127 = scmp.ne.s32.totalorder %s116, %s117
    %p128 = scmp.eq.s32.totalorder %s16, 0
    %p129 = por %p127, %p128
    %p130 = scmp.ne.s32.totalorder %s116, %s117
    %p131 = scmp.eq.s32.totalorder %s17, 1
    %p132 = por %p130, %p131
    %p134 = scmp.ne.s32.totalorder %s117, %s133
    %p135 = scmp.eq.s32.totalorder %s17, 0
    %p136 = por %p134, %p135
    %s137 = ssub.s32 %s18, %s30
    %p138 = scmp.eq.s32.totalorder %s137, 0
    %s140 = sadd.s32 %s139, 1
    %s141 = scalar_select %p138, %s139, %s140
    %p144 = pneg %p138
    %p145 = scmp.eq.s32.totalorder %s11, 1
    %p146 = por %p144, %p145
    %p147 = scmp.ne.s32.totalorder %s139, %s142
    %p148 = scmp.eq.s32.totalorder %s11, 0
    %p149 = por %p147, %p148
    %p150 = scmp.ne.s32.totalorder %s139, %s142
    %p151 = scmp.eq.s32.totalorder %s16, 1
    %p152 = por %p150, %p151
    %p153 = scmp.ne.s32.totalorder %s142, %s143
    %p154 = scmp.eq.s32.totalorder %s16, 0
    %p155 = por %p153, %p154
    %p156 = scmp.ne.s32.totalorder %s142, %s143
    %p157 = scmp.eq.s32.totalorder %s17, 1
    %p158 = por %p156, %p157
    %p160 = scmp.ne.s32.totalorder %s143, %s159
    %p161 = scmp.eq.s32.totalorder %s17, 0
    %p162 = por %p160, %p161
    %p163 = scmp.le.s32.totalorder 1, %s11
    %p164 = scmp.lt.s32.totalorder %s11, 3
    %p165 = pnand %p163, %p164
    %p166 = pneg %p165
    // Predicated region
    $region9: #{decoder_block_forward.4} parent=5 // pred_check
      _
    $region10: #{decoder_block_forward.4} parent=5 // pred_check_branch
      %168 = sbr.rel (%p165) target = $region12
    $region11: #{decoder_block_forward.4} parent=5 // pred_region
      %s169 = ssub.s32 %s11, 1
      // Predicated region
      $region13: #{decoder_block_forward.4} parent=11 // pred_check
        %p170 = pneg %p75
      $region14: #{decoder_block_forward.4} parent=11 // pred_check_branch
        %172 = sbr.rel (%p170) target = $region16
      $region15: #{decoder_block_forward.4} parent=11 // pred_region
        %p173 = scmp.lt.s32.totalorder %s20, 0
        %s174 = scalar_select %p173, %s20, 0
        %s175 = smul.addr %s174, 4
        %s176 = scalar_lea.vmem %s1, %s175
      $region16: #{decoder_block_forward.4} parent=11 // pred_fallthru
        _
      // Predicated region
      $region17: #{decoder_block_forward.4} parent=11 // pred_check
        %p177 = pneg %p101
      $region18: #{decoder_block_forward.4} parent=11 // pred_check_branch
        %179 = sbr.rel (%p177) target = $region20
      $region19: #{decoder_block_forward.4} parent=11 // pred_region
        %p180 = scmp.lt.s32.totalorder %s20, 0
        %s181 = scalar_select %p180, %s20, 0
        %s182 = scalar_lea.vmem %s2, %s181
      $region20: #{decoder_block_forward.4} parent=11 // pred_fallthru
        _
    $region12: #{decoder_block_forward.4} parent=5 // pred_fallthru
      _
    %p183 = scmp.lt.s32.totalorder %s11, 2
    // Predicated region
    $region21: #{decoder_block_forward.4} parent=5 // pred_check
      %p184 = pneg %p183
    $region22: #{decoder_block_forward.4} parent=5 // pred_check_branch
      %186 = sbr.rel (%p184) target = $region24
    $region23: #{decoder_block_forward.4} parent=5 // pred_region
      // Predicated region
      $region25: #{decoder_block_forward.4} parent=23 // pred_check
        %p187 = pneg %p43
      $region26: #{decoder_block_forward.4} parent=23 // pred_check_branch
        %189 = sbr.rel (%p187) target = $region28
      $region27: #{decoder_block_forward.4} parent=23 // pred_region
        %p190 = scmp.lt.s32.totalorder %s19, 1
        %s191 = scalar_select %p190, %s19, 1
        %s192 = smul.addr %s191, 54
        %s193 = smul.addr %s192, 4
        %s194 = scalar_lea.vmem %s0, %s193
      $region28: #{decoder_block_forward.4} parent=23 // pred_fallthru
        _
    $region24: #{decoder_block_forward.4} parent=5 // pred_fallthru
      _
    %p195 = scmp.le.s32.totalorder 1, %s11
    %p196 = scmp.lt.s32.totalorder %s11, 3
    %p197 = pnand %p195, %p196
    %p198 = pneg %p197
    // Predicated region
    $region29: #{decoder_block_forward.4} parent=5 // pred_check
      _
    $region30: #{decoder_block_forward.4} parent=5 // pred_check_branch
      %200 = sbr.rel (%p197) target = $region32
    $region31: #{decoder_block_forward.4} parent=5 // pred_region
      %s201 = ssub.s32 %s11, 1
      %p202 = scmp.lt.s32.totalorder %s21, 1
      %s203 = scalar_select %p202, %s21, 1
      %s204 = smul.addr %s203, 54
      %s205 = smul.addr %s204, 4
      %s206 = scalar_lea.vmem %s0, %s205
      %p207 = pneg %p49
      %p208 = pneg %p46
      %p209 = scmp.lt.s32.totalorder %s20, 0
      %s210 = scalar_select %p209, %s20, 0
      %s211 = smul.addr %s210, 4
      %s212 = scalar_lea.vmem %s1, %s211
      %p213 = pneg %p75
      %p214 = pneg %p72
      %p215 = scmp.lt.s32.totalorder %s20, 0
      %s216 = scalar_select %p215, %s20, 0
      %s217 = scalar_lea.vmem %s2, %s216
      %p218 = pneg %p101
      %p219 = pneg %p98
      %p220 = pneg %p129
      %p221 = pneg %p126
      %p222 = scmp.lt.s32.totalorder %s21, 1
      %s223 = scalar_select %p222, %s21, 1
      %p224 = scmp.lt.s32.totalorder %s20, 0
      %s225 = scalar_select %p224, %s20, 0
      %s226 = smul.addr %s223, 32
      %s227 = sadd.s32 %s225, %s226
      %s228 = smul.addr %s227, 4
      %s229 = scalar_lea.vmem %s3, %s228
      %p230 = pneg %p155
      %p231 = pneg %p152
      %p232 = scmp.lt.s32.totalorder %s20, 0
      %s233 = scalar_select %p232, %s20, 0
      %s234 = smul.addr %s233, 2
      %s235 = scalar_lea.vmem %s4, %s234
      %p236 = scmp.lt.s32.totalorder %s21, 1
      %s237 = scalar_select %p236, %s21, 1
      %s238 = smul.addr %s237, 54
      %s239 = smul.addr %s238, 4
      %s240 = scalar_lea.vmem %s0, %s239
      %p241 = scmp.lt.s32.totalorder %s20, 0
      %s242 = scalar_select %p241, %s20, 0
      %s243 = smul.addr %s242, 4
      %s244 = scalar_lea.vmem %s1, %s243
      %p245 = scmp.lt.s32.totalorder %s20, 0
      %s246 = scalar_select %p245, %s20, 0
      %s247 = scalar_lea.vmem %s2, %s246
      %p248 = scmp.lt.s32.totalorder %s21, 1
      %s249 = scalar_select %p248, %s21, 1
      %p250 = scmp.lt.s32.totalorder %s20, 0
      %s251 = scalar_select %p250, %s20, 0
      %s252 = smul.addr %s249, 32
      %s253 = sadd.s32 %s251, %s252
      %s254 = smul.addr %s253, 4
      %s255 = scalar_lea.vmem %s3, %s254
      %p256 = scmp.lt.s32.totalorder %s20, 0
      %s257 = scalar_select %p256, %s20, 0
      %s258 = smul.addr %s257, 2
      %s259 = scalar_lea.vmem %s4, %s258
      %v261 = vld [vmem:[%s240] sm:$0xf]
      %v262 = vld [vmem:[%s240 + $0x4] sm:$0xf]
      %v263 = vld [vmem:[%s240 + $0x8] sm:$0x1]
      %v264 = vld [vmem:[%s240 + $0xc] sm:$0xf]
      %v265 = vld [vmem:[%s240 + $0x10] sm:$0xf]
      %v266 = vld [vmem:[%s240 + $0x14] sm:$0x1]
      %v267 = vld [vmem:[%s240 + $0x18] sm:$0xf]
      %v268 = vld [vmem:[%s240 + $0x1c] sm:$0xf]
      %v269 = vld [vmem:[%s240 + $0x20] sm:$0x1]
      %v270 = vld [vmem:[%s240 + $0x24] sm:$0xf]
      %v271 = vld [vmem:[%s240 + $0x28] sm:$0xf]
      %v272 = vld [vmem:[%s240 + $0x2c] sm:$0x1]
      %v273 = vld [vmem:[%s240 + $0x30] sm:$0xf]
      %v274 = vld [vmem:[%s240 + $0x34] sm:$0xf]
      %v275 = vld [vmem:[%s240 + $0x38] sm:$0x1]
      %v276 = vld [vmem:[%s240 + $0x3c] sm:$0xf]
      %v277 = vld [vmem:[%s240 + $0x40] sm:$0xf]
      %v278 = vld [vmem:[%s240 + $0x44] sm:$0x1]
      %v279 = vld [vmem:[%s240 + $0x48] sm:$0xf]
      %v280 = vld [vmem:[%s240 + $0x4c] sm:$0xf]
      %v281 = vld [vmem:[%s240 + $0x50] sm:$0x1]
      %v282 = vld [vmem:[%s240 + $0x54] sm:$0xf]
      %v283 = vld [vmem:[%s240 + $0x58] sm:$0xf]
      %v284 = vld [vmem:[%s240 + $0x5c] sm:$0x1]
      %v285 = vld [vmem:[%s240 + $0x60] sm:$0xf]
      %v286 = vld [vmem:[%s240 + $0x64] sm:$0xf]
      %v287 = vld [vmem:[%s240 + $0x68] sm:$0x1]
      %v288 = vld [vmem:[%s240 + $0x6c] sm:$0xf]
      %v289 = vld [vmem:[%s240 + $0x70] sm:$0xf]
      %v290 = vld [vmem:[%s240 + $0x74] sm:$0x1]
      %v291 = vld [vmem:[%s240 + $0x78] sm:$0xf]
      %v292 = vld [vmem:[%s240 + $0x7c] sm:$0xf]
      %v293 = vld [vmem:[%s240 + $0x80] sm:$0x1]
      %v294 = vld [vmem:[%s240 + $0x84] sm:$0xf]
      %v295 = vld [vmem:[%s240 + $0x88] sm:$0xf]
      %v296 = vld [vmem:[%s240 + $0x8c] sm:$0x1]
      %v297 = vld [vmem:[%s240 + $0x90] sm:$0xf]
      %v298 = vld [vmem:[%s240 + $0x94] sm:$0xf]
      %v299 = vld [vmem:[%s240 + $0x98] sm:$0x1]
      %v300 = vld [vmem:[%s240 + $0x9c] sm:$0xf]
      %v301 = vld [vmem:[%s240 + $0xa0] sm:$0xf]
      %v302 = vld [vmem:[%s240 + $0xa4] sm:$0x1]
      %v303 = vld [vmem:[%s240 + $0xa8] sm:$0xf]
      %v304 = vld [vmem:[%s240 + $0xac] sm:$0xf]
      %v305 = vld [vmem:[%s240 + $0xb0] sm:$0x1]
      %v306 = vld [vmem:[%s240 + $0xb4] sm:$0xf]
      %v307 = vld [vmem:[%s240 + $0xb8] sm:$0xf]
      %v308 = vld [vmem:[%s240 + $0xbc] sm:$0x1]
      %v309 = vld [vmem:[%s240 + $0xc0] sm:$0xf]
      %v310 = vld [vmem:[%s240 + $0xc4] sm:$0xf]
      %v311 = vld [vmem:[%s240 + $0xc8] sm:$0x1]
      %v312 = vld [vmem:[%s240 + $0xcc] sm:$0xf]
      %v313 = vld [vmem:[%s240 + $0xd0] sm:$0xf]
      %v314 = vld [vmem:[%s240 + $0xd4] sm:$0x1]
      %v315 = vld [vmem:[%s244] sm:$0xf]
      %v316 = vld [vmem:[%s244 + $0x4] sm:$0xf]
      %v317 = vld [vmem:[%s244 + $0x8] sm:$0xf]
      %v318 = vld [vmem:[%s244 + $0xc] sm:$0xf]
      %v319 = vld [vmem:[%s244 + $0x10] sm:$0xf]
      %v320 = vld [vmem:[%s244 + $0x14] sm:$0xf]
      %v321 = vld [vmem:[%s244 + $0x18] sm:$0xf]
      %v322 = vld [vmem:[%s244 + $0x1c] sm:$0xf]
      %vm323 = vsmask.f32 3328
      %vm324 = vsmask.f32 7440
      %vm325 = vmor %vm323, %vm324
      %v327 = vshrl.u32 %v261, 16
      %v329 = vrot.slane %v327, 4
      %v330 = vshll.u32 %v261, 16
      %v332 = vrot.slane %v330, 5
      %v333 = vor.u32 %v329, %v332
      %v334 = vrot.slane %v333, 4
      %v336 = vshll.u32 %v262, 16
      %v338 = vrot.slane %v336, 5
      %v339 = vsel %vm325, %v334, %v338
      %v340 = vshrl.u32 %v262, 16
      %v342 = vrot.slane %v340, 4
      %v343 = vor.u32 %v342, %v338
      %v344 = vrot.slane %v343, 4
      %v346 = vshll.u32 %v263, 16
      %v348 = vrot.slane %v346, 5
      %v349 = vsel %vm325, %v344, %v348
      %v351 = vshrl.u32 %v264, 16
      %v353 = vrot.slane %v351, 4
      %v354 = vshll.u32 %v264, 16
      %v356 = vrot.slane %v354, 5
      %v357 = vor.u32 %v353, %v356
      %v358 = vrot.slane %v357, 4
      %v360 = vshll.u32 %v265, 16
      %v362 = vrot.slane %v360, 5
      %v363 = vsel %vm325, %v358, %v362
      %v364 = vshrl.u32 %v265, 16
      %v366 = vrot.slane %v364, 4
      %v367 = vor.u32 %v366, %v362
      %v368 = vrot.slane %v367, 4
      %v370 = vshll.u32 %v266, 16
      %v372 = vrot.slane %v370, 5
      %v373 = vsel %vm325, %v368, %v372
      %v375 = vshrl.u32 %v267, 16
      %v377 = vrot.slane %v375, 4
      %v378 = vshll.u32 %v267, 16
      %v380 = vrot.slane %v378, 5
      %v381 = vor.u32 %v377, %v380
      %v382 = vrot.slane %v381, 4
      %v384 = vshll.u32 %v268, 16
      %v386 = vrot.slane %v384, 5
      %v387 = vsel %vm325, %v382, %v386
      %v388 = vshrl.u32 %v268, 16
      %v390 = vrot.slane %v388, 4
      %v391 = vor.u32 %v390, %v386
      %v392 = vrot.slane %v391, 4
      %v394 = vshll.u32 %v269, 16
      %v396 = vrot.slane %v394, 5
      %v397 = vsel %vm325, %v392, %v396
      %v399 = vshrl.u32 %v270, 16
      %v401 = vrot.slane %v399, 4
      %v402 = vshll.u32 %v270, 16
      %v404 = vrot.slane %v402, 5
      %v405 = vor.u32 %v401, %v404
      %v406 = vrot.slane %v405, 4
      %v408 = vshll.u32 %v271, 16
      %v410 = vrot.slane %v408, 5
      %v411 = vsel %vm325, %v406, %v410
      %v412 = vshrl.u32 %v271, 16
      %v414 = vrot.slane %v412, 4
      %v415 = vor.u32 %v414, %v410
      %v416 = vrot.slane %v415, 4
      %v418 = vshll.u32 %v272, 16
      %v420 = vrot.slane %v418, 5
      %v421 = vsel %vm325, %v416, %v420
      %v423 = vshrl.u32 %v273, 16
      %v425 = vrot.slane %v423, 4
      %v426 = vshll.u32 %v273, 16
      %v428 = vrot.slane %v426, 5
      %v429 = vor.u32 %v425, %v428
      %v430 = vrot.slane %v429, 4
      %v432 = vshll.u32 %v274, 16
      %v434 = vrot.slane %v432, 5
      %v435 = vsel %vm325, %v430, %v434
      %v436 = vshrl.u32 %v274, 16
      %v438 = vrot.slane %v436, 4
      %v439 = vor.u32 %v438, %v434
      %v440 = vrot.slane %v439, 4
      %v442 = vshll.u32 %v275, 16
      %v444 = vrot.slane %v442, 5
      %v445 = vsel %vm325, %v440, %v444
      %v447 = vshrl.u32 %v276, 16
      %v449 = vrot.slane %v447, 4
      %v450 = vshll.u32 %v276, 16
      %v452 = vrot.slane %v450, 5
      %v453 = vor.u32 %v449, %v452
      %v454 = vrot.slane %v453, 4
      %v456 = vshll.u32 %v277, 16
      %v458 = vrot.slane %v456, 5
      %v459 = vsel %vm325, %v454, %v458
      %v460 = vshrl.u32 %v277, 16
      %v462 = vrot.slane %v460, 4
      %v463 = vor.u32 %v462, %v458
      %v464 = vrot.slane %v463, 4
      %v466 = vshll.u32 %v278, 16
      %v468 = vrot.slane %v466, 5
      %v469 = vsel %vm325, %v464, %v468
      %v471 = vshrl.u32 %v279, 16
      %v473 = vrot.slane %v471, 4
      %v474 = vshll.u32 %v279, 16
      %v476 = vrot.slane %v474, 5
      %v477 = vor.u32 %v473, %v476
      %v478 = vrot.slane %v477, 4
      %v480 = vshll.u32 %v280, 16
      %v482 = vrot.slane %v480, 5
      %v483 = vsel %vm325, %v478, %v482
      %v484 = vshrl.u32 %v280, 16
      %v486 = vrot.slane %v484, 4
      %v487 = vor.u32 %v486, %v482
      %v488 = vrot.slane %v487, 4
      %v490 = vshll.u32 %v281, 16
      %v492 = vrot.slane %v490, 5
      %v493 = vsel %vm325, %v488, %v492
      %v495 = vshrl.u32 %v282, 16
      %v497 = vrot.slane %v495, 4
      %v498 = vshll.u32 %v282, 16
      %v500 = vrot.slane %v498, 5
      %v501 = vor.u32 %v497, %v500
      %v502 = vrot.slane %v501, 4
      %v504 = vshll.u32 %v283, 16
      %v506 = vrot.slane %v504, 5
      %v507 = vsel %vm325, %v502, %v506
      %v508 = vshrl.u32 %v283, 16
      %v510 = vrot.slane %v508, 4
      %v511 = vor.u32 %v510, %v506
      %v512 = vrot.slane %v511, 4
      %v514 = vshll.u32 %v284, 16
      %v516 = vrot.slane %v514, 5
      %v517 = vsel %vm325, %v512, %v516
      %v519 = vshrl.u32 %v285, 16
      %v521 = vrot.slane %v519, 4
      %v522 = vshll.u32 %v285, 16
      %v524 = vrot.slane %v522, 5
      %v525 = vor.u32 %v521, %v524
      %v526 = vrot.slane %v525, 4
      %v528 = vshll.u32 %v286, 16
      %v530 = vrot.slane %v528, 5
      %v531 = vsel %vm325, %v526, %v530
      %v532 = vshrl.u32 %v286, 16
      %v534 = vrot.slane %v532, 4
      %v535 = vor.u32 %v534, %v530
      %v536 = vrot.slane %v535, 4
      %v538 = vshll.u32 %v287, 16
      %v540 = vrot.slane %v538, 5
      %v541 = vsel %vm325, %v536, %v540
      %v543 = vshrl.u32 %v288, 16
      %v545 = vrot.slane %v543, 4
      %v546 = vshll.u32 %v288, 16
      %v548 = vrot.slane %v546, 5
      %v549 = vor.u32 %v545, %v548
      %v550 = vrot.slane %v549, 4
      %v552 = vshll.u32 %v289, 16
      %v554 = vrot.slane %v552, 5
      %v555 = vsel %vm325, %v550, %v554
      %v556 = vshrl.u32 %v289, 16
      %v558 = vrot.slane %v556, 4
      %v559 = vor.u32 %v558, %v554
      %v560 = vrot.slane %v559, 4
      %v562 = vshll.u32 %v290, 16
      %v564 = vrot.slane %v562, 5
      %v565 = vsel %vm325, %v560, %v564
      %v567 = vshrl.u32 %v291, 16
      %v569 = vrot.slane %v567, 4
      %v570 = vshll.u32 %v291, 16
      %v572 = vrot.slane %v570, 5
      %v573 = vor.u32 %v569, %v572
      %v574 = vrot.slane %v573, 4
      %v576 = vshll.u32 %v292, 16
      %v578 = vrot.slane %v576, 5
      %v579 = vsel %vm325, %v574, %v578
      %v580 = vshrl.u32 %v292, 16
      %v582 = vrot.slane %v580, 4
      %v583 = vor.u32 %v582, %v578
      %v584 = vrot.slane %v583, 4
      %v586 = vshll.u32 %v293, 16
      %v588 = vrot.slane %v586, 5
      %v589 = vsel %vm325, %v584, %v588
      %v591 = vshrl.u32 %v294, 16
      %v593 = vrot.slane %v591, 4
      %v594 = vshll.u32 %v294, 16
      %v596 = vrot.slane %v594, 5
      %v597 = vor.u32 %v593, %v596
      %v598 = vrot.slane %v597, 4
      %v600 = vshll.u32 %v295, 16
      %v602 = vrot.slane %v600, 5
      %v603 = vsel %vm325, %v598, %v602
      %v604 = vshrl.u32 %v295, 16
      %v606 = vrot.slane %v604, 4
      %v607 = vor.u32 %v606, %v602
      %v608 = vrot.slane %v607, 4
      %v610 = vshll.u32 %v296, 16
      %v612 = vrot.slane %v610, 5
      %v613 = vsel %vm325, %v608, %v612
      %v615 = vshrl.u32 %v297, 16
      %v617 = vrot.slane %v615, 4
      %v618 = vshll.u32 %v297, 16
      %v620 = vrot.slane %v618, 5
      %v621 = vor.u32 %v617, %v620
      %v622 = vrot.slane %v621, 4
      %v624 = vshll.u32 %v298, 16
      %v626 = vrot.slane %v624, 5
      %v627 = vsel %vm325, %v622, %v626
      %v628 = vshrl.u32 %v298, 16
      %v630 = vrot.slane %v628, 4
      %v631 = vor.u32 %v630, %v626
      %v632 = vrot.slane %v631, 4
      %v634 = vshll.u32 %v299, 16
      %v636 = vrot.slane %v634, 5
      %v637 = vsel %vm325, %v632, %v636
      %v639 = vshrl.u32 %v300, 16
      %v641 = vrot.slane %v639, 4
      %v642 = vshll.u32 %v300, 16
      %v644 = vrot.slane %v642, 5
      %v645 = vor.u32 %v641, %v644
      %v646 = vrot.slane %v645, 4
      %v648 = vshll.u32 %v301, 16
      %v650 = vrot.slane %v648, 5
      %v651 = vsel %vm325, %v646, %v650
      %v652 = vshrl.u32 %v301, 16
      %v654 = vrot.slane %v652, 4
      %v655 = vor.u32 %v654, %v650
      %v656 = vrot.slane %v655, 4
      %v658 = vshll.u32 %v302, 16
      %v660 = vrot.slane %v658, 5
      %v661 = vsel %vm325, %v656, %v660
      %v663 = vshrl.u32 %v303, 16
      %v665 = vrot.slane %v663, 4
      %v666 = vshll.u32 %v303, 16
      %v668 = vrot.slane %v666, 5
      %v669 = vor.u32 %v665, %v668
      %v670 = vrot.slane %v669, 4
      %v672 = vshll.u32 %v304, 16
      %v674 = vrot.slane %v672, 5
      %v675 = vsel %vm325, %v670, %v674
      %v676 = vshrl.u32 %v304, 16
      %v678 = vrot.slane %v676, 4
      %v679 = vor.u32 %v678, %v674
      %v680 = vrot.slane %v679, 4
      %v682 = vshll.u32 %v305, 16
      %v684 = vrot.slane %v682, 5
      %v685 = vsel %vm325, %v680, %v684
      %v687 = vshrl.u32 %v306, 16
      %v689 = vrot.slane %v687, 4
      %v690 = vshll.u32 %v306, 16
      %v692 = vrot.slane %v690, 5
      %v693 = vor.u32 %v689, %v692
      %v694 = vrot.slane %v693, 4
      %v696 = vshll.u32 %v307, 16
      %v698 = vrot.slane %v696, 5
      %v699 = vsel %vm325, %v694, %v698
      %v700 = vshrl.u32 %v307, 16
      %v702 = vrot.slane %v700, 4
      %v703 = vor.u32 %v702, %v698
      %v704 = vrot.slane %v703, 4
      %v706 = vshll.u32 %v308, 16
      %v708 = vrot.slane %v706, 5
      %v709 = vsel %vm325, %v704, %v708
      %s710 = scalar_lea.vmem %s244, 32
      %v711 = vld [vmem:[%s710] sm:$0xf]
      %v712 = vld [vmem:[%s710 + $0x4] sm:$0xf]
      %v713 = vld [vmem:[%s710 + $0x8] sm:$0xf]
      %v714 = vld [vmem:[%s710 + $0xc] sm:$0xf]
      %v715 = vld [vmem:[%s710 + $0x10] sm:$0xf]
      %v716 = vld [vmem:[%s710 + $0x14] sm:$0xf]
      %v717 = vld [vmem:[%s710 + $0x18] sm:$0xf]
      %v718 = vld [vmem:[%s710 + $0x1c] sm:$0xf]
      %v719 = vunpack.c.l.b16 %v339
      %v720 = vunpack.c.l.b16 %v349
      %v721 = vunpack.c.l.b16 %v363
      %v722 = vunpack.c.l.b16 %v373
      %v723 = vunpack.c.l.b16 %v387
      %v724 = vunpack.c.l.b16 %v397
      %v725 = vunpack.c.l.b16 %v411
      %v726 = vunpack.c.l.b16 %v421
      %v727 = vunpack.c.l.b16 %v435
      %v728 = vunpack.c.l.b16 %v445
      %v729 = vunpack.c.l.b16 %v459
      %v730 = vunpack.c.l.b16 %v469
      %v731 = vunpack.c.l.b16 %v483
      %v732 = vunpack.c.l.b16 %v493
      %v733 = vunpack.c.l.b16 %v507
      %v734 = vunpack.c.l.b16 %v517
      %v735 = vunpack.c.l.b16 %v531
      %v736 = vunpack.c.l.b16 %v541
      %v737 = vunpack.c.l.b16 %v555
      %v738 = vunpack.c.l.b16 %v565
      %v739 = vunpack.c.l.b16 %v579
      %v740 = vunpack.c.l.b16 %v589
      %v741 = vunpack.c.l.b16 %v603
      %v742 = vunpack.c.l.b16 %v613
      %v743 = vunpack.c.l.b16 %v627
      %v744 = vunpack.c.l.b16 %v637
      %v745 = vunpack.c.l.b16 %v651
      %v746 = vunpack.c.l.b16 %v661
      %v747 = vunpack.c.l.b16 %v675
      %v748 = vunpack.c.l.b16 %v685
      %v749 = vunpack.c.l.b16 %v699
      %v750 = vunpack.c.l.b16 %v709
      %v751 = vpack.c.b16 %v720, %v719
      %v752 = vpack.c.b16 %v722, %v721
      %v753 = vpack.c.b16 %v724, %v723
      %v754 = vpack.c.b16 %v726, %v725
      %v755 = vpack.c.b16 %v728, %v727
      %v756 = vpack.c.b16 %v730, %v729
      %v757 = vpack.c.b16 %v732, %v731
      %v758 = vpack.c.b16 %v734, %v733
      %v759 = vpack.c.b16 %v736, %v735
      %v760 = vpack.c.b16 %v738, %v737
      %v761 = vpack.c.b16 %v740, %v739
      %v762 = vpack.c.b16 %v742, %v741
      %v763 = vpack.c.b16 %v744, %v743
      %v764 = vpack.c.b16 %v746, %v745
      %v765 = vpack.c.b16 %v748, %v747
      %v766 = vpack.c.b16 %v750, %v749
      %v775 = vunpack.c.l.b16 %v711
      %v776 = vunpack.c.l.b16 %v712
      %v777 = vunpack.c.l.b16 %v713
      %v778 = vunpack.c.l.b16 %v714
      %v779 = vunpack.c.l.b16 %v715
      %v780 = vunpack.c.l.b16 %v716
      %v781 = vunpack.c.l.b16 %v717
      %v782 = vunpack.c.l.b16 %v718
      %v783 = vpack.c.b16 %v776, %v775
      %v784 = vpack.c.b16 %v778, %v777
      %v785 = vpack.c.b16 %v780, %v779
      %v786 = vpack.c.b16 %v782, %v781
      %vm791 = vcmask 523264
      %v793 = vsel %vm791, %v751, 0
      %v796 = vsel %vm791, %v752, 0
      %v799 = vsel %vm791, %v753, 0
      %v802 = vsel %vm791, %v754, 0
      %v805 = vsel %vm791, %v755, 0
      %v808 = vsel %vm791, %v756, 0
      %v811 = vsel %vm791, %v757, 0
      %v814 = vsel %vm791, %v758, 0
      %v817 = vsel %vm791, %v759, 0
      %v820 = vsel %vm791, %v760, 0
      %v823 = vsel %vm791, %v761, 0
      %v826 = vsel %vm791, %v762, 0
      %v829 = vsel %vm791, %v763, 0
      %v832 = vsel %vm791, %v764, 0
      %v835 = vsel %vm791, %v765, 0
      %v838 = vsel %vm791, %v766, 0
      %840 = vmatprep.subr.bf16.mxu0 0
      %841 = vmatpush1.bf16.msra.mxu0 %v783
      %842 = vmatprep.subr.bf16.mxu0 0
      %843 = vmatpush1.bf16.msra.mxu0 %v784
      %844 = vmatprep.subr.bf16.mxu0 0
      %845 = vmatpush1.bf16.msra.mxu0 %v785
      %846 = vmatprep.subr.bf16.mxu0 0
      %847 = vmatpush1.bf16.msra.mxu0 %v786
      %848 = vmatprep.subr.bf16.mxu0 0
      %849 = vmatpush1.bf16.msra.mxu0 0
      %850 = vmatprep.subr.bf16.mxu0 0
      %851 = vmatpush1.bf16.msra.mxu0 0
      %852 = vmatprep.subr.bf16.mxu0 0
      %853 = vmatpush1.bf16.msra.mxu0 0
      %854 = vmatprep.subr.bf16.mxu0 0
      %855 = vmatpush1.bf16.msra.mxu0 0
      %856 = vmatprep.subr.bf16.mxu0 0
      %857 = vmatpush1.bf16.msra.mxu0 0
      %858 = vmatprep.subr.bf16.mxu0 0
      %859 = vmatpush1.bf16.msra.mxu0 0
      %860 = vmatprep.subr.bf16.mxu0 0
      %861 = vmatpush1.bf16.msra.mxu0 0
      %862 = vmatprep.subr.bf16.mxu0 0
      %863 = vmatpush1.bf16.msra.mxu0 0
      %864 = vmatprep.subr.bf16.mxu0 0
      %865 = vmatpush1.bf16.msra.mxu0 0
      %866 = vmatprep.subr.bf16.mxu0 0
      %867 = vmatpush1.bf16.msra.mxu0 0
      %868 = vmatprep.subr.bf16.mxu0 0
      %869 = vmatpush1.bf16.msra.mxu0 0
      %870 = vmatprep.subr.bf16.mxu0 0
      %871 = vmatpush1.bf16.msra.mxu0 0
      %872 = vmatprep.mubr.bf16.mxu0 0
      %873 = vmatmul.mubr.bf16.gmra.mrb[0].mxu0 %v793
      %v874 = vpop.f32.mrb[0].mxu0
      %v875 = vadd.f32 0.0, %v874
      %v876 = vpop.f32.mrb[0].mxu0
      %v877 = vpop.f32.mrb[0].mxu0
      %v878 = vadd.f32 0.0, %v877
      %v879 = vpop.f32.mrb[0].mxu0
      %880 = vmatprep.mubr.bf16.mxu0 0
      %881 = vmatmul.mubr.bf16.gmra.mrb[0].mxu0 %v796
      %v882 = vpop.f32.mrb[0].mxu0
      %v883 = vadd.f32 0.0, %v882
      %v884 = vpop.f32.mrb[0].mxu0
      %v885 = vpop.f32.mrb[0].mxu0
      %v886 = vadd.f32 0.0, %v885
      %v887 = vpop.f32.mrb[0].mxu0
      %888 = vmatprep.mubr.bf16.mxu0 0
      %889 = vmatmul.mubr.bf16.gmra.mrb[0].mxu0 %v799
      %v890 = vpop.f32.mrb[0].mxu0
      %v891 = vadd.f32 0.0, %v890
      %v892 = vpop.f32.mrb[0].mxu0
      %v893 = vpop.f32.mrb[0].mxu0
      %v894 = vadd.f32 0.0, %v893
      %v895 = vpop.f32.mrb[0].mxu0
      %896 = vmatprep.mubr.bf16.mxu0 0
      %897 = vmatmul.mubr.bf16.gmra.mrb[0].mxu0 %v802
      %v898 = vpop.f32.mrb[0].mxu0
      %v899 = vadd.f32 0.0, %v898
      %v900 = vpop.f32.mrb[0].mxu0
      %v901 = vpop.f32.mrb[0].mxu0
      %v902 = vadd.f32 0.0, %v901
      %v903 = vpop.f32.mrb[0].mxu0
      %904 = vmatprep.mubr.bf16.mxu0 0
      %905 = vmatmul.mubr.bf16.gmra.mrb[0].mxu0 %v805
      %v906 = vpop.f32.mrb[0].mxu0
      %v907 = vadd.f32 0.0, %v906
      %v908 = vpop.f32.mrb[0].mxu0
      %v909 = vpop.f32.mrb[0].mxu0
      %v910 = vadd.f32 0.0, %v909
      %v911 = vpop.f32.mrb[0].mxu0
      %912 = vmatprep.mubr.bf16.mxu0 0
      %913 = vmatmul.mubr.bf16.gmra.mrb[0].mxu0 %v808
      %v914 = vpop.f32.mrb[0].mxu0
      %v915 = vadd.f32 0.0, %v914
      %v916 = vpop.f32.mrb[0].mxu0
      %v917 = vpop.f32.mrb[0].mxu0
      %v918 = vadd.f32 0.0, %v917
      %v919 = vpop.f32.mrb[0].mxu0
      %920 = vmatprep.mubr.bf16.mxu0 0
      %921 = vmatmul.mubr.bf16.gmra.mrb[0].mxu0 %v811
      %v922 = vpop.f32.mrb[0].mxu0
      %v923 = vadd.f32 0.0, %v922
      %v924 = vpop.f32.mrb[0].mxu0
      %v925 = vpop.f32.mrb[0].mxu0
      %v926 = vadd.f32 0.0, %v925
      %v927 = vpop.f32.mrb[0].mxu0
      %928 = vmatprep.mubr.bf16.mxu0 0
      %929 = vmatmul.mubr.bf16.gmra.mrb[0].mxu0 %v814
      %v930 = vpop.f32.mrb[0].mxu0
      %v931 = vadd.f32 0.0, %v930
      %v932 = vpop.f32.mrb[0].mxu0
      %v933 = vpop.f32.mrb[0].mxu0
      %v934 = vadd.f32 0.0, %v933
      %v935 = vpop.f32.mrb[0].mxu0
      %936 = vmatprep.mubr.bf16.mxu0 0
      %937 = vmatmul.mubr.bf16.gmra.mrb[0].mxu0 %v817
      %v938 = vpop.f32.mrb[0].mxu0
      %v939 = vadd.f32 0.0, %v938
      %v940 = vpop.f32.mrb[0].mxu0
      %v941 = vpop.f32.mrb[0].mxu0
      %v942 = vadd.f32 0.0, %v941
      %v943 = vpop.f32.mrb[0].mxu0
      %944 = vmatprep.mubr.bf16.mxu0 0
      %945 = vmatmul.mubr.bf16.gmra.mrb[0].mxu0 %v820
      %v946 = vpop.f32.mrb[0].mxu0
      %v947 = vadd.f32 0.0, %v946
      %v948 = vpop.f32.mrb[0].mxu0
      %v949 = vpop.f32.mrb[0].mxu0
      %v950 = vadd.f32 0.0, %v949
      %v951 = vpop.f32.mrb[0].mxu0
      %952 = vmatprep.mubr.bf16.mxu0 0
      %953 = vmatmul.mubr.bf16.gmra.mrb[0].mxu0 %v823
      %v954 = vpop.f32.mrb[0].mxu0
      %v955 = vadd.f32 0.0, %v954
      %v956 = vpop.f32.mrb[0].mxu0
      %v957 = vpop.f32.mrb[0].mxu0
      %v958 = vadd.f32 0.0, %v957
      %v959 = vpop.f32.mrb[0].mxu0
      %960 = vmatprep.mubr.bf16.mxu0 0
      %961 = vmatmul.mubr.bf16.gmra.mrb[0].mxu0 %v826
      %v962 = vpop.f32.mrb[0].mxu0
      %v963 = vadd.f32 0.0, %v962
      %v964 = vpop.f32.mrb[0].mxu0
      %v965 = vpop.f32.mrb[0].mxu0
      %v966 = vadd.f32 0.0, %v965
      %v967 = vpop.f32.mrb[0].mxu0
      %968 = vmatprep.mubr.bf16.mxu0 0
      %969 = vmatmul.mubr.bf16.gmra.mrb[0].mxu0 %v829
      %v970 = vpop.f32.mrb[0].mxu0
      %v971 = vadd.f32 0.0, %v970
      %v972 = vpop.f32.mrb[0].mxu0
      %v973 = vpop.f32.mrb[0].mxu0
      %v974 = vadd.f32 0.0, %v973
      %v975 = vpop.f32.mrb[0].mxu0
      %976 = vmatprep.mubr.bf16.mxu0 0
      %977 = vmatmul.mubr.bf16.gmra.mrb[0].mxu0 %v832
      %v978 = vpop.f32.mrb[0].mxu0
      %v979 = vadd.f32 0.0, %v978
      %v980 = vpop.f32.mrb[0].mxu0
      %v981 = vpop.f32.mrb[0].mxu0
      %v982 = vadd.f32 0.0, %v981
      %v983 = vpop.f32.mrb[0].mxu0
      %984 = vmatprep.mubr.bf16.mxu0 0
      %985 = vmatmul.mubr.bf16.gmra.mrb[0].mxu0 %v835
      %v986 = vpop.f32.mrb[0].mxu0
      %v987 = vadd.f32 0.0, %v986
      %v988 = vpop.f32.mrb[0].mxu0
      %v989 = vpop.f32.mrb[0].mxu0
      %v990 = vadd.f32 0.0, %v989
      %v991 = vpop.f32.mrb[0].mxu0
      %992 = vmatprep.mubr.bf16.mxu0 0
      %993 = vmatmul.mubr.bf16.gmra.mrb[0].mxu0 %v838
      %v994 = vpop.f32.mrb[0].mxu0
      %v995 = vadd.f32 0.0, %v994
      %v996 = vpop.f32.mrb[0].mxu0
      %v997 = vpop.f32.mrb[0].mxu0
      %v998 = vadd.f32 0.0, %v997
      %v999 = vpop.f32.mrb[0].mxu0
      %1000 = vdwg.mxu0
      %v1033 = vunpack.c.l.b16 %v261
      %v1034 = vunpack.c.l.b16 %v262
      %v1035 = vunpack.c.l.b16 %v264
      %v1036 = vunpack.c.l.b16 %v265
      %v1037 = vunpack.c.l.b16 %v267
      %v1038 = vunpack.c.l.b16 %v268
      %v1039 = vunpack.c.l.b16 %v270
      %v1040 = vunpack.c.l.b16 %v271
      %v1041 = vunpack.c.l.b16 %v273
      %v1042 = vunpack.c.l.b16 %v274
      %v1043 = vunpack.c.l.b16 %v276
      %v1044 = vunpack.c.l.b16 %v277
      %v1045 = vunpack.c.l.b16 %v279
      %v1046 = vunpack.c.l.b16 %v280
      %v1047 = vunpack.c.l.b16 %v282
      %v1048 = vunpack.c.l.b16 %v283
      %v1049 = vunpack.c.l.b16 %v285
      %v1050 = vunpack.c.l.b16 %v286
      %v1051 = vunpack.c.l.b16 %v288
      %v1052 = vunpack.c.l.b16 %v289
      %v1053 = vunpack.c.l.b16 %v291
      %v1054 = vunpack.c.l.b16 %v292
      %v1055 = vunpack.c.l.b16 %v294
      %v1056 = vunpack.c.l.b16 %v295
      %v1057 = vunpack.c.l.b16 %v297
      %v1058 = vunpack.c.l.b16 %v298
      %v1059 = vunpack.c.l.b16 %v300
      %v1060 = vunpack.c.l.b16 %v301
      %v1061 = vunpack.c.l.b16 %v303
      %v1062 = vunpack.c.l.b16 %v304
      %v1063 = vunpack.c.l.b16 %v306
      %v1064 = vunpack.c.l.b16 %v307
      %v1065 = vpack.c.b16 %v1034, %v1033
      %v1066 = vpack.c.b16 %v1036, %v1035
      %v1067 = vpack.c.b16 %v1038, %v1037
      %v1068 = vpack.c.b16 %v1040, %v1039
      %v1069 = vpack.c.b16 %v1042, %v1041
      %v1070 = vpack.c.b16 %v1044, %v1043
      %v1071 = vpack.c.b16 %v1046, %v1045
      %v1072 = vpack.c.b16 %v1048, %v1047
      %v1073 = vpack.c.b16 %v1050, %v1049
      %v1074 = vpack.c.b16 %v1052, %v1051
      %v1075 = vpack.c.b16 %v1054, %v1053
      %v1076 = vpack.c.b16 %v1056, %v1055
      %v1077 = vpack.c.b16 %v1058, %v1057
      %v1078 = vpack.c.b16 %v1060, %v1059
      %v1079 = vpack.c.b16 %v1062, %v1061
      %v1080 = vpack.c.b16 %v1064, %v1063
      %v1089 = vunpack.c.l.b16 %v315
      %v1090 = vunpack.c.l.b16 %v316
      %v1091 = vunpack.c.l.b16 %v317
      %v1092 = vunpack.c.l.b16 %v318
      %v1093 = vunpack.c.l.b16 %v319
      %v1094 = vunpack.c.l.b16 %v320
      %v1095 = vunpack.c.l.b16 %v321
      %v1096 = vunpack.c.l.b16 %v322
      %v1097 = vpack.c.b16 %v1090, %v1089
      %v1098 = vpack.c.b16 %v1092, %v1091
      %v1099 = vpack.c.b16 %v1094, %v1093
      %v1100 = vpack.c.b16 %v1096, %v1095
      %v1106 = vsel %vm791, %v1065, 0
      %v1109 = vsel %vm791, %v1066, 0
      %v1112 = vsel %vm791, %v1067, 0
      %v1115 = vsel %vm791, %v1068, 0
      %v1118 = vsel %vm791, %v1069, 0
      %v1121 = vsel %vm791, %v1070, 0
      %v1124 = vsel %vm791, %v1071, 0
      %v1127 = vsel %vm791, %v1072, 0
      %v1130 = vsel %vm791, %v1073, 0
      %v1133 = vsel %vm791, %v1074, 0
      %v1136 = vsel %vm791, %v1075, 0
      %v1139 = vsel %vm791, %v1076, 0
      %v1142 = vsel %vm791, %v1077, 0
      %v1145 = vsel %vm791, %v1078, 0
      %v1148 = vsel %vm791, %v1079, 0
      %v1151 = vsel %vm791, %v1080, 0
      %1153 = vmatprep.subr.bf16.mxu0 0
      %1154 = vmatpush1.bf16.msra.mxu0 %v1097
      %1155 = vmatprep.subr.bf16.mxu0 0
      %1156 = vmatpush1.bf16.msra.mxu0 %v1098
      %1157 = vmatprep.subr.bf16.mxu0 0
      %1158 = vmatpush1.bf16.msra.mxu0 %v1099
      %1159 = vmatprep.subr.bf16.mxu0 0
      %1160 = vmatpush1.bf16.msra.mxu0 %v1100
      %1161 = vmatprep.subr.bf16.mxu0 0
      %1162 = vmatpush1.bf16.msra.mxu0 0
      %1163 = vmatprep.subr.bf16.mxu0 0
      %1164 = vmatpush1.bf16.msra.mxu0 0
      %1165 = vmatprep.subr.bf16.mxu0 0
      %1166 = vmatpush1.bf16.msra.mxu0 0
      %1167 = vmatprep.subr.bf16.mxu0 0
      %1168 = vmatpush1.bf16.msra.mxu0 0
      %1169 = vmatprep.subr.bf16.mxu0 0
      %1170 = vmatpush1.bf16.msra.mxu0 0
      %1171 = vmatprep.subr.bf16.mxu0 0
      %1172 = vmatpush1.bf16.msra.mxu0 0
      %1173 = vmatprep.subr.bf16.mxu0 0
      %1174 = vmatpush1.bf16.msra.mxu0 0
      %1175 = vmatprep.subr.bf16.mxu0 0
      %1176 = vmatpush1.bf16.msra.mxu0 0
      %1177 = vmatprep.subr.bf16.mxu0 0
      %1178 = vmatpush1.bf16.msra.mxu0 0
      %1179 = vmatprep.subr.bf16.mxu0 0
      %1180 = vmatpush1.bf16.msra.mxu0 0
      %1181 = vmatprep.subr.bf16.mxu0 0
      %1182 = vmatpush1.bf16.msra.mxu0 0
      %1183 = vmatprep.subr.bf16.mxu0 0
      %1184 = vmatpush1.bf16.msra.mxu0 0
      %1185 = vmatprep.mubr.bf16.mxu0 0
      %1186 = vmatmul.mubr.bf16.gmra.mrb[0].mxu0 %v1106
      %v1187 = vpop.f32.mrb[0].mxu0
      %v1188 = vadd.f32 %v875, %v1187
      %v1189 = vpop.f32.mrb[0].mxu0
      %v1190 = vpop.f32.mrb[0].mxu0
      %v1191 = vadd.f32 %v878, %v1190
      %v1192 = vpop.f32.mrb[0].mxu0
      %1193 = vmatprep.mubr.bf16.mxu0 0
      %1194 = vmatmul.mubr.bf16.gmra.mrb[0].mxu0 %v1109
      %v1195 = vpop.f32.mrb[0].mxu0
      %v1196 = vadd.f32 %v883, %v1195
      %v1197 = vpop.f32.mrb[0].mxu0
      %v1198 = vpop.f32.mrb[0].mxu0
      %v1199 = vadd.f32 %v886, %v1198
      %v1200 = vpop.f32.mrb[0].mxu0
      %1201 = vmatprep.mubr.bf16.mxu0 0
      %1202 = vmatmul.mubr.bf16.gmra.mrb[0].mxu0 %v1112
      %v1203 = vpop.f32.mrb[0].mxu0
      %v1204 = vadd.f32 %v891, %v1203
      %v1205 = vpop.f32.mrb[0].mxu0
      %v1206 = vpop.f32.mrb[0].mxu0
      %v1207 = vadd.f32 %v894, %v1206
      %v1208 = vpop.f32.mrb[0].mxu0
      %1209 = vmatprep.mubr.bf16.mxu0 0
      %1210 = vmatmul.mubr.bf16.gmra.mrb[0].mxu0 %v1115
      %v1211 = vpop.f32.mrb[0].mxu0
      %v1212 = vadd.f32 %v899, %v1211
      %v1213 = vpop.f32.mrb[0].mxu0
      %v1214 = vpop.f32.mrb[0].mxu0
      %v1215 = vadd.f32 %v902, %v1214
      %v1216 = vpop.f32.mrb[0].mxu0
      %1217 = vmatprep.mubr.bf16.mxu0 0
      %1218 = vmatmul.mubr.bf16.gmra.mrb[0].mxu0 %v1118
      %v1219 = vpop.f32.mrb[0].mxu0
      %v1220 = vadd.f32 %v907, %v1219
      %v1221 = vpop.f32.mrb[0].mxu0
      %v1222 = vpop.f32.mrb[0].mxu0
      %v1223 = vadd.f32 %v910, %v1222
      %v1224 = vpop.f32.mrb[0].mxu0
      %1225 = vmatprep.mubr.bf16.mxu0 0
      %1226 = vmatmul.mubr.bf16.gmra.mrb[0].mxu0 %v1121
      %v1227 = vpop.f32.mrb[0].mxu0
      %v1228 = vadd.f32 %v915, %v1227
      %v1229 = vpop.f32.mrb[0].mxu0
      %v1230 = vpop.f32.mrb[0].mxu0
      %v1231 = vadd.f32 %v918, %v1230
      %v1232 = vpop.f32.mrb[0].mxu0
      %1233 = vmatprep.mubr.bf16.mxu0 0
      %1234 = vmatmul.mubr.bf16.gmra.mrb[0].mxu0 %v1124
      %v1235 = vpop.f32.mrb[0].mxu0
      %v1236 = vadd.f32 %v923, %v1235
      %v1237 = vpop.f32.mrb[0].mxu0
      %v1238 = vpop.f32.mrb[0].mxu0
      %v1239 = vadd.f32 %v926, %v1238
      %v1240 = vpop.f32.mrb[0].mxu0
      %1241 = vmatprep.mubr.bf16.mxu0 0
      %1242 = vmatmul.mubr.bf16.gmra.mrb[0].mxu0 %v1127
      %v1243 = vpop.f32.mrb[0].mxu0
      %v1244 = vadd.f32 %v931, %v1243
      %v1245 = vpop.f32.mrb[0].mxu0
      %v1246 = vpop.f32.mrb[0].mxu0
      %v1247 = vadd.f32 %v934, %v1246
      %v1248 = vpop.f32.mrb[0].mxu0
      %1249 = vmatprep.mubr.bf16.mxu0 0
      %1250 = vmatmul.mubr.bf16.gmra.mrb[0].mxu0 %v1130
      %v1251 = vpop.f32.mrb[0].mxu0
      %v1252 = vadd.f32 %v939, %v1251
      %v1253 = vpop.f32.mrb[0].mxu0
      %v1254 = vpop.f32.mrb[0].mxu0
      %v1255 = vadd.f32 %v942, %v1254
      %v1256 = vpop.f32.mrb[0].mxu0
      %1257 = vmatprep.mubr.bf16.mxu0 0
      %1258 = vmatmul.mubr.bf16.gmra.mrb[0].mxu0 %v1133
      %v1259 = vpop.f32.mrb[0].mxu0
      %v1260 = vadd.f32 %v947, %v1259
      %v1261 = vpop.f32.mrb[0].mxu0
      %v1262 = vpop.f32.mrb[0].mxu0
      %v1263 = vadd.f32 %v950, %v1262
      %v1264 = vpop.f32.mrb[0].mxu0
      %1265 = vmatprep.mubr.bf16.mxu0 0
      %1266 = vmatmul.mubr.bf16.gmra.mrb[0].mxu0 %v1136
      %v1267 = vpop.f32.mrb[0].mxu0
      %v1268 = vadd.f32 %v955, %v1267
      %v1269 = vpop.f32.mrb[0].mxu0
      %v1270 = vpop.f32.mrb[0].mxu0
      %v1271 = vadd.f32 %v958, %v1270
      %v1272 = vpop.f32.mrb[0].mxu0
      %1273 = vmatprep.mubr.bf16.mxu0 0
      %1274 = vmatmul.mubr.bf16.gmra.mrb[0].mxu0 %v1139
      %v1275 = vpop.f32.mrb[0].mxu0
      %v1276 = vadd.f32 %v963, %v1275
      %v1277 = vpop.f32.mrb[0].mxu0
      %v1278 = vpop.f32.mrb[0].mxu0
      %v1279 = vadd.f32 %v966, %v1278
      %v1280 = vpop.f32.mrb[0].mxu0
      %1281 = vmatprep.mubr.bf16.mxu0 0
      %1282 = vmatmul.mubr.bf16.gmra.mrb[0].mxu0 %v1142
      %v1283 = vpop.f32.mrb[0].mxu0
      %v1284 = vadd.f32 %v971, %v1283
      %v1285 = vpop.f32.mrb[0].mxu0
      %v1286 = vpop.f32.mrb[0].mxu0
      %v1287 = vadd.f32 %v974, %v1286
      %v1288 = vpop.f32.mrb[0].mxu0
      %1289 = vmatprep.mubr.bf16.mxu0 0
      %1290 = vmatmul.mubr.bf16.gmra.mrb[0].mxu0 %v1145
      %v1291 = vpop.f32.mrb[0].mxu0
      %v1292 = vadd.f32 %v979, %v1291
      %v1293 = vpop.f32.mrb[0].mxu0
      %v1294 = vpop.f32.mrb[0].mxu0
      %v1295 = vadd.f32 %v982, %v1294
      %v1296 = vpop.f32.mrb[0].mxu0
      %1297 = vmatprep.mubr.bf16.mxu0 0
      %1298 = vmatmul.mubr.bf16.gmra.mrb[0].mxu0 %v1148
      %v1299 = vpop.f32.mrb[0].mxu0
      %v1300 = vadd.f32 %v987, %v1299
      %v1301 = vpop.f32.mrb[0].mxu0
      %v1302 = vpop.f32.mrb[0].mxu0
      %v1303 = vadd.f32 %v990, %v1302
      %v1304 = vpop.f32.mrb[0].mxu0
      %1305 = vmatprep.mubr.bf16.mxu0 0
      %1306 = vmatmul.mubr.bf16.gmra.mrb[0].mxu0 %v1151
      %v1307 = vpop.f32.mrb[0].mxu0
      %v1308 = vadd.f32 %v995, %v1307
      %v1309 = vpop.f32.mrb[0].mxu0
      %v1310 = vpop.f32.mrb[0].mxu0
      %v1311 = vadd.f32 %v998, %v1310
      %v1312 = vpop.f32.mrb[0].mxu0
      %1313 = vdwg.mxu0
      %vm1330 = vcmask 1042432
      %vm1331 = vcmask 1046532
      %vm1332 = vmor %vm1330, %vm1331
      %v1333 = vrot.slane %v261, 5
      %v1334 = vrot.slane %v1333, 4
      %v1335 = vrot.slane %v262, 5
      %v1336 = vsel %vm1332, %v1334, %v1335
      %v1337 = vrot.slane %v1335, 4
      %v1338 = vrot.slane %v263, 5
      %v1339 = vsel %vm1332, %v1337, %v1338
      %v1340 = vrot.slane %v264, 5
      %v1341 = vrot.slane %v1340, 4
      %v1342 = vrot.slane %v265, 5
      %v1343 = vsel %vm1332, %v1341, %v1342
      %v1344 = vrot.slane %v1342, 4
      %v1345 = vrot.slane %v266, 5
      %v1346 = vsel %vm1332, %v1344, %v1345
      %v1347 = vrot.slane %v267, 5
      %v1348 = vrot.slane %v1347, 4
      %v1349 = vrot.slane %v268, 5
      %v1350 = vsel %vm1332, %v1348, %v1349
      %v1351 = vrot.slane %v1349, 4
      %v1352 = vrot.slane %v269, 5
      %v1353 = vsel %vm1332, %v1351, %v1352
      %v1354 = vrot.slane %v270, 5
      %v1355 = vrot.slane %v1354, 4
      %v1356 = vrot.slane %v271, 5
      %v1357 = vsel %vm1332, %v1355, %v1356
      %v1358 = vrot.slane %v1356, 4
      %v1359 = vrot.slane %v272, 5
      %v1360 = vsel %vm1332, %v1358, %v1359
      %v1361 = vrot.slane %v273, 5
      %v1362 = vrot.slane %v1361, 4
      %v1363 = vrot.slane %v274, 5
      %v1364 = vsel %vm1332, %v1362, %v1363
      %v1365 = vrot.slane %v1363, 4
      %v1366 = vrot.slane %v275, 5
      %v1367 = vsel %vm1332, %v1365, %v1366
      %v1368 = vrot.slane %v276, 5
      %v1369 = vrot.slane %v1368, 4
      %v1370 = vrot.slane %v277, 5
      %v1371 = vsel %vm1332, %v1369, %v1370
      %v1372 = vrot.slane %v1370, 4
      %v1373 = vrot.slane %v278, 5
      %v1374 = vsel %vm1332, %v1372, %v1373
      %v1375 = vrot.slane %v279, 5
      %v1376 = vrot.slane %v1375, 4
      %v1377 = vrot.slane %v280, 5
      %v1378 = vsel %vm1332, %v1376, %v1377
      %v1379 = vrot.slane %v1377, 4
      %v1380 = vrot.slane %v281, 5
      %v1381 = vsel %vm1332, %v1379, %v1380
      %v1382 = vrot.slane %v282, 5
      %v1383 = vrot.slane %v1382, 4
      %v1384 = vrot.slane %v283, 5
      %v1385 = vsel %vm1332, %v1383, %v1384
      %v1386 = vrot.slane %v1384, 4
      %v1387 = vrot.slane %v284, 5
      %v1388 = vsel %vm1332, %v1386, %v1387
      %v1389 = vrot.slane %v285, 5
      %v1390 = vrot.slane %v1389, 4
      %v1391 = vrot.slane %v286, 5
      %v1392 = vsel %vm1332, %v1390, %v1391
      %v1393 = vrot.slane %v1391, 4
      %v1394 = vrot.slane %v287, 5
      %v1395 = vsel %vm1332, %v1393, %v1394
      %v1396 = vrot.slane %v288, 5
      %v1397 = vrot.slane %v1396, 4
      %v1398 = vrot.slane %v289, 5
      %v1399 = vsel %vm1332, %v1397, %v1398
      %v1400 = vrot.slane %v1398, 4
      %v1401 = vrot.slane %v290, 5
      %v1402 = vsel %vm1332, %v1400, %v1401
      %v1403 = vrot.slane %v291, 5
      %v1404 = vrot.slane %v1403, 4
      %v1405 = vrot.slane %v292, 5
      %v1406 = vsel %vm1332, %v1404, %v1405
      %v1407 = vrot.slane %v1405, 4
      %v1408 = vrot.slane %v293, 5
      %v1409 = vsel %vm1332, %v1407, %v1408
      %v1410 = vrot.slane %v294, 5
      %v1411 = vrot.slane %v1410, 4
      %v1412 = vrot.slane %v295, 5
      %v1413 = vsel %vm1332, %v1411, %v1412
      %v1414 = vrot.slane %v1412, 4
      %v1415 = vrot.slane %v296, 5
      %v1416 = vsel %vm1332, %v1414, %v1415
      %v1417 = vrot.slane %v297, 5
      %v1418 = vrot.slane %v1417, 4
      %v1419 = vrot.slane %v298, 5
      %v1420 = vsel %vm1332, %v1418, %v1419
      %v1421 = vrot.slane %v1419, 4
      %v1422 = vrot.slane %v299, 5
      %v1423 = vsel %vm1332, %v1421, %v1422
      %v1424 = vrot.slane %v300, 5
      %v1425 = vrot.slane %v1424, 4
      %v1426 = vrot.slane %v301, 5
      %v1427 = vsel %vm1332, %v1425, %v1426
      %v1428 = vrot.slane %v1426, 4
      %v1429 = vrot.slane %v302, 5
      %v1430 = vsel %vm1332, %v1428, %v1429
      %v1431 = vrot.slane %v303, 5
      %v1432 = vrot.slane %v1431, 4
      %v1433 = vrot.slane %v304, 5
      %v1434 = vsel %vm1332, %v1432, %v1433
      %v1435 = vrot.slane %v1433, 4
      %v1436 = vrot.slane %v305, 5
      %v1437 = vsel %vm1332, %v1435, %v1436
      %v1438 = vrot.slane %v306, 5
      %v1439 = vrot.slane %v1438, 4
      %v1440 = vrot.slane %v307, 5
      %v1441 = vsel %vm1332, %v1439, %v1440
      %v1442 = vrot.slane %v1440, 4
      %v1443 = vrot.slane %v308, 5
      %v1444 = vsel %vm1332, %v1442, %v1443
      %s1445 = scalar_lea.vmem %s244, 64
      %v1446 = vld [vmem:[%s1445] sm:$0xf]
      %v1447 = vld [vmem:[%s1445 + $0x4] sm:$0xf]
      %v1448 = vld [vmem:[%s1445 + $0x8] sm:$0xf]
      %v1449 = vld [vmem:[%s1445 + $0xc] sm:$0xf]
      %v1450 = vld [vmem:[%s1445 + $0x10] sm:$0xf]
      %v1451 = vld [vmem:[%s1445 + $0x14] sm:$0xf]
      %v1452 = vld [vmem:[%s1445 + $0x18] sm:$0xf]
      %v1453 = vld [vmem:[%s1445 + $0x1c] sm:$0xf]
      %v1454 = vunpack.c.l.b16 %v1336
      %v1455 = vunpack.c.l.b16 %v1339
      %v1456 = vunpack.c.l.b16 %v1343
      %v1457 = vunpack.c.l.b16 %v1346
      %v1458 = vunpack.c.l.b16 %v1350
      %v1459 = vunpack.c.l.b16 %v1353
      %v1460 = vunpack.c.l.b16 %v1357
      %v1461 = vunpack.c.l.b16 %v1360
      %v1462 = vunpack.c.l.b16 %v1364
      %v1463 = vunpack.c.l.b16 %v1367
      %v1464 = vunpack.c.l.b16 %v1371
      %v1465 = vunpack.c.l.b16 %v1374
      %v1466 = vunpack.c.l.b16 %v1378
      %v1467 = vunpack.c.l.b16 %v1381
      %v1468 = vunpack.c.l.b16 %v1385
      %v1469 = vunpack.c.l.b16 %v1388
      %v1470 = vunpack.c.l.b16 %v1392
      %v1471 = vunpack.c.l.b16 %v1395
      %v1472 = vunpack.c.l.b16 %v1399
      %v1473 = vunpack.c.l.b16 %v1402
      %v1474 = vunpack.c.l.b16 %v1406
      %v1475 = vunpack.c.l.b16 %v1409
      %v1476 = vunpack.c.l.b16 %v1413
      %v1477 = vunpack.c.l.b16 %v1416
      %v1478 = vunpack.c.l.b16 %v1420
      %v1479 = vunpack.c.l.b16 %v1423
      %v1480 = vunpack.c.l.b16 %v1427
      %v1481 = vunpack.c.l.b16 %v1430
      %v1482 = vunpack.c.l.b16 %v1434
      %v1483 = vunpack.c.l.b16 %v1437
      %v1484 = vunpack.c.l.b16 %v1441
      %v1485 = vunpack.c.l.b16 %v1444
      %v1486 = vpack.c.b16 %v1455, %v1454
      %v1487 = vpack.c.b16 %v1457, %v1456
      %v1488 = vpack.c.b16 %v1459, %v1458
      %v1489 = vpack.c.b16 %v1461, %v1460
      %v1490 = vpack.c.b16 %v1463, %v1462
      %v1491 = vpack.c.b16 %v1465, %v1464
      %v1492 = vpack.c.b16 %v1467, %v1466
      %v1493 = vpack.c.b16 %v1469, %v1468
      %v1494 = vpack.c.b16 %v1471, %v1470
      %v1495 = vpack.c.b16 %v1473, %v1472
      %v1496 = vpack.c.b16 %v1475, %v1474
      %v1497 = vpack.c.b16 %v1477, %v1476
      %v1498 = vpack.c.b16 %v1479, %v1478
      %v1499 = vpack.c.b16 %v1481, %v1480
      %v1500 = vpack.c.b16 %v1483, %v1482
      %v1501 = vpack.c.b16 %v1485, %v1484
      %v1510 = vunpack.c.l.b16 %v1446
      %v1511 = vunpack.c.l.b16 %v1447
      %v1512 = vunpack.c.l.b16 %v1448
      %v1513 = vunpack.c.l.b16 %v1449
      %v1514 = vunpack.c.l.b16 %v1450
      %v1515 = vunpack.c.l.b16 %v1451
      %v1516 = vunpack.c.l.b16 %v1452
      %v1517 = vunpack.c.l.b16 %v1453
      %v1518 = vpack.c.b16 %v1511, %v1510
      %v1519 = vpack.c.b16 %v1513, %v1512
      %v1520 = vpack.c.b16 %v1515, %v1514
      %v1521 = vpack.c.b16 %v1517, %v1516
      %v1527 = vsel %vm791, %v1486, 0
      %v1530 = vsel %vm791, %v1487, 0
      %v1533 = vsel %vm791, %v1488, 0
      %v1536 = vsel %vm791, %v1489, 0
      %v1539 = vsel %vm791, %v1490, 0
      %v1542 = vsel %vm791, %v1491, 0
      %v1545 = vsel %vm791, %v1492, 0
      %v1548 = vsel %vm791, %v1493, 0
      %v1551 = vsel %vm791, %v1494, 0
      %v1554 = vsel %vm791, %v1495, 0
      %v1557 = vsel %vm791, %v1496, 0
      %v1560 = vsel %vm791, %v1497, 0
      %v1563 = vsel %vm791, %v1498, 0
      %v1566 = vsel %vm791, %v1499, 0
      %v1569 = vsel %vm791, %v1500, 0
      %v1572 = vsel %vm791, %v1501, 0
      %1574 = vmatprep.subr.bf16.mxu0 0
      %1575 = vmatpush1.bf16.msra.mxu0 %v1518
      %1576 = vmatprep.subr.bf16.mxu0 0
      %1577 = vmatpush1.bf16.msra.mxu0 %v1519
      %1578 = vmatprep.subr.bf16.mxu0 0
      %1579 = vmatpush1.bf16.msra.mxu0 %v1520
      %1580 = vmatprep.subr.bf16.mxu0 0
      %1581 = vmatpush1.bf16.msra.mxu0 %v1521
      %1582 = vmatprep.subr.bf16.mxu0 0
      %1583 = vmatpush1.bf16.msra.mxu0 0
      %1584 = vmatprep.subr.bf16.mxu0 0
      %1585 = vmatpush1.bf16.msra.mxu0 0
      %1586 = vmatprep.subr.bf16.mxu0 0
      %1587 = vmatpush1.bf16.msra.mxu0 0
      %1588 = vmatprep.subr.bf16.mxu0 0
      %1589 = vmatpush1.bf16.msra.mxu0 0
      %1590 = vmatprep.subr.bf16.mxu0 0
      %1591 = vmatpush1.bf16.msra.mxu0 0
      %1592 = vmatprep.subr.bf16.mxu0 0
      %1593 = vmatpush1.bf16.msra.mxu0 0
      %1594 = vmatprep.subr.bf16.mxu0 0
      %1595 = vmatpush1.bf16.msra.mxu0 0
      %1596 = vmatprep.subr.bf16.mxu0 0
      %1597 = vmatpush1.bf16.msra.mxu0 0
      %1598 = vmatprep.subr.bf16.mxu0 0
      %1599 = vmatpush1.bf16.msra.mxu0 0
      %1600 = vmatprep.subr.bf16.mxu0 0
      %1601 = vmatpush1.bf16.msra.mxu0 0
      %1602 = vmatprep.subr.bf16.mxu0 0
      %1603 = vmatpush1.bf16.msra.mxu0 0
      %1604 = vmatprep.subr.bf16.mxu0 0
      %1605 = vmatpush1.bf16.msra.mxu0 0
      %1606 = vmatprep.mubr.bf16.mxu0 0
      %1607 = vmatmul.mubr.bf16.gmra.mrb[0].mxu0 %v1527
      %v1608 = vpop.f32.mrb[0].mxu0
      %v1609 = vadd.f32 0.0, %v1608
      %v1610 = vpop.f32.mrb[0].mxu0
      %v1611 = vpop.f32.mrb[0].mxu0
      %v1612 = vadd.f32 0.0, %v1611
      %v1613 = vpop.f32.mrb[0].mxu0
      %1614 = vmatprep.mubr.bf16.mxu0 0
      %1615 = vmatmul.mubr.bf16.gmra.mrb[0].mxu0 %v1530
      %v1616 = vpop.f32.mrb[0].mxu0
      %v1617 = vadd.f32 0.0, %v1616
      %v1618 = vpop.f32.mrb[0].mxu0
      %v1619 = vpop.f32.mrb[0].mxu0
      %v1620 = vadd.f32 0.0, %v1619
      %v1621 = vpop.f32.mrb[0].mxu0
      %1622 = vmatprep.mubr.bf16.mxu0 0
      %1623 = vmatmul.mubr.bf16.gmra.mrb[0].mxu0 %v1533
      %v1624 = vpop.f32.mrb[0].mxu0
      %v1625 = vadd.f32 0.0, %v1624
      %v1626 = vpop.f32.mrb[0].mxu0
      %v1627 = vpop.f32.mrb[0].mxu0
      %v1628 = vadd.f32 0.0, %v1627
      %v1629 = vpop.f32.mrb[0].mxu0
      %1630 = vmatprep.mubr.bf16.mxu0 0
      %1631 = vmatmul.mubr.bf16.gmra.mrb[0].mxu0 %v1536
      %v1632 = vpop.f32.mrb[0].mxu0
      %v1633 = vadd.f32 0.0, %v1632
      %v1634 = vpop.f32.mrb[0].mxu0
      %v1635 = vpop.f32.mrb[0].mxu0
      %v1636 = vadd.f32 0.0, %v1635
      %v1637 = vpop.f32.mrb[0].mxu0
      %1638 = vmatprep.mubr.bf16.mxu0 0
      %1639 = vmatmul.mubr.bf16.gmra.mrb[0].mxu0 %v1539
      %v1640 = vpop.f32.mrb[0].mxu0
      %v1641 = vadd.f32 0.0, %v1640
      %v1642 = vpop.f32.mrb[0].mxu0
      %v1643 = vpop.f32.mrb[0].mxu0
      %v1644 = vadd.f32 0.0, %v1643
      %v1645 = vpop.f32.mrb[0].mxu0
      %1646 = vmatprep.mubr.bf16.mxu0 0
      %1647 = vmatmul.mubr.bf16.gmra.mrb[0].mxu0 %v1542
      %v1648 = vpop.f32.mrb[0].mxu0
      %v1649 = vadd.f32 0.0, %v1648
      %v1650 = vpop.f32.mrb[0].mxu0
      %v1651 = vpop.f32.mrb[0].mxu0
      %v1652 = vadd.f32 0.0, %v1651
      %v1653 = vpop.f32.mrb[0].mxu0
      %1654 = vmatprep.mubr.bf16.mxu0 0
      %1655 = vmatmul.mubr.bf16.gmra.mrb[0].mxu0 %v1545
      %v1656 = vpop.f32.mrb[0].mxu0
      %v1657 = vadd.f32 0.0, %v1656
      %v1658 = vpop.f32.mrb[0].mxu0
      %v1659 = vpop.f32.mrb[0].mxu0
      %v1660 = vadd.f32 0.0, %v1659
      %v1661 = vpop.f32.mrb[0].mxu0
      %1662 = vmatprep.mubr.bf16.mxu0 0
      %1663 = vmatmul.mubr.bf16.gmra.mrb[0].mxu0 %v1548
      %v1664 = vpop.f32.mrb[0].mxu0
      %v1665 = vadd.f32 0.0, %v1664
      %v1666 = vpop.f32.mrb[0].mxu0
      %v1667 = vpop.f32.mrb[0].mxu0
      %v1668 = vadd.f32 0.0, %v1667
      %v1669 = vpop.f32.mrb[0].mxu0
      %1670 = vmatprep.mubr.bf16.mxu0 0
      %1671 = vmatmul.mubr.bf16.gmra.mrb[0].mxu0 %v1551
      %v1672 = vpop.f32.mrb[0].mxu0
      %v1673 = vadd.f32 0.0, %v1672
      %v1674 = vpop.f32.mrb[0].mxu0
      %v1675 = vpop.f32.mrb[0].mxu0
      %v1676 = vadd.f32 0.0, %v1675
      %v1677 = vpop.f32.mrb[0].mxu0
      %1678 = vmatprep.mubr.bf16.mxu0 0
      %1679 = vmatmul.mubr.bf16.gmra.mrb[0].mxu0 %v1554
      %v1680 = vpop.f32.mrb[0].mxu0
      %v1681 = vadd.f32 0.0, %v1680
      %v1682 = vpop.f32.mrb[0].mxu0
      %v1683 = vpop.f32.mrb[0].mxu0
      %v1684 = vadd.f32 0.0, %v1683
      %v1685 = vpop.f32.mrb[0].mxu0
      %1686 = vmatprep.mubr.bf16.mxu0 0
      %1687 = vmatmul.mubr.bf16.gmra.mrb[0].mxu0 %v1557
      %v1688 = vpop.f32.mrb[0].mxu0
      %v1689 = vadd.f32 0.0, %v1688
      %v1690 = vpop.f32.mrb[0].mxu0
      %v1691 = vpop.f32.mrb[0].mxu0
      %v1692 = vadd.f32 0.0, %v1691
      %v1693 = vpop.f32.mrb[0].mxu0
      %1694 = vmatprep.mubr.bf16.mxu0 0
      %1695 = vmatmul.mubr.bf16.gmra.mrb[0].mxu0 %v1560
      %v1696 = vpop.f32.mrb[0].mxu0
      %v1697 = vadd.f32 0.0, %v1696
      %v1698 = vpop.f32.mrb[0].mxu0
      %v1699 = vpop.f32.mrb[0].mxu0
      %v1700 = vadd.f32 0.0, %v1699
      %v1701 = vpop.f32.mrb[0].mxu0
      %1702 = vmatprep.mubr.bf16.mxu0 0
      %1703 = vmatmul.mubr.bf16.gmra.mrb[0].mxu0 %v1563
      %v1704 = vpop.f32.mrb[0].mxu0
      %v1705 = vadd.f32 0.0, %v1704
      %v1706 = vpop.f32.mrb[0].mxu0
      %v1707 = vpop.f32.mrb[0].mxu0
      %v1708 = vadd.f32 0.0, %v1707
      %v1709 = vpop.f32.mrb[0].mxu0
      %1710 = vmatprep.mubr.bf16.mxu0 0
      %1711 = vmatmul.mubr.bf16.gmra.mrb[0].mxu0 %v1566
      %v1712 = vpop.f32.mrb[0].mxu0
      %v1713 = vadd.f32 0.0, %v1712
      %v1714 = vpop.f32.mrb[0].mxu0
      %v1715 = vpop.f32.mrb[0].mxu0
      %v1716 = vadd.f32 0.0, %v1715
      %v1717 = vpop.f32.mrb[0].mxu0
      %1718 = vmatprep.mubr.bf16.mxu0 0
      %1719 = vmatmul.mubr.bf16.gmra.mrb[0].mxu0 %v1569
      %v1720 = vpop.f32.mrb[0].mxu0
      %v1721 = vadd.f32 0.0, %v1720
      %v1722 = vpop.f32.mrb[0].mxu0
      %v1723 = vpop.f32.mrb[0].mxu0
      %v1724 = vadd.f32 0.0, %v1723
      %v1725 = vpop.f32.mrb[0].mxu0
      %1726 = vmatprep.mubr.bf16.mxu0 0
      %1727 = vmatmul.mubr.bf16.gmra.mrb[0].mxu0 %v1572
      %v1728 = vpop.f32.mrb[0].mxu0
      %v1729 = vadd.f32 0.0, %v1728
      %v1730 = vpop.f32.mrb[0].mxu0
      %v1731 = vpop.f32.mrb[0].mxu0
      %v1732 = vadd.f32 0.0, %v1731
      %v1733 = vpop.f32.mrb[0].mxu0
      %1734 = vdwg.mxu0
      %v1735 = vadd.f32 %v1188, %v1609
      %v1736 = vadd.f32 %v1191, %v1612
      %v1737 = vadd.f32 %v1196, %v1617
      %v1738 = vadd.f32 %v1199, %v1620
      %v1739 = vadd.f32 %v1204, %v1625
      %v1740 = vadd.f32 %v1207, %v1628
      %v1741 = vadd.f32 %v1212, %v1633
      %v1742 = vadd.f32 %v1215, %v1636
      %v1743 = vadd.f32 %v1220, %v1641
      %v1744 = vadd.f32 %v1223, %v1644
      %v1745 = vadd.f32 %v1228, %v1649
      %v1746 = vadd.f32 %v1231, %v1652
      %v1747 = vadd.f32 %v1236, %v1657
      %v1748 = vadd.f32 %v1239, %v1660
      %v1749 = vadd.f32 %v1244, %v1665
      %v1750 = vadd.f32 %v1247, %v1668
      %v1751 = vadd.f32 %v1252, %v1673
      %v1752 = vadd.f32 %v1255, %v1676
      %v1753 = vadd.f32 %v1260, %v1681
      %v1754 = vadd.f32 %v1263, %v1684
      %v1755 = vadd.f32 %v1268, %v1689
      %v1756 = vadd.f32 %v1271, %v1692
      %v1757 = vadd.f32 %v1276, %v1697
      %v1758 = vadd.f32 %v1279, %v1700
      %v1759 = vadd.f32 %v1284, %v1705
      %v1760 = vadd.f32 %v1287, %v1708
      %v1761 = vadd.f32 %v1292, %v1713
      %v1762 = vadd.f32 %v1295, %v1716
      %v1763 = vadd.f32 %v1300, %v1721
      %v1764 = vadd.f32 %v1303, %v1724
      %v1765 = vadd.f32 %v1308, %v1729
      %v1766 = vadd.f32 %v1311, %v1732
      %s1767 = scalar_lea.vmem %s244, 96
      %v1768 = vld [vmem:[%s1767] sm:$0xf]
      %v1769 = vld [vmem:[%s1767 + $0x4] sm:$0xf]
      %v1770 = vld [vmem:[%s1767 + $0x8] sm:$0xf]
      %v1771 = vld [vmem:[%s1767 + $0xc] sm:$0xf]
      %v1772 = vld [vmem:[%s1767 + $0x10] sm:$0xf]
      %v1773 = vld [vmem:[%s1767 + $0x14] sm:$0xf]
      %v1774 = vld [vmem:[%s1767 + $0x18] sm:$0xf]
      %v1775 = vld [vmem:[%s1767 + $0x1c] sm:$0xf]
      %v1778 = vunpack.c.l.b16 %v309
      %v1779 = vunpack.c.l.b16 %v310
      %v1780 = vpack.c.b16 %v1779, %v1778
      %v1789 = vunpack.c.l.b16 %v1768
      %v1790 = vunpack.c.l.b16 %v1769
      %v1791 = vunpack.c.l.b16 %v1770
      %v1792 = vunpack.c.l.b16 %v1771
      %v1793 = vunpack.c.l.b16 %v1772
      %v1794 = vunpack.c.l.b16 %v1773
      %v1795 = vunpack.c.l.b16 %v1774
      %v1796 = vunpack.c.l.b16 %v1775
      %v1797 = vpack.c.b16 %v1790, %v1789
      %v1798 = vpack.c.b16 %v1792, %v1791
      %v1799 = vpack.c.b16 %v1794, %v1793
      %v1800 = vpack.c.b16 %v1796, %v1795
      %v1806 = vsel %vm791, %v1780, 0
      %1808 = vmatprep.subr.bf16.mxu0 0
      %1809 = vmatpush1.bf16.msra.mxu0 %v1797
      %1810 = vmatprep.subr.bf16.mxu0 0
      %1811 = vmatpush1.bf16.msra.mxu0 %v1798
      %1812 = vmatprep.subr.bf16.mxu0 0
      %1813 = vmatpush1.bf16.msra.mxu0 %v1799
      %1814 = vmatprep.subr.bf16.mxu0 0
      %1815 = vmatpush1.bf16.msra.mxu0 %v1800
      %1816 = vmatprep.subr.bf16.mxu0 0
      %1817 = vmatpush1.bf16.msra.mxu0 0
      %1818 = vmatprep.subr.bf16.mxu0 0
      %1819 = vmatpush1.bf16.msra.mxu0 0
      %1820 = vmatprep.subr.bf16.mxu0 0
      %1821 = vmatpush1.bf16.msra.mxu0 0
      %1822 = vmatprep.subr.bf16.mxu0 0
      %1823 = vmatpush1.bf16.msra.mxu0 0
      %1824 = vmatprep.subr.bf16.mxu0 0
      %1825 = vmatpush1.bf16.msra.mxu0 0
      %1826 = vmatprep.subr.bf16.mxu0 0
      %1827 = vmatpush1.bf16.msra.mxu0 0
      %1828 = vmatprep.subr.bf16.mxu0 0
      %1829 = vmatpush1.bf16.msra.mxu0 0
      %1830 = vmatprep.subr.bf16.mxu0 0
      %1831 = vmatpush1.bf16.msra.mxu0 0
      %1832 = vmatprep.subr.bf16.mxu0 0
      %1833 = vmatpush1.bf16.msra.mxu0 0
      %1834 = vmatprep.subr.bf16.mxu0 0
      %1835 = vmatpush1.bf16.msra.mxu0 0
      %1836 = vmatprep.subr.bf16.mxu0 0
      %1837 = vmatpush1.bf16.msra.mxu0 0
      %1838 = vmatprep.subr.bf16.mxu0 0
      %1839 = vmatpush1.bf16.msra.mxu0 0
      %1840 = vmatprep.mubr.bf16.mxu0 0
      %1841 = vmatmul.mubr.bf16.gmra.mrb[0].mxu0 %v1109
      %v1842 = vpop.f32.mrb[0].mxu0
      %v1843 = vadd.f32 0.0, %v1842
      %v1844 = vpop.f32.mrb[0].mxu0
      %v1845 = vpop.f32.mrb[0].mxu0
      %v1846 = vadd.f32 0.0, %v1845
      %v1847 = vpop.f32.mrb[0].mxu0
      %1848 = vmatprep.mubr.bf16.mxu0 0
      %1849 = vmatmul.mubr.bf16.gmra.mrb[0].mxu0 %v1112
      %v1850 = vpop.f32.mrb[0].mxu0
      %v1851 = vadd.f32 0.0, %v1850
      %v1852 = vpop.f32.mrb[0].mxu0
      %v1853 = vpop.f32.mrb[0].mxu0
      %v1854 = vadd.f32 0.0, %v1853
      %v1855 = vpop.f32.mrb[0].mxu0
      %1856 = vmatprep.mubr.bf16.mxu0 0
      %1857 = vmatmul.mubr.bf16.gmra.mrb[0].mxu0 %v1115
      %v1858 = vpop.f32.mrb[0].mxu0
      %v1859 = vadd.f32 0.0, %v1858
      %v1860 = vpop.f32.mrb[0].mxu0
      %v1861 = vpop.f32.mrb[0].mxu0
      %v1862 = vadd.f32 0.0, %v1861
      %v1863 = vpop.f32.mrb[0].mxu0
      %1864 = vmatprep.mubr.bf16.mxu0 0
      %1865 = vmatmul.mubr.bf16.gmra.mrb[0].mxu0 %v1118
      %v1866 = vpop.f32.mrb[0].mxu0
      %v1867 = vadd.f32 0.0, %v1866
      %v1868 = vpop.f32.mrb[0].mxu0
      %v1869 = vpop.f32.mrb[0].mxu0
      %v1870 = vadd.f32 0.0, %v1869
      %v1871 = vpop.f32.mrb[0].mxu0
      %1872 = vmatprep.mubr.bf16.mxu0 0
      %1873 = vmatmul.mubr.bf16.gmra.mrb[0].mxu0 %v1121
      %v1874 = vpop.f32.mrb[0].mxu0
      %v1875 = vadd.f32 0.0, %v1874
      %v1876 = vpop.f32.mrb[0].mxu0
      %v1877 = vpop.f32.mrb[0].mxu0
      %v1878 = vadd.f32 0.0, %v1877
      %v1879 = vpop.f32.mrb[0].mxu0
      %1880 = vmatprep.mubr.bf16.mxu0 0
      %1881 = vmatmul.mubr.bf16.gmra.mrb[0].mxu0 %v1124
      %v1882 = vpop.f32.mrb[0].mxu0
      %v1883 = vadd.f32 0.0, %v1882
      %v1884 = vpop.f32.mrb[0].mxu0
      %v1885 = vpop.f32.mrb[0].mxu0
      %v1886 = vadd.f32 0.0, %v1885
      %v1887 = vpop.f32.mrb[0].mxu0
      %1888 = vmatprep.mubr.bf16.mxu0 0
      %1889 = vmatmul.mubr.bf16.gmra.mrb[0].mxu0 %v1127
      %v1890 = vpop.f32.mrb[0].mxu0
      %v1891 = vadd.f32 0.0, %v1890
      %v1892 = vpop.f32.mrb[0].mxu0
      %v1893 = vpop.f32.mrb[0].mxu0
      %v1894 = vadd.f32 0.0, %v1893
      %v1895 = vpop.f32.mrb[0].mxu0
      %1896 = vmatprep.mubr.bf16.mxu0 0
      %1897 = vmatmul.mubr.bf16.gmra.mrb[0].mxu0 %v1130
      %v1898 = vpop.f32.mrb[0].mxu0
      %v1899 = vadd.f32 0.0, %v1898
      %v1900 = vpop.f32.mrb[0].mxu0
      %v1901 = vpop.f32.mrb[0].mxu0
      %v1902 = vadd.f32 0.0, %v1901
      %v1903 = vpop.f32.mrb[0].mxu0
      %1904 = vmatprep.mubr.bf16.mxu0 0
      %1905 = vmatmul.mubr.bf16.gmra.mrb[0].mxu0 %v1133
      %v1906 = vpop.f32.mrb[0].mxu0
      %v1907 = vadd.f32 0.0, %v1906
      %v1908 = vpop.f32.mrb[0].mxu0
      %v1909 = vpop.f32.mrb[0].mxu0
      %v1910 = vadd.f32 0.0, %v1909
      %v1911 = vpop.f32.mrb[0].mxu0
      %1912 = vmatprep.mubr.bf16.mxu0 0
      %1913 = vmatmul.mubr.bf16.gmra.mrb[0].mxu0 %v1136
      %v1914 = vpop.f32.mrb[0].mxu0
      %v1915 = vadd.f32 0.0, %v1914
      %v1916 = vpop.f32.mrb[0].mxu0
      %v1917 = vpop.f32.mrb[0].mxu0
      %v1918 = vadd.f32 0.0, %v1917
      %v1919 = vpop.f32.mrb[0].mxu0
      %1920 = vmatprep.mubr.bf16.mxu0 0
      %1921 = vmatmul.mubr.bf16.gmra.mrb[0].mxu0 %v1139
      %v1922 = vpop.f32.mrb[0].mxu0
      %v1923 = vadd.f32 0.0, %v1922
      %v1924 = vpop.f32.mrb[0].mxu0
      %v1925 = vpop.f32.mrb[0].mxu0
      %v1926 = vadd.f32 0.0, %v1925
      %v1927 = vpop.f32.mrb[0].mxu0
      %1928 = vmatprep.mubr.bf16.mxu0 0
      %1929 = vmatmul.mubr.bf16.gmra.mrb[0].mxu0 %v1142
      %v1930 = vpop.f32.mrb[0].mxu0
      %v1931 = vadd.f32 0.0, %v1930
      %v1932 = vpop.f32.mrb[0].mxu0
      %v1933 = vpop.f32.mrb[0].mxu0
      %v1934 = vadd.f32 0.0, %v1933
      %v1935 = vpop.f32.mrb[0].mxu0
      %1936 = vmatprep.mubr.bf16.mxu0 0
      %1937 = vmatmul.mubr.bf16.gmra.mrb[0].mxu0 %v1145
      %v1938 = vpop.f32.mrb[0].mxu0
      %v1939 = vadd.f32 0.0, %v1938
      %v1940 = vpop.f32.mrb[0].mxu0
      %v1941 = vpop.f32.mrb[0].mxu0
      %v1942 = vadd.f32 0.0, %v1941
      %v1943 = vpop.f32.mrb[0].mxu0
      %1944 = vmatprep.mubr.bf16.mxu0 0
      %1945 = vmatmul.mubr.bf16.gmra.mrb[0].mxu0 %v1148
      %v1946 = vpop.f32.mrb[0].mxu0
      %v1947 = vadd.f32 0.0, %v1946
      %v1948 = vpop.f32.mrb[0].mxu0
      %v1949 = vpop.f32.mrb[0].mxu0
      %v1950 = vadd.f32 0.0, %v1949
      %v1951 = vpop.f32.mrb[0].mxu0
      %1952 = vmatprep.mubr.bf16.mxu0 0
      %1953 = vmatmul.mubr.bf16.gmra.mrb[0].mxu0 %v1151
      %v1954 = vpop.f32.mrb[0].mxu0
      %v1955 = vadd.f32 0.0, %v1954
      %v1956 = vpop.f32.mrb[0].mxu0
      %v1957 = vpop.f32.mrb[0].mxu0
      %v1958 = vadd.f32 0.0, %v1957
      %v1959 = vpop.f32.mrb[0].mxu0
      %1960 = vmatprep.mubr.bf16.mxu0 0
      %1961 = vmatmul.mubr.bf16.gmra.mrb[0].mxu0 %v1806
      %v1962 = vpop.f32.mrb[0].mxu0
      %v1963 = vadd.f32 0.0, %v1962
      %v1964 = vpop.f32.mrb[0].mxu0
      %v1965 = vpop.f32.mrb[0].mxu0
      %v1966 = vadd.f32 0.0, %v1965
      %v1967 = vpop.f32.mrb[0].mxu0
      %1968 = vdwg.mxu0
      %v1969 = vadd.f32 %v1735, %v1843
      %v1970 = vadd.f32 %v1736, %v1846
      %v1971 = vadd.f32 %v1737, %v1851
      %v1972 = vadd.f32 %v1738, %v1854
      %v1973 = vadd.f32 %v1739, %v1859
      %v1974 = vadd.f32 %v1740, %v1862
      %v1975 = vadd.f32 %v1741, %v1867
      %v1976 = vadd.f32 %v1742, %v1870
      %v1977 = vadd.f32 %v1743, %v1875
      %v1978 = vadd.f32 %v1744, %v1878
      %v1979 = vadd.f32 %v1745, %v1883
      %v1980 = vadd.f32 %v1746, %v1886
      %v1981 = vadd.f32 %v1747, %v1891
      %v1982 = vadd.f32 %v1748, %v1894
      %v1983 = vadd.f32 %v1749, %v1899
      %v1984 = vadd.f32 %v1750, %v1902
      %v1985 = vadd.f32 %v1751, %v1907
      %v1986 = vadd.f32 %v1752, %v1910
      %v1987 = vadd.f32 %v1753, %v1915
      %v1988 = vadd.f32 %v1754, %v1918
      %v1989 = vadd.f32 %v1755, %v1923
      %v1990 = vadd.f32 %v1756, %v1926
      %v1991 = vadd.f32 %v1757, %v1931
      %v1992 = vadd.f32 %v1758, %v1934
      %v1993 = vadd.f32 %v1759, %v1939
      %v1994 = vadd.f32 %v1760, %v1942
      %v1995 = vadd.f32 %v1761, %v1947
      %v1996 = vadd.f32 %v1762, %v1950
      %v1997 = vadd.f32 %v1763, %v1955
      %v1998 = vadd.f32 %v1764, %v1958
      %v1999 = vadd.f32 %v1765, %v1963
      %v2000 = vadd.f32 %v1766, %v1966
      %v2002 = vshrl.u32 %v309, 16
      %v2004 = vrot.slane %v2002, 4
      %v2005 = vshll.u32 %v309, 16
      %v2007 = vrot.slane %v2005, 5
      %v2008 = vor.u32 %v2004, %v2007
      %v2009 = vrot.slane %v2008, 4
      %v2011 = vshll.u32 %v310, 16
      %v2013 = vrot.slane %v2011, 5
      %v2014 = vsel %vm325, %v2009, %v2013
      %v2015 = vshrl.u32 %v310, 16
      %v2017 = vrot.slane %v2015, 4
      %v2018 = vor.u32 %v2017, %v2013
      %v2019 = vrot.slane %v2018, 4
      %v2021 = vshll.u32 %v311, 16
      %v2023 = vrot.slane %v2021, 5
      %v2024 = vsel %vm325, %v2019, %v2023
      %s2025 = scalar_lea.vmem %s244, 128
      %v2026 = vld [vmem:[%s2025] sm:$0xf]
      %v2027 = vld [vmem:[%s2025 + $0x4] sm:$0xf]
      %v2028 = vld [vmem:[%s2025 + $0x8] sm:$0xf]
      %v2029 = vld [vmem:[%s2025 + $0xc] sm:$0xf]
      %v2030 = vld [vmem:[%s2025 + $0x10] sm:$0xf]
      %v2031 = vld [vmem:[%s2025 + $0x14] sm:$0xf]
      %v2032 = vld [vmem:[%s2025 + $0x18] sm:$0xf]
      %v2033 = vld [vmem:[%s2025 + $0x1c] sm:$0xf]
      %v2034 = vunpack.c.l.b16 %v2014
      %v2035 = vunpack.c.l.b16 %v2024
      %v2036 = vpack.c.b16 %v2035, %v2034
      %v2045 = vunpack.c.l.b16 %v2026
      %v2046 = vunpack.c.l.b16 %v2027
      %v2047 = vunpack.c.l.b16 %v2028
      %v2048 = vunpack.c.l.b16 %v2029
      %v2049 = vunpack.c.l.b16 %v2030
      %v2050 = vunpack.c.l.b16 %v2031
      %v2051 = vunpack.c.l.b16 %v2032
      %v2052 = vunpack.c.l.b16 %v2033
      %v2053 = vpack.c.b16 %v2046, %v2045
      %v2054 = vpack.c.b16 %v2048, %v2047
      %v2055 = vpack.c.b16 %v2050, %v2049
      %v2056 = vpack.c.b16 %v2052, %v2051
      %v2062 = vsel %vm791, %v2036, 0
      %2064 = vmatprep.subr.bf16.mxu0 0
      %2065 = vmatpush1.bf16.msra.mxu0 %v2053
      %2066 = vmatprep.subr.bf16.mxu0 0
      %2067 = vmatpush1.bf16.msra.mxu0 %v2054
      %2068 = vmatprep.subr.bf16.mxu0 0
      %2069 = vmatpush1.bf16.msra.mxu0 %v2055
      %2070 = vmatprep.subr.bf16.mxu0 0
      %2071 = vmatpush1.bf16.msra.mxu0 %v2056
      %2072 = vmatprep.subr.bf16.mxu0 0
      %2073 = vmatpush1.bf16.msra.mxu0 0
      %2074 = vmatprep.subr.bf16.mxu0 0
      %2075 = vmatpush1.bf16.msra.mxu0 0
      %2076 = vmatprep.subr.bf16.mxu0 0
      %2077 = vmatpush1.bf16.msra.mxu0 0
      %2078 = vmatprep.subr.bf16.mxu0 0
      %2079 = vmatpush1.bf16.msra.mxu0 0
      %2080 = vmatprep.subr.bf16.mxu0 0
      %2081 = vmatpush1.bf16.msra.mxu0 0
      %2082 = vmatprep.subr.bf16.mxu0 0
      %2083 = vmatpush1.bf16.msra.mxu0 0
      %2084 = vmatprep.subr.bf16.mxu0 0
      %2085 = vmatpush1.bf16.msra.mxu0 0
      %2086 = vmatprep.subr.bf16.mxu0 0
      %2087 = vmatpush1.bf16.msra.mxu0 0
      %2088 = vmatprep.subr.bf16.mxu0 0
      %2089 = vmatpush1.bf16.msra.mxu0 0
      %2090 = vmatprep.subr.bf16.mxu0 0
      %2091 = vmatpush1.bf16.msra.mxu0 0
      %2092 = vmatprep.subr.bf16.mxu0 0
      %2093 = vmatpush1.bf16.msra.mxu0 0
      %2094 = vmatprep.subr.bf16.mxu0 0
      %2095 = vmatpush1.bf16.msra.mxu0 0
      %2096 = vmatprep.mubr.bf16.mxu0 0
      %2097 = vmatmul.mubr.bf16.gmra.mrb[0].mxu0 %v796
      %v2098 = vpop.f32.mrb[0].mxu0
      %v2099 = vadd.f32 0.0, %v2098
      %v2100 = vpop.f32.mrb[0].mxu0
      %v2101 = vpop.f32.mrb[0].mxu0
      %v2102 = vadd.f32 0.0, %v2101
      %v2103 = vpop.f32.mrb[0].mxu0
      %2104 = vmatprep.mubr.bf16.mxu0 0
      %2105 = vmatmul.mubr.bf16.gmra.mrb[0].mxu0 %v799
      %v2106 = vpop.f32.mrb[0].mxu0
      %v2107 = vadd.f32 0.0, %v2106
      %v2108 = vpop.f32.mrb[0].mxu0
      %v2109 = vpop.f32.mrb[0].mxu0
      %v2110 = vadd.f32 0.0, %v2109
      %v2111 = vpop.f32.mrb[0].mxu0
      %2112 = vmatprep.mubr.bf16.mxu0 0
      %2113 = vmatmul.mubr.bf16.gmra.mrb[0].mxu0 %v802
      %v2114 = vpop.f32.mrb[0].mxu0
      %v2115 = vadd.f32 0.0, %v2114
      %v2116 = vpop.f32.mrb[0].mxu0
      %v2117 = vpop.f32.mrb[0].mxu0
      %v2118 = vadd.f32 0.0, %v2117
      %v2119 = vpop.f32.mrb[0].mxu0
      %2120 = vmatprep.mubr.bf16.mxu0 0
      %2121 = vmatmul.mubr.bf16.gmra.mrb[0].mxu0 %v805
      %v2122 = vpop.f32.mrb[0].mxu0
      %v2123 = vadd.f32 0.0, %v2122
      %v2124 = vpop.f32.mrb[0].mxu0
      %v2125 = vpop.f32.mrb[0].mxu0
      %v2126 = vadd.f32 0.0, %v2125
      %v2127 = vpop.f32.mrb[0].mxu0
      %2128 = vmatprep.mubr.bf16.mxu0 0
      %2129 = vmatmul.mubr.bf16.gmra.mrb[0].mxu0 %v808
      %v2130 = vpop.f32.mrb[0].mxu0
      %v2131 = vadd.f32 0.0, %v2130
      %v2132 = vpop.f32.mrb[0].mxu0
      %v2133 = vpop.f32.mrb[0].mxu0
      %v2134 = vadd.f32 0.0, %v2133
      %v2135 = vpop.f32.mrb[0].mxu0
      %2136 = vmatprep.mubr.bf16.mxu0 0
      %2137 = vmatmul.mubr.bf16.gmra.mrb[0].mxu0 %v811
      %v2138 = vpop.f32.mrb[0].mxu0
      %v2139 = vadd.f32 0.0, %v2138
      %v2140 = vpop.f32.mrb[0].mxu0
      %v2141 = vpop.f32.mrb[0].mxu0
      %v2142 = vadd.f32 0.0, %v2141
      %v2143 = vpop.f32.mrb[0].mxu0
      %2144 = vmatprep.mubr.bf16.mxu0 0
      %2145 = vmatmul.mubr.bf16.gmra.mrb[0].mxu0 %v814
      %v2146 = vpop.f32.mrb[0].mxu0
      %v2147 = vadd.f32 0.0, %v2146
      %v2148 = vpop.f32.mrb[0].mxu0
      %v2149 = vpop.f32.mrb[0].mxu0
      %v2150 = vadd.f32 0.0, %v2149
      %v2151 = vpop.f32.mrb[0].mxu0
      %2152 = vmatprep.mubr.bf16.mxu0 0
      %2153 = vmatmul.mubr.bf16.gmra.mrb[0].mxu0 %v817
      %v2154 = vpop.f32.mrb[0].mxu0
      %v2155 = vadd.f32 0.0, %v2154
      %v2156 = vpop.f32.mrb[0].mxu0
      %v2157 = vpop.f32.mrb[0].mxu0
      %v2158 = vadd.f32 0.0, %v2157
      %v2159 = vpop.f32.mrb[0].mxu0
      %2160 = vmatprep.mubr.bf16.mxu0 0
      %2161 = vmatmul.mubr.bf16.gmra.mrb[0].mxu0 %v820
      %v2162 = vpop.f32.mrb[0].mxu0
      %v2163 = vadd.f32 0.0, %v2162
      %v2164 = vpop.f32.mrb[0].mxu0
      %v2165 = vpop.f32.mrb[0].mxu0
      %v2166 = vadd.f32 0.0, %v2165
      %v2167 = vpop.f32.mrb[0].mxu0
      %2168 = vmatprep.mubr.bf16.mxu0 0
      %2169 = vmatmul.mubr.bf16.gmra.mrb[0].mxu0 %v823
      %v2170 = vpop.f32.mrb[0].mxu0
      %v2171 = vadd.f32 0.0, %v2170
      %v2172 = vpop.f32.mrb[0].mxu0
      %v2173 = vpop.f32.mrb[0].mxu0
      %v2174 = vadd.f32 0.0, %v2173
      %v2175 = vpop.f32.mrb[0].mxu0
      %2176 = vmatprep.mubr.bf16.mxu0 0
      %2177 = vmatmul.mubr.bf16.gmra.mrb[0].mxu0 %v826
      %v2178 = vpop.f32.mrb[0].mxu0
      %v2179 = vadd.f32 0.0, %v2178
      %v2180 = vpop.f32.mrb[0].mxu0
      %v2181 = vpop.f32.mrb[0].mxu0
      %v2182 = vadd.f32 0.0, %v2181
      %v2183 = vpop.f32.mrb[0].mxu0
      %2184 = vmatprep.mubr.bf16.mxu0 0
      %2185 = vmatmul.mubr.bf16.gmra.mrb[0].mxu0 %v829
      %v2186 = vpop.f32.mrb[0].mxu0
      %v2187 = vadd.f32 0.0, %v2186
      %v2188 = vpop.f32.mrb[0].mxu0
      %v2189 = vpop.f32.mrb[0].mxu0
      %v2190 = vadd.f32 0.0, %v2189
      %v2191 = vpop.f32.mrb[0].mxu0
      %2192 = vmatprep.mubr.bf16.mxu0 0
      %2193 = vmatmul.mubr.bf16.gmra.mrb[0].mxu0 %v832
      %v2194 = vpop.f32.mrb[0].mxu0
      %v2195 = vadd.f32 0.0, %v2194
      %v2196 = vpop.f32.mrb[0].mxu0
      %v2197 = vpop.f32.mrb[0].mxu0
      %v2198 = vadd.f32 0.0, %v2197
      %v2199 = vpop.f32.mrb[0].mxu0
      %2200 = vmatprep.mubr.bf16.mxu0 0
      %2201 = vmatmul.mubr.bf16.gmra.mrb[0].mxu0 %v835
      %v2202 = vpop.f32.mrb[0].mxu0
      %v2203 = vadd.f32 0.0, %v2202
      %v2204 = vpop.f32.mrb[0].mxu0
      %v2205 = vpop.f32.mrb[0].mxu0
      %v2206 = vadd.f32 0.0, %v2205
      %v2207 = vpop.f32.mrb[0].mxu0
      %2208 = vmatprep.mubr.bf16.mxu0 0
      %2209 = vmatmul.mubr.bf16.gmra.mrb[0].mxu0 %v838
      %v2210 = vpop.f32.mrb[0].mxu0
      %v2211 = vadd.f32 0.0, %v2210
      %v2212 = vpop.f32.mrb[0].mxu0
      %v2213 = vpop.f32.mrb[0].mxu0
      %v2214 = vadd.f32 0.0, %v2213
      %v2215 = vpop.f32.mrb[0].mxu0
      %2216 = vmatprep.mubr.bf16.mxu0 0
      %2217 = vmatmul.mubr.bf16.gmra.mrb[0].mxu0 %v2062
      %v2218 = vpop.f32.mrb[0].mxu0
      %v2219 = vadd.f32 0.0, %v2218
      %v2220 = vpop.f32.mrb[0].mxu0
      %v2221 = vpop.f32.mrb[0].mxu0
      %v2222 = vadd.f32 0.0, %v2221
      %v2223 = vpop.f32.mrb[0].mxu0
      %2224 = vdwg.mxu0
      %v2225 = vadd.f32 %v1969, %v2099
      %v2226 = vadd.f32 %v1970, %v2102
      %v2227 = vadd.f32 %v1971, %v2107
      %v2228 = vadd.f32 %v1972, %v2110
      %v2229 = vadd.f32 %v1973, %v2115
      %v2230 = vadd.f32 %v1974, %v2118
      %v2231 = vadd.f32 %v1975, %v2123
      %v2232 = vadd.f32 %v1976, %v2126
      %v2233 = vadd.f32 %v1977, %v2131
      %v2234 = vadd.f32 %v1978, %v2134
      %v2235 = vadd.f32 %v1979, %v2139
      %v2236 = vadd.f32 %v1980, %v2142
      %v2237 = vadd.f32 %v1981, %v2147
      %v2238 = vadd.f32 %v1982, %v2150
      %v2239 = vadd.f32 %v1983, %v2155
      %v2240 = vadd.f32 %v1984, %v2158
      %v2241 = vadd.f32 %v1985, %v2163
      %v2242 = vadd.f32 %v1986, %v2166
      %v2243 = vadd.f32 %v1987, %v2171
      %v2244 = vadd.f32 %v1988, %v2174
      %v2245 = vadd.f32 %v1989, %v2179
      %v2246 = vadd.f32 %v1990, %v2182
      %v2247 = vadd.f32 %v1991, %v2187
      %v2248 = vadd.f32 %v1992, %v2190
      %v2249 = vadd.f32 %v1993, %v2195
      %v2250 = vadd.f32 %v1994, %v2198
      %v2251 = vadd.f32 %v1995, %v2203
      %v2252 = vadd.f32 %v1996, %v2206
      %v2253 = vadd.f32 %v1997, %v2211
      %v2254 = vadd.f32 %v1998, %v2214
      %v2255 = vadd.f32 %v1999, %v2219
      %v2256 = vadd.f32 %v2000, %v2222
      %v2258 = vrot.slane %v309, 5
      %v2259 = vrot.slane %v2258, 4
      %v2260 = vrot.slane %v310, 5
      %v2261 = vsel %vm1332, %v2259, %v2260
      %v2262 = vrot.slane %v2260, 4
      %v2263 = vrot.slane %v311, 5
      %v2264 = vsel %vm1332, %v2262, %v2263
      %s2265 = scalar_lea.vmem %s244, 160
      %v2266 = vld [vmem:[%s2265] sm:$0xf]
      %v2267 = vld [vmem:[%s2265 + $0x4] sm:$0xf]
      %v2268 = vld [vmem:[%s2265 + $0x8] sm:$0xf]
      %v2269 = vld [vmem:[%s2265 + $0xc] sm:$0xf]
      %v2270 = vld [vmem:[%s2265 + $0x10] sm:$0xf]
      %v2271 = vld [vmem:[%s2265 + $0x14] sm:$0xf]
      %v2272 = vld [vmem:[%s2265 + $0x18] sm:$0xf]
      %v2273 = vld [vmem:[%s2265 + $0x1c] sm:$0xf]
      %v2274 = vunpack.c.l.b16 %v2261
      %v2275 = vunpack.c.l.b16 %v2264
      %v2276 = vpack.c.b16 %v2275, %v2274
      %v2285 = vunpack.c.l.b16 %v2266
      %v2286 = vunpack.c.l.b16 %v2267
      %v2287 = vunpack.c.l.b16 %v2268
      %v2288 = vunpack.c.l.b16 %v2269
      %v2289 = vunpack.c.l.b16 %v2270
      %v2290 = vunpack.c.l.b16 %v2271
      %v2291 = vunpack.c.l.b16 %v2272
      %v2292 = vunpack.c.l.b16 %v2273
      %v2293 = vpack.c.b16 %v2286, %v2285
      %v2294 = vpack.c.b16 %v2288, %v2287
      %v2295 = vpack.c.b16 %v2290, %v2289
      %v2296 = vpack.c.b16 %v2292, %v2291
      %v2302 = vsel %vm791, %v2276, 0
      %2304 = vmatprep.subr.bf16.mxu0 0
      %2305 = vmatpush1.bf16.msra.mxu0 %v2293
      %2306 = vmatprep.subr.bf16.mxu0 0
      %2307 = vmatpush1.bf16.msra.mxu0 %v2294
      %2308 = vmatprep.subr.bf16.mxu0 0
      %2309 = vmatpush1.bf16.msra.mxu0 %v2295
      %2310 = vmatprep.subr.bf16.mxu0 0
      %2311 = vmatpush1.bf16.msra.mxu0 %v2296
      %2312 = vmatprep.subr.bf16.mxu0 0
      %2313 = vmatpush1.bf16.msra.mxu0 0
      %2314 = vmatprep.subr.bf16.mxu0 0
      %2315 = vmatpush1.bf16.msra.mxu0 0
      %2316 = vmatprep.subr.bf16.mxu0 0
      %2317 = vmatpush1.bf16.msra.mxu0 0
      %2318 = vmatprep.subr.bf16.mxu0 0
      %2319 = vmatpush1.bf16.msra.mxu0 0
      %2320 = vmatprep.subr.bf16.mxu0 0
      %2321 = vmatpush1.bf16.msra.mxu0 0
      %2322 = vmatprep.subr.bf16.mxu0 0
      %2323 = vmatpush1.bf16.msra.mxu0 0
      %2324 = vmatprep.subr.bf16.mxu0 0
      %2325 = vmatpush1.bf16.msra.mxu0 0
      %2326 = vmatprep.subr.bf16.mxu0 0
      %2327 = vmatpush1.bf16.msra.mxu0 0
      %2328 = vmatprep.subr.bf16.mxu0 0
      %2329 = vmatpush1.bf16.msra.mxu0 0
      %2330 = vmatprep.subr.bf16.mxu0 0
      %2331 = vmatpush1.bf16.msra.mxu0 0
      %2332 = vmatprep.subr.bf16.mxu0 0
      %2333 = vmatpush1.bf16.msra.mxu0 0
      %2334 = vmatprep.subr.bf16.mxu0 0
      %2335 = vmatpush1.bf16.msra.mxu0 0
      %2336 = vmatprep.mubr.bf16.mxu0 0
      %2337 = vmatmul.mubr.bf16.gmra.mrb[0].mxu0 %v1530
      %v2338 = vpop.f32.mrb[0].mxu0
      %v2339 = vadd.f32 0.0, %v2338
      %v2340 = vpop.f32.mrb[0].mxu0
      %v2341 = vpop.f32.mrb[0].mxu0
      %v2342 = vadd.f32 0.0, %v2341
      %v2343 = vpop.f32.mrb[0].mxu0
      %2344 = vmatprep.mubr.bf16.mxu0 0
      %2345 = vmatmul.mubr.bf16.gmra.mrb[0].mxu0 %v1533
      %v2346 = vpop.f32.mrb[0].mxu0
      %v2347 = vadd.f32 0.0, %v2346
      %v2348 = vpop.f32.mrb[0].mxu0
      %v2349 = vpop.f32.mrb[0].mxu0
      %v2350 = vadd.f32 0.0, %v2349
      %v2351 = vpop.f32.mrb[0].mxu0
      %2352 = vmatprep.mubr.bf16.mxu0 0
      %2353 = vmatmul.mubr.bf16.gmra.mrb[0].mxu0 %v1536
      %v2354 = vpop.f32.mrb[0].mxu0
      %v2355 = vadd.f32 0.0, %v2354
      %v2356 = vpop.f32.mrb[0].mxu0
      %v2357 = vpop.f32.mrb[0].mxu0
      %v2358 = vadd.f32 0.0, %v2357
      %v2359 = vpop.f32.mrb[0].mxu0
      %2360 = vmatprep.mubr.bf16.mxu0 0
      %2361 = vmatmul.mubr.bf16.gmra.mrb[0].mxu0 %v1539
      %v2362 = vpop.f32.mrb[0].mxu0
      %v2363 = vadd.f32 0.0, %v2362
      %v2364 = vpop.f32.mrb[0].mxu0
      %v2365 = vpop.f32.mrb[0].mxu0
      %v2366 = vadd.f32 0.0, %v2365
      %v2367 = vpop.f32.mrb[0].mxu0
      %2368 = vmatprep.mubr.bf16.mxu0 0
      %2369 = vmatmul.mubr.bf16.gmra.mrb[0].mxu0 %v1542
      %v2370 = vpop.f32.mrb[0].mxu0
      %v2371 = vadd.f32 0.0, %v2370
      %v2372 = vpop.f32.mrb[0].mxu0
      %v2373 = vpop.f32.mrb[0].mxu0
      %v2374 = vadd.f32 0.0, %v2373
      %v2375 = vpop.f32.mrb[0].mxu0
      %2376 = vmatprep.mubr.bf16.mxu0 0
      %2377 = vmatmul.mubr.bf16.gmra.mrb[0].mxu0 %v1545
      %v2378 = vpop.f32.mrb[0].mxu0
      %v2379 = vadd.f32 0.0, %v2378
      %v2380 = vpop.f32.mrb[0].mxu0
      %v2381 = vpop.f32.mrb[0].mxu0
      %v2382 = vadd.f32 0.0, %v2381
      %v2383 = vpop.f32.mrb[0].mxu0
      %2384 = vmatprep.mubr.bf16.mxu0 0
      %2385 = vmatmul.mubr.bf16.gmra.mrb[0].mxu0 %v1548
      %v2386 = vpop.f32.mrb[0].mxu0
      %v2387 = vadd.f32 0.0, %v2386
      %v2388 = vpop.f32.mrb[0].mxu0
      %v2389 = vpop.f32.mrb[0].mxu0
      %v2390 = vadd.f32 0.0, %v2389
      %v2391 = vpop.f32.mrb[0].mxu0
      %2392 = vmatprep.mubr.bf16.mxu0 0
      %2393 = vmatmul.mubr.bf16.gmra.mrb[0].mxu0 %v1551
      %v2394 = vpop.f32.mrb[0].mxu0
      %v2395 = vadd.f32 0.0, %v2394
      %v2396 = vpop.f32.mrb[0].mxu0
      %v2397 = vpop.f32.mrb[0].mxu0
      %v2398 = vadd.f32 0.0, %v2397
      %v2399 = vpop.f32.mrb[0].mxu0
      %2400 = vmatprep.mubr.bf16.mxu0 0
      %2401 = vmatmul.mubr.bf16.gmra.mrb[0].mxu0 %v1554
      %v2402 = vpop.f32.mrb[0].mxu0
      %v2403 = vadd.f32 0.0, %v2402
      %v2404 = vpop.f32.mrb[0].mxu0
      %v2405 = vpop.f32.mrb[0].mxu0
      %v2406 = vadd.f32 0.0, %v2405
      %v2407 = vpop.f32.mrb[0].mxu0
      %2408 = vmatprep.mubr.bf16.mxu0 0
      %2409 = vmatmul.mubr.bf16.gmra.mrb[0].mxu0 %v1557
      %v2410 = vpop.f32.mrb[0].mxu0
      %v2411 = vadd.f32 0.0, %v2410
      %v2412 = vpop.f32.mrb[0].mxu0
      %v2413 = vpop.f32.mrb[0].mxu0
      %v2414 = vadd.f32 0.0, %v2413
      %v2415 = vpop.f32.mrb[0].mxu0
      %2416 = vmatprep.mubr.bf16.mxu0 0
      %2417 = vmatmul.mubr.bf16.gmra.mrb[0].mxu0 %v1560
      %v2418 = vpop.f32.mrb[0].mxu0
      %v2419 = vadd.f32 0.0, %v2418
      %v2420 = vpop.f32.mrb[0].mxu0
      %v2421 = vpop.f32.mrb[0].mxu0
      %v2422 = vadd.f32 0.0, %v2421
      %v2423 = vpop.f32.mrb[0].mxu0
      %2424 = vmatprep.mubr.bf16.mxu0 0
      %2425 = vmatmul.mubr.bf16.gmra.mrb[0].mxu0 %v1563
      %v2426 = vpop.f32.mrb[0].mxu0
      %v2427 = vadd.f32 0.0, %v2426
      %v2428 = vpop.f32.mrb[0].mxu0
      %v2429 = vpop.f32.mrb[0].mxu0
      %v2430 = vadd.f32 0.0, %v2429
      %v2431 = vpop.f32.mrb[0].mxu0
      %2432 = vmatprep.mubr.bf16.mxu0 0
      %2433 = vmatmul.mubr.bf16.gmra.mrb[0].mxu0 %v1566
      %v2434 = vpop.f32.mrb[0].mxu0
      %v2435 = vadd.f32 0.0, %v2434
      %v2436 = vpop.f32.mrb[0].mxu0
      %v2437 = vpop.f32.mrb[0].mxu0
      %v2438 = vadd.f32 0.0, %v2437
      %v2439 = vpop.f32.mrb[0].mxu0
      %2440 = vmatprep.mubr.bf16.mxu0 0
      %2441 = vmatmul.mubr.bf16.gmra.mrb[0].mxu0 %v1569
      %v2442 = vpop.f32.mrb[0].mxu0
      %v2443 = vadd.f32 0.0, %v2442
      %v2444 = vpop.f32.mrb[0].mxu0
      %v2445 = vpop.f32.mrb[0].mxu0
      %v2446 = vadd.f32 0.0, %v2445
      %v2447 = vpop.f32.mrb[0].mxu0
      %2448 = vmatprep.mubr.bf16.mxu0 0
      %2449 = vmatmul.mubr.bf16.gmra.mrb[0].mxu0 %v1572
      %v2450 = vpop.f32.mrb[0].mxu0
      %v2451 = vadd.f32 0.0, %v2450
      %v2452 = vpop.f32.mrb[0].mxu0
      %v2453 = vpop.f32.mrb[0].mxu0
      %v2454 = vadd.f32 0.0, %v2453
      %v2455 = vpop.f32.mrb[0].mxu0
      %2456 = vmatprep.mubr.bf16.mxu0 0
      %2457 = vmatmul.mubr.bf16.gmra.mrb[0].mxu0 %v2302
      %v2458 = vpop.f32.mrb[0].mxu0
      %v2459 = vadd.f32 0.0, %v2458
      %v2460 = vpop.f32.mrb[0].mxu0
      %v2461 = vpop.f32.mrb[0].mxu0
      %v2462 = vadd.f32 0.0, %v2461
      %v2463 = vpop.f32.mrb[0].mxu0
      %2464 = vdwg.mxu0
      %v2465 = vadd.f32 %v2225, %v2339
      %v2466 = vadd.f32 %v2226, %v2342
      %v2467 = vadd.f32 %v2227, %v2347
      %v2468 = vadd.f32 %v2228, %v2350
      %v2469 = vadd.f32 %v2229, %v2355
      %v2470 = vadd.f32 %v2230, %v2358
      %v2471 = vadd.f32 %v2231, %v2363
      %v2472 = vadd.f32 %v2232, %v2366
      %v2473 = vadd.f32 %v2233, %v2371
      %v2474 = vadd.f32 %v2234, %v2374
      %v2475 = vadd.f32 %v2235, %v2379
      %v2476 = vadd.f32 %v2236, %v2382
      %v2477 = vadd.f32 %v2237, %v2387
      %v2478 = vadd.f32 %v2238, %v2390
      %v2479 = vadd.f32 %v2239, %v2395
      %v2480 = vadd.f32 %v2240, %v2398
      %v2481 = vadd.f32 %v2241, %v2403
      %v2482 = vadd.f32 %v2242, %v2406
      %v2483 = vadd.f32 %v2243, %v2411
      %v2484 = vadd.f32 %v2244, %v2414
      %v2485 = vadd.f32 %v2245, %v2419
      %v2486 = vadd.f32 %v2246, %v2422
      %v2487 = vadd.f32 %v2247, %v2427
      %v2488 = vadd.f32 %v2248, %v2430
      %v2489 = vadd.f32 %v2249, %v2435
      %v2490 = vadd.f32 %v2250, %v2438
      %v2491 = vadd.f32 %v2251, %v2443
      %v2492 = vadd.f32 %v2252, %v2446
      %v2493 = vadd.f32 %v2253, %v2451
      %v2494 = vadd.f32 %v2254, %v2454
      %v2495 = vadd.f32 %v2255, %v2459
      %v2496 = vadd.f32 %v2256, %v2462
      %s2497 = scalar_lea.vmem %s244, 192
      %v2498 = vld [vmem:[%s2497] sm:$0xf]
      %v2499 = vld [vmem:[%s2497 + $0x4] sm:$0xf]
      %v2500 = vld [vmem:[%s2497 + $0x8] sm:$0xf]
      %v2501 = vld [vmem:[%s2497 + $0xc] sm:$0xf]
      %v2502 = vld [vmem:[%s2497 + $0x10] sm:$0xf]
      %v2503 = vld [vmem:[%s2497 + $0x14] sm:$0xf]
      %v2504 = vld [vmem:[%s2497 + $0x18] sm:$0xf]
      %v2505 = vld [vmem:[%s2497 + $0x1c] sm:$0xf]
      %v2508 = vunpack.c.l.b16 %v312
      %v2509 = vunpack.c.l.b16 %v313
      %v2510 = vpack.c.b16 %v2509, %v2508
      %v2519 = vunpack.c.l.b16 %v2498
      %v2520 = vunpack.c.l.b16 %v2499
      %v2521 = vunpack.c.l.b16 %v2500
      %v2522 = vunpack.c.l.b16 %v2501
      %v2523 = vunpack.c.l.b16 %v2502
      %v2524 = vunpack.c.l.b16 %v2503
      %v2525 = vunpack.c.l.b16 %v2504
      %v2526 = vunpack.c.l.b16 %v2505
      %v2527 = vpack.c.b16 %v2520, %v2519
      %v2528 = vpack.c.b16 %v2522, %v2521
      %v2529 = vpack.c.b16 %v2524, %v2523
      %v2530 = vpack.c.b16 %v2526, %v2525
      %v2536 = vsel %vm791, %v2510, 0
      %2538 = vmatprep.subr.bf16.mxu0 0
      %2539 = vmatpush1.bf16.msra.mxu0 %v2527
      %2540 = vmatprep.subr.bf16.mxu0 0
      %2541 = vmatpush1.bf16.msra.mxu0 %v2528
      %2542 = vmatprep.subr.bf16.mxu0 0
      %2543 = vmatpush1.bf16.msra.mxu0 %v2529
      %2544 = vmatprep.subr.bf16.mxu0 0
      %2545 = vmatpush1.bf16.msra.mxu0 %v2530
      %2546 = vmatprep.subr.bf16.mxu0 0
      %2547 = vmatpush1.bf16.msra.mxu0 0
      %2548 = vmatprep.subr.bf16.mxu0 0
      %2549 = vmatpush1.bf16.msra.mxu0 0
      %2550 = vmatprep.subr.bf16.mxu0 0
      %2551 = vmatpush1.bf16.msra.mxu0 0
      %2552 = vmatprep.subr.bf16.mxu0 0
      %2553 = vmatpush1.bf16.msra.mxu0 0
      %2554 = vmatprep.subr.bf16.mxu0 0
      %2555 = vmatpush1.bf16.msra.mxu0 0
      %2556 = vmatprep.subr.bf16.mxu0 0
      %2557 = vmatpush1.bf16.msra.mxu0 0
      %2558 = vmatprep.subr.bf16.mxu0 0
      %2559 = vmatpush1.bf16.msra.mxu0 0
      %2560 = vmatprep.subr.bf16.mxu0 0
      %2561 = vmatpush1.bf16.msra.mxu0 0
      %2562 = vmatprep.subr.bf16.mxu0 0
      %2563 = vmatpush1.bf16.msra.mxu0 0
      %2564 = vmatprep.subr.bf16.mxu0 0
      %2565 = vmatpush1.bf16.msra.mxu0 0
      %2566 = vmatprep.subr.bf16.mxu0 0
      %2567 = vmatpush1.bf16.msra.mxu0 0
      %2568 = vmatprep.subr.bf16.mxu0 0
      %2569 = vmatpush1.bf16.msra.mxu0 0
      %2570 = vmatprep.mubr.bf16.mxu0 0
      %2571 = vmatmul.mubr.bf16.gmra.mrb[0].mxu0 %v1112
      %v2572 = vpop.f32.mrb[0].mxu0
      %v2573 = vadd.f32 0.0, %v2572
      %v2574 = vpop.f32.mrb[0].mxu0
      %v2575 = vpop.f32.mrb[0].mxu0
      %v2576 = vadd.f32 0.0, %v2575
      %v2577 = vpop.f32.mrb[0].mxu0
      %2578 = vmatprep.mubr.bf16.mxu0 0
      %2579 = vmatmul.mubr.bf16.gmra.mrb[0].mxu0 %v1115
      %v2580 = vpop.f32.mrb[0].mxu0
      %v2581 = vadd.f32 0.0, %v2580
      %v2582 = vpop.f32.mrb[0].mxu0
      %v2583 = vpop.f32.mrb[0].mxu0
      %v2584 = vadd.f32 0.0, %v2583
      %v2585 = vpop.f32.mrb[0].mxu0
      %2586 = vmatprep.mubr.bf16.mxu0 0
      %2587 = vmatmul.mubr.bf16.gmra.mrb[0].mxu0 %v1118
      %v2588 = vpop.f32.mrb[0].mxu0
      %v2589 = vadd.f32 0.0, %v2588
      %v2590 = vpop.f32.mrb[0].mxu0
      %v2591 = vpop.f32.mrb[0].mxu0
      %v2592 = vadd.f32 0.0, %v2591
      %v2593 = vpop.f32.mrb[0].mxu0
      %2594 = vmatprep.mubr.bf16.mxu0 0
      %2595 = vmatmul.mubr.bf16.gmra.mrb[0].mxu0 %v1121
      %v2596 = vpop.f32.mrb[0].mxu0
      %v2597 = vadd.f32 0.0, %v2596
      %v2598 = vpop.f32.mrb[0].mxu0
      %v2599 = vpop.f32.mrb[0].mxu0
      %v2600 = vadd.f32 0.0, %v2599
      %v2601 = vpop.f32.mrb[0].mxu0
      %2602 = vmatprep.mubr.bf16.mxu0 0
      %2603 = vmatmul.mubr.bf16.gmra.mrb[0].mxu0 %v1124
      %v2604 = vpop.f32.mrb[0].mxu0
      %v2605 = vadd.f32 0.0, %v2604
      %v2606 = vpop.f32.mrb[0].mxu0
      %v2607 = vpop.f32.mrb[0].mxu0
      %v2608 = vadd.f32 0.0, %v2607
      %v2609 = vpop.f32.mrb[0].mxu0
      %2610 = vmatprep.mubr.bf16.mxu0 0
      %2611 = vmatmul.mubr.bf16.gmra.mrb[0].mxu0 %v1127
      %v2612 = vpop.f32.mrb[0].mxu0
      %v2613 = vadd.f32 0.0, %v2612
      %v2614 = vpop.f32.mrb[0].mxu0
      %v2615 = vpop.f32.mrb[0].mxu0
      %v2616 = vadd.f32 0.0, %v2615
      %v2617 = vpop.f32.mrb[0].mxu0
      %2618 = vmatprep.mubr.bf16.mxu0 0
      %2619 = vmatmul.mubr.bf16.gmra.mrb[0].mxu0 %v1130
      %v2620 = vpop.f32.mrb[0].mxu0
      %v2621 = vadd.f32 0.0, %v2620
      %v2622 = vpop.f32.mrb[0].mxu0
      %v2623 = vpop.f32.mrb[0].mxu0
      %v2624 = vadd.f32 0.0, %v2623
      %v2625 = vpop.f32.mrb[0].mxu0
      %2626 = vmatprep.mubr.bf16.mxu0 0
      %2627 = vmatmul.mubr.bf16.gmra.mrb[0].mxu0 %v1133
      %v2628 = vpop.f32.mrb[0].mxu0
      %v2629 = vadd.f32 0.0, %v2628
      %v2630 = vpop.f32.mrb[0].mxu0
      %v2631 = vpop.f32.mrb[0].mxu0
      %v2632 = vadd.f32 0.0, %v2631
      %v2633 = vpop.f32.mrb[0].mxu0
      %2634 = vmatprep.mubr.bf16.mxu0 0
      %2635 = vmatmul.mubr.bf16.gmra.mrb[0].mxu0 %v1136
      %v2636 = vpop.f32.mrb[0].mxu0
      %v2637 = vadd.f32 0.0, %v2636
      %v2638 = vpop.f32.mrb[0].mxu0
      %v2639 = vpop.f32.mrb[0].mxu0
      %v2640 = vadd.f32 0.0, %v2639
      %v2641 = vpop.f32.mrb[0].mxu0
      %2642 = vmatprep.mubr.bf16.mxu0 0
      %2643 = vmatmul.mubr.bf16.gmra.mrb[0].mxu0 %v1139
      %v2644 = vpop.f32.mrb[0].mxu0
      %v2645 = vadd.f32 0.0, %v2644
      %v2646 = vpop.f32.mrb[0].mxu0
      %v2647 = vpop.f32.mrb[0].mxu0
      %v2648 = vadd.f32 0.0, %v2647
      %v2649 = vpop.f32.mrb[0].mxu0
      %2650 = vmatprep.mubr.bf16.mxu0 0
      %2651 = vmatmul.mubr.bf16.gmra.mrb[0].mxu0 %v1142
      %v2652 = vpop.f32.mrb[0].mxu0
      %v2653 = vadd.f32 0.0, %v2652
      %v2654 = vpop.f32.mrb[0].mxu0
      %v2655 = vpop.f32.mrb[0].mxu0
      %v2656 = vadd.f32 0.0, %v2655
      %v2657 = vpop.f32.mrb[0].mxu0
      %2658 = vmatprep.mubr.bf16.mxu0 0
      %2659 = vmatmul.mubr.bf16.gmra.mrb[0].mxu0 %v1145
      %v2660 = vpop.f32.mrb[0].mxu0
      %v2661 = vadd.f32 0.0, %v2660
      %v2662 = vpop.f32.mrb[0].mxu0
      %v2663 = vpop.f32.mrb[0].mxu0
      %v2664 = vadd.f32 0.0, %v2663
      %v2665 = vpop.f32.mrb[0].mxu0
      %2666 = vmatprep.mubr.bf16.mxu0 0
      %2667 = vmatmul.mubr.bf16.gmra.mrb[0].mxu0 %v1148
      %v2668 = vpop.f32.mrb[0].mxu0
      %v2669 = vadd.f32 0.0, %v2668
      %v2670 = vpop.f32.mrb[0].mxu0
      %v2671 = vpop.f32.mrb[0].mxu0
      %v2672 = vadd.f32 0.0, %v2671
      %v2673 = vpop.f32.mrb[0].mxu0
      %2674 = vmatprep.mubr.bf16.mxu0 0
      %2675 = vmatmul.mubr.bf16.gmra.mrb[0].mxu0 %v1151
      %v2676 = vpop.f32.mrb[0].mxu0
      %v2677 = vadd.f32 0.0, %v2676
      %v2678 = vpop.f32.mrb[0].mxu0
      %v2679 = vpop.f32.mrb[0].mxu0
      %v2680 = vadd.f32 0.0, %v2679
      %v2681 = vpop.f32.mrb[0].mxu0
      %2682 = vmatprep.mubr.bf16.mxu0 0
      %2683 = vmatmul.mubr.bf16.gmra.mrb[0].mxu0 %v1806
      %v2684 = vpop.f32.mrb[0].mxu0
      %v2685 = vadd.f32 0.0, %v2684
      %v2686 = vpop.f32.mrb[0].mxu0
      %v2687 = vpop.f32.mrb[0].mxu0
      %v2688 = vadd.f32 0.0, %v2687
      %v2689 = vpop.f32.mrb[0].mxu0
      %2690 = vmatprep.mubr.bf16.mxu0 0
      %2691 = vmatmul.mubr.bf16.gmra.mrb[0].mxu0 %v2536
      %v2692 = vpop.f32.mrb[0].mxu0
      %v2693 = vadd.f32 0.0, %v2692
      %v2694 = vpop.f32.mrb[0].mxu0
      %v2695 = vpop.f32.mrb[0].mxu0
      %v2696 = vadd.f32 0.0, %v2695
      %v2697 = vpop.f32.mrb[0].mxu0
      %2698 = vdwg.mxu0
      %v2699 = vadd.f32 %v2465, %v2573
      %v2700 = vadd.f32 %v2466, %v2576
      %v2701 = vadd.f32 %v2467, %v2581
      %v2702 = vadd.f32 %v2468, %v2584
      %v2703 = vadd.f32 %v2469, %v2589
      %v2704 = vadd.f32 %v2470, %v2592
      %v2705 = vadd.f32 %v2471, %v2597
      %v2706 = vadd.f32 %v2472, %v2600
      %v2707 = vadd.f32 %v2473, %v2605
      %v2708 = vadd.f32 %v2474, %v2608
      %v2709 = vadd.f32 %v2475, %v2613
      %v2710 = vadd.f32 %v2476, %v2616
      %v2711 = vadd.f32 %v2477, %v2621
      %v2712 = vadd.f32 %v2478, %v2624
      %v2713 = vadd.f32 %v2479, %v2629
      %v2714 = vadd.f32 %v2480, %v2632
      %v2715 = vadd.f32 %v2481, %v2637
      %v2716 = vadd.f32 %v2482, %v2640
      %v2717 = vadd.f32 %v2483, %v2645
      %v2718 = vadd.f32 %v2484, %v2648
      %v2719 = vadd.f32 %v2485, %v2653
      %v2720 = vadd.f32 %v2486, %v2656
      %v2721 = vadd.f32 %v2487, %v2661
      %v2722 = vadd.f32 %v2488, %v2664
      %v2723 = vadd.f32 %v2489, %v2669
      %v2724 = vadd.f32 %v2490, %v2672
      %v2725 = vadd.f32 %v2491, %v2677
      %v2726 = vadd.f32 %v2492, %v2680
      %v2727 = vadd.f32 %v2493, %v2685
      %v2728 = vadd.f32 %v2494, %v2688
      %v2729 = vadd.f32 %v2495, %v2693
      %v2730 = vadd.f32 %v2496, %v2696
      %v2732 = vshrl.u32 %v312, 16
      %v2734 = vrot.slane %v2732, 4
      %v2735 = vshll.u32 %v312, 16
      %v2737 = vrot.slane %v2735, 5
      %v2738 = vor.u32 %v2734, %v2737
      %v2739 = vrot.slane %v2738, 4
      %v2741 = vshll.u32 %v313, 16
      %v2743 = vrot.slane %v2741, 5
      %v2744 = vsel %vm325, %v2739, %v2743
      %v2745 = vshrl.u32 %v313, 16
      %v2747 = vrot.slane %v2745, 4
      %v2748 = vor.u32 %v2747, %v2743
      %v2749 = vrot.slane %v2748, 4
      %v2751 = vshll.u32 %v314, 16
      %v2753 = vrot.slane %v2751, 5
      %v2754 = vsel %vm325, %v2749, %v2753
      %s2755 = scalar_lea.vmem %s244, 224
      %v2756 = vld [vmem:[%s2755] sm:$0xf]
      %v2757 = vld [vmem:[%s2755 + $0x4] sm:$0xf]
      %v2758 = vld [vmem:[%s2755 + $0x8] sm:$0xf]
      %v2759 = vld [vmem:[%s2755 + $0xc] sm:$0xf]
      %v2760 = vld [vmem:[%s2755 + $0x10] sm:$0xf]
      %v2761 = vld [vmem:[%s2755 + $0x14] sm:$0xf]
      %v2762 = vld [vmem:[%s2755 + $0x18] sm:$0xf]
      %v2763 = vld [vmem:[%s2755 + $0x1c] sm:$0xf]
      %v2764 = vunpack.c.l.b16 %v2744
      %v2765 = vunpack.c.l.b16 %v2754
      %v2766 = vpack.c.b16 %v2765, %v2764
      %v2775 = vunpack.c.l.b16 %v2756
      %v2776 = vunpack.c.l.b16 %v2757
      %v2777 = vunpack.c.l.b16 %v2758
      %v2778 = vunpack.c.l.b16 %v2759
      %v2779 = vunpack.c.l.b16 %v2760
      %v2780 = vunpack.c.l.b16 %v2761
      %v2781 = vunpack.c.l.b16 %v2762
      %v2782 = vunpack.c.l.b16 %v2763
      %v2783 = vpack.c.b16 %v2776, %v2775
      %v2784 = vpack.c.b16 %v2778, %v2777
      %v2785 = vpack.c.b16 %v2780, %v2779
      %v2786 = vpack.c.b16 %v2782, %v2781
      %v2792 = vsel %vm791, %v2766, 0
      %2794 = vmatprep.subr.bf16.mxu0 0
      %2795 = vmatpush1.bf16.msra.mxu0 %v2783
      %2796 = vmatprep.subr.bf16.mxu0 0
      %2797 = vmatpush1.bf16.msra.mxu0 %v2784
      %2798 = vmatprep.subr.bf16.mxu0 0
      %2799 = vmatpush1.bf16.msra.mxu0 %v2785
      %2800 = vmatprep.subr.bf16.mxu0 0
      %2801 = vmatpush1.bf16.msra.mxu0 %v2786
      %2802 = vmatprep.subr.bf16.mxu0 0
      %2803 = vmatpush1.bf16.msra.mxu0 0
      %2804 = vmatprep.subr.bf16.mxu0 0
      %2805 = vmatpush1.bf16.msra.mxu0 0
      %2806 = vmatprep.subr.bf16.mxu0 0
      %2807 = vmatpush1.bf16.msra.mxu0 0
      %2808 = vmatprep.subr.bf16.mxu0 0
      %2809 = vmatpush1.bf16.msra.mxu0 0
      %2810 = vmatprep.subr.bf16.mxu0 0
      %2811 = vmatpush1.bf16.msra.mxu0 0
      %2812 = vmatprep.subr.bf16.mxu0 0
      %2813 = vmatpush1.bf16.msra.mxu0 0
      %2814 = vmatprep.subr.bf16.mxu0 0
      %2815 = vmatpush1.bf16.msra.mxu0 0
      %2816 = vmatprep.subr.bf16.mxu0 0
      %2817 = vmatpush1.bf16.msra.mxu0 0
      %2818 = vmatprep.subr.bf16.mxu0 0
      %2819 = vmatpush1.bf16.msra.mxu0 0
      %2820 = vmatprep.subr.bf16.mxu0 0
      %2821 = vmatpush1.bf16.msra.mxu0 0
      %2822 = vmatprep.subr.bf16.mxu0 0
      %2823 = vmatpush1.bf16.msra.mxu0 0
      %2824 = vmatprep.subr.bf16.mxu0 0
      %2825 = vmatpush1.bf16.msra.mxu0 0
      %2826 = vmatprep.mubr.bf16.mxu0 0
      %2827 = vmatmul.mubr.bf16.gmra.mrb[0].mxu0 %v799
      %v2828 = vpop.f32.mrb[0].mxu0
      %v2829 = vadd.f32 0.0, %v2828
      %v2830 = vpop.f32.mrb[0].mxu0
      %v2831 = vpop.f32.mrb[0].mxu0
      %v2832 = vadd.f32 0.0, %v2831
      %v2833 = vpop.f32.mrb[0].mxu0
      %2834 = vmatprep.mubr.bf16.mxu0 0
      %2835 = vmatmul.mubr.bf16.gmra.mrb[0].mxu0 %v802
      %v2836 = vpop.f32.mrb[0].mxu0
      %v2837 = vadd.f32 0.0, %v2836
      %v2838 = vpop.f32.mrb[0].mxu0
      %v2839 = vpop.f32.mrb[0].mxu0
      %v2840 = vadd.f32 0.0, %v2839
      %v2841 = vpop.f32.mrb[0].mxu0
      %2842 = vmatprep.mubr.bf16.mxu0 0
      %2843 = vmatmul.mubr.bf16.gmra.mrb[0].mxu0 %v805
      %v2844 = vpop.f32.mrb[0].mxu0
      %v2845 = vadd.f32 0.0, %v2844
      %v2846 = vpop.f32.mrb[0].mxu0
      %v2847 = vpop.f32.mrb[0].mxu0
      %v2848 = vadd.f32 0.0, %v2847
      %v2849 = vpop.f32.mrb[0].mxu0
      %2850 = vmatprep.mubr.bf16.mxu0 0
      %2851 = vmatmul.mubr.bf16.gmra.mrb[0].mxu0 %v808
      %v2852 = vpop.f32.mrb[0].mxu0
      %v2853 = vadd.f32 0.0, %v2852
      %v2854 = vpop.f32.mrb[0].mxu0
      %v2855 = vpop.f32.mrb[0].mxu0
      %v2856 = vadd.f32 0.0, %v2855
      %v2857 = vpop.f32.mrb[0].mxu0
      %2858 = vmatprep.mubr.bf16.mxu0 0
      %2859 = vmatmul.mubr.bf16.gmra.mrb[0].mxu0 %v811
      %v2860 = vpop.f32.mrb[0].mxu0
      %v2861 = vadd.f32 0.0, %v2860
      %v2862 = vpop.f32.mrb[0].mxu0
      %v2863 = vpop.f32.mrb[0].mxu0
      %v2864 = vadd.f32 0.0, %v2863
      %v2865 = vpop.f32.mrb[0].mxu0
      %2866 = vmatprep.mubr.bf16.mxu0 0
      %2867 = vmatmul.mubr.bf16.gmra.mrb[0].mxu0 %v814
      %v2868 = vpop.f32.mrb[0].mxu0
      %v2869 = vadd.f32 0.0, %v2868
      %v2870 = vpop.f32.mrb[0].mxu0
      %v2871 = vpop.f32.mrb[0].mxu0
      %v2872 = vadd.f32 0.0, %v2871
      %v2873 = vpop.f32.mrb[0].mxu0
      %2874 = vmatprep.mubr.bf16.mxu0 0
      %2875 = vmatmul.mubr.bf16.gmra.mrb[0].mxu0 %v817
      %v2876 = vpop.f32.mrb[0].mxu0
      %v2877 = vadd.f32 0.0, %v2876
      %v2878 = vpop.f32.mrb[0].mxu0
      %v2879 = vpop.f32.mrb[0].mxu0
      %v2880 = vadd.f32 0.0, %v2879
      %v2881 = vpop.f32.mrb[0].mxu0
      %2882 = vmatprep.mubr.bf16.mxu0 0
      %2883 = vmatmul.mubr.bf16.gmra.mrb[0].mxu0 %v820
      %v2884 = vpop.f32.mrb[0].mxu0
      %v2885 = vadd.f32 0.0, %v2884
      %v2886 = vpop.f32.mrb[0].mxu0
      %v2887 = vpop.f32.mrb[0].mxu0
      %v2888 = vadd.f32 0.0, %v2887
      %v2889 = vpop.f32.mrb[0].mxu0
      %2890 = vmatprep.mubr.bf16.mxu0 0
      %2891 = vmatmul.mubr.bf16.gmra.mrb[0].mxu0 %v823
      %v2892 = vpop.f32.mrb[0].mxu0
      %v2893 = vadd.f32 0.0, %v2892
      %v2894 = vpop.f32.mrb[0].mxu0
      %v2895 = vpop.f32.mrb[0].mxu0
      %v2896 = vadd.f32 0.0, %v2895
      %v2897 = vpop.f32.mrb[0].mxu0
      %2898 = vmatprep.mubr.bf16.mxu0 0
      %2899 = vmatmul.mubr.bf16.gmra.mrb[0].mxu0 %v826
      %v2900 = vpop.f32.mrb[0].mxu0
      %v2901 = vadd.f32 0.0, %v2900
      %v2902 = vpop.f32.mrb[0].mxu0
      %v2903 = vpop.f32.mrb[0].mxu0
      %v2904 = vadd.f32 0.0, %v2903
      %v2905 = vpop.f32.mrb[0].mxu0
      %2906 = vmatprep.mubr.bf16.mxu0 0
      %2907 = vmatmul.mubr.bf16.gmra.mrb[0].mxu0 %v829
      %v2908 = vpop.f32.mrb[0].mxu0
      %v2909 = vadd.f32 0.0, %v2908
      %v2910 = vpop.f32.mrb[0].mxu0
      %v2911 = vpop.f32.mrb[0].mxu0
      %v2912 = vadd.f32 0.0, %v2911
      %v2913 = vpop.f32.mrb[0].mxu0
      %2914 = vmatprep.mubr.bf16.mxu0 0
      %2915 = vmatmul.mubr.bf16.gmra.mrb[0].mxu0 %v832
      %v2916 = vpop.f32.mrb[0].mxu0
      %v2917 = vadd.f32 0.0, %v2916
      %v2918 = vpop.f32.mrb[0].mxu0
      %v2919 = vpop.f32.mrb[0].mxu0
      %v2920 = vadd.f32 0.0, %v2919
      %v2921 = vpop.f32.mrb[0].mxu0
      %2922 = vmatprep.mubr.bf16.mxu0 0
      %2923 = vmatmul.mubr.bf16.gmra.mrb[0].mxu0 %v835
      %v2924 = vpop.f32.mrb[0].mxu0
      %v2925 = vadd.f32 0.0, %v2924
      %v2926 = vpop.f32.mrb[0].mxu0
      %v2927 = vpop.f32.mrb[0].mxu0
      %v2928 = vadd.f32 0.0, %v2927
      %v2929 = vpop.f32.mrb[0].mxu0
      %2930 = vmatprep.mubr.bf16.mxu0 0
      %2931 = vmatmul.mubr.bf16.gmra.mrb[0].mxu0 %v838
      %v2932 = vpop.f32.mrb[0].mxu0
      %v2933 = vadd.f32 0.0, %v2932
      %v2934 = vpop.f32.mrb[0].mxu0
      %v2935 = vpop.f32.mrb[0].mxu0
      %v2936 = vadd.f32 0.0, %v2935
      %v2937 = vpop.f32.mrb[0].mxu0
      %2938 = vmatprep.mubr.bf16.mxu0 0
      %2939 = vmatmul.mubr.bf16.gmra.mrb[0].mxu0 %v2062
      %v2940 = vpop.f32.mrb[0].mxu0
      %v2941 = vadd.f32 0.0, %v2940
      %v2942 = vpop.f32.mrb[0].mxu0
      %v2943 = vpop.f32.mrb[0].mxu0
      %v2944 = vadd.f32 0.0, %v2943
      %v2945 = vpop.f32.mrb[0].mxu0
      %2946 = vmatprep.mubr.bf16.mxu0 0
      %2947 = vmatmul.mubr.bf16.gmra.mrb[0].mxu0 %v2792
      %v2948 = vpop.f32.mrb[0].mxu0
      %v2949 = vadd.f32 0.0, %v2948
      %v2950 = vpop.f32.mrb[0].mxu0
      %v2951 = vpop.f32.mrb[0].mxu0
      %v2952 = vadd.f32 0.0, %v2951
      %v2953 = vpop.f32.mrb[0].mxu0
      %2954 = vdwg.mxu0
      %v2955 = vadd.f32 %v2699, %v2829
      %v2956 = vadd.f32 %v2700, %v2832
      %v2957 = vadd.f32 %v2701, %v2837
      %v2958 = vadd.f32 %v2702, %v2840
      %v2959 = vadd.f32 %v2703, %v2845
      %v2960 = vadd.f32 %v2704, %v2848
      %v2961 = vadd.f32 %v2705, %v2853
      %v2962 = vadd.f32 %v2706, %v2856
      %v2963 = vadd.f32 %v2707, %v2861
      %v2964 = vadd.f32 %v2708, %v2864
      %v2965 = vadd.f32 %v2709, %v2869
      %v2966 = vadd.f32 %v2710, %v2872
      %v2967 = vadd.f32 %v2711, %v2877
      %v2968 = vadd.f32 %v2712, %v2880
      %v2969 = vadd.f32 %v2713, %v2885
      %v2970 = vadd.f32 %v2714, %v2888
      %v2971 = vadd.f32 %v2715, %v2893
      %v2972 = vadd.f32 %v2716, %v2896
      %v2973 = vadd.f32 %v2717, %v2901
      %v2974 = vadd.f32 %v2718, %v2904
      %v2975 = vadd.f32 %v2719, %v2909
      %v2976 = vadd.f32 %v2720, %v2912
      %v2977 = vadd.f32 %v2721, %v2917
      %v2978 = vadd.f32 %v2722, %v2920
      %v2979 = vadd.f32 %v2723, %v2925
      %v2980 = vadd.f32 %v2724, %v2928
      %v2981 = vadd.f32 %v2725, %v2933
      %v2982 = vadd.f32 %v2726, %v2936
      %v2983 = vadd.f32 %v2727, %v2941
      %v2984 = vadd.f32 %v2728, %v2944
      %v2985 = vadd.f32 %v2729, %v2949
      %v2986 = vadd.f32 %v2730, %v2952
      %v2988 = vrot.slane %v312, 5
      %v2989 = vrot.slane %v2988, 4
      %v2990 = vrot.slane %v313, 5
      %v2991 = vsel %vm1332, %v2989, %v2990
      %v2992 = vrot.slane %v2990, 4
      %v2993 = vrot.slane %v314, 5
      %v2994 = vsel %vm1332, %v2992, %v2993
      %s2995 = scalar_lea.vmem %s244, 256
      %v2996 = vld [vmem:[%s2995] sm:$0xf]
      %v2997 = vld [vmem:[%s2995 + $0x4] sm:$0xf]
      %v2998 = vld [vmem:[%s2995 + $0x8] sm:$0xf]
      %v2999 = vld [vmem:[%s2995 + $0xc] sm:$0xf]
      %v3000 = vld [vmem:[%s2995 + $0x10] sm:$0xf]
      %v3001 = vld [vmem:[%s2995 + $0x14] sm:$0xf]
      %v3002 = vld [vmem:[%s2995 + $0x18] sm:$0xf]
      %v3003 = vld [vmem:[%s2995 + $0x1c] sm:$0xf]
      %v3004 = vunpack.c.l.b16 %v2991
      %v3005 = vunpack.c.l.b16 %v2994
      %v3006 = vpack.c.b16 %v3005, %v3004
      %v3015 = vunpack.c.l.b16 %v2996
      %v3016 = vunpack.c.l.b16 %v2997
      %v3017 = vunpack.c.l.b16 %v2998
      %v3018 = vunpack.c.l.b16 %v2999
      %v3019 = vunpack.c.l.b16 %v3000
      %v3020 = vunpack.c.l.b16 %v3001
      %v3021 = vunpack.c.l.b16 %v3002
      %v3022 = vunpack.c.l.b16 %v3003
      %v3023 = vpack.c.b16 %v3016, %v3015
      %v3024 = vpack.c.b16 %v3018, %v3017
      %v3025 = vpack.c.b16 %v3020, %v3019
      %v3026 = vpack.c.b16 %v3022, %v3021
      %v3032 = vsel %vm791, %v3006, 0
      %3034 = vmatprep.subr.bf16.mxu0 0
      %3035 = vmatpush1.bf16.msra.mxu0 %v3023
      %3036 = vmatprep.subr.bf16.mxu0 0
      %3037 = vmatpush1.bf16.msra.mxu0 %v3024
      %3038 = vmatprep.subr.bf16.mxu0 0
      %3039 = vmatpush1.bf16.msra.mxu0 %v3025
      %3040 = vmatprep.subr.bf16.mxu0 0
      %3041 = vmatpush1.bf16.msra.mxu0 %v3026
      %3042 = vmatprep.subr.bf16.mxu0 0
      %3043 = vmatpush1.bf16.msra.mxu0 0
      %3044 = vmatprep.subr.bf16.mxu0 0
      %3045 = vmatpush1.bf16.msra.mxu0 0
      %3046 = vmatprep.subr.bf16.mxu0 0
      %3047 = vmatpush1.bf16.msra.mxu0 0
      %3048 = vmatprep.subr.bf16.mxu0 0
      %3049 = vmatpush1.bf16.msra.mxu0 0
      %3050 = vmatprep.subr.bf16.mxu0 0
      %3051 = vmatpush1.bf16.msra.mxu0 0
      %3052 = vmatprep.subr.bf16.mxu0 0
      %3053 = vmatpush1.bf16.msra.mxu0 0
      %3054 = vmatprep.subr.bf16.mxu0 0
      %3055 = vmatpush1.bf16.msra.mxu0 0
      %3056 = vmatprep.subr.bf16.mxu0 0
      %3057 = vmatpush1.bf16.msra.mxu0 0
      %3058 = vmatprep.subr.bf16.mxu0 0
      %3059 = vmatpush1.bf16.msra.mxu0 0
      %3060 = vmatprep.subr.bf16.mxu0 0
      %3061 = vmatpush1.bf16.msra.mxu0 0
      %3062 = vmatprep.subr.bf16.mxu0 0
      %3063 = vmatpush1.bf16.msra.mxu0 0
      %3064 = vmatprep.subr.bf16.mxu0 0
      %3065 = vmatpush1.bf16.msra.mxu0 0
      %3066 = vmatprep.mubr.bf16.mxu0 0
      %3067 = vmatmul.mubr.bf16.gmra.mrb[0].mxu0 %v1533
      %v3068 = vpop.f32.mrb[0].mxu0
      %v3069 = vadd.f32 0.0, %v3068
      %v3070 = vpop.f32.mrb[0].mxu0
      %v3071 = vpop.f32.mrb[0].mxu0
      %v3072 = vadd.f32 0.0, %v3071
      %v3073 = vpop.f32.mrb[0].mxu0
      %3074 = vmatprep.mubr.bf16.mxu0 0
      %3075 = vmatmul.mubr.bf16.gmra.mrb[0].mxu0 %v1536
      %v3076 = vpop.f32.mrb[0].mxu0
      %v3077 = vadd.f32 0.0, %v3076
      %v3078 = vpop.f32.mrb[0].mxu0
      %v3079 = vpop.f32.mrb[0].mxu0
      %v3080 = vadd.f32 0.0, %v3079
      %v3081 = vpop.f32.mrb[0].mxu0
      %3082 = vmatprep.mubr.bf16.mxu0 0
      %3083 = vmatmul.mubr.bf16.gmra.mrb[0].mxu0 %v1539
      %v3084 = vpop.f32.mrb[0].mxu0
      %v3085 = vadd.f32 0.0, %v3084
      %v3086 = vpop.f32.mrb[0].mxu0
      %v3087 = vpop.f32.mrb[0].mxu0
      %v3088 = vadd.f32 0.0, %v3087
      %v3089 = vpop.f32.mrb[0].mxu0
      %3090 = vmatprep.mubr.bf16.mxu0 0
      %3091 = vmatmul.mubr.bf16.gmra.mrb[0].mxu0 %v1542
      %v3092 = vpop.f32.mrb[0].mxu0
      %v3093 = vadd.f32 0.0, %v3092
      %v3094 = vpop.f32.mrb[0].mxu0
      %v3095 = vpop.f32.mrb[0].mxu0
      %v3096 = vadd.f32 0.0, %v3095
      %v3097 = vpop.f32.mrb[0].mxu0
      %3098 = vmatprep.mubr.bf16.mxu0 0
      %3099 = vmatmul.mubr.bf16.gmra.mrb[0].mxu0 %v1545
      %v3100 = vpop.f32.mrb[0].mxu0
      %v3101 = vadd.f32 0.0, %v3100
      %v3102 = vpop.f32.mrb[0].mxu0
      %v3103 = vpop.f32.mrb[0].mxu0
      %v3104 = vadd.f32 0.0, %v3103
      %v3105 = vpop.f32.mrb[0].mxu0
      %3106 = vmatprep.mubr.bf16.mxu0 0
      %3107 = vmatmul.mubr.bf16.gmra.mrb[0].mxu0 %v1548
      %v3108 = vpop.f32.mrb[0].mxu0
      %v3109 = vadd.f32 0.0, %v3108
      %v3110 = vpop.f32.mrb[0].mxu0
      %v3111 = vpop.f32.mrb[0].mxu0
      %v3112 = vadd.f32 0.0, %v3111
      %v3113 = vpop.f32.mrb[0].mxu0
      %3114 = vmatprep.mubr.bf16.mxu0 0
      %3115 = vmatmul.mubr.bf16.gmra.mrb[0].mxu0 %v1551
      %v3116 = vpop.f32.mrb[0].mxu0
      %v3117 = vadd.f32 0.0, %v3116
      %v3118 = vpop.f32.mrb[0].mxu0
      %v3119 = vpop.f32.mrb[0].mxu0
      %v3120 = vadd.f32 0.0, %v3119
      %v3121 = vpop.f32.mrb[0].mxu0
      %3122 = vmatprep.mubr.bf16.mxu0 0
      %3123 = vmatmul.mubr.bf16.gmra.mrb[0].mxu0 %v1554
      %v3124 = vpop.f32.mrb[0].mxu0
      %v3125 = vadd.f32 0.0, %v3124
      %v3126 = vpop.f32.mrb[0].mxu0
      %v3127 = vpop.f32.mrb[0].mxu0
      %v3128 = vadd.f32 0.0, %v3127
      %v3129 = vpop.f32.mrb[0].mxu0
      %3130 = vmatprep.mubr.bf16.mxu0 0
      %3131 = vmatmul.mubr.bf16.gmra.mrb[0].mxu0 %v1557
      %v3132 = vpop.f32.mrb[0].mxu0
      %v3133 = vadd.f32 0.0, %v3132
      %v3134 = vpop.f32.mrb[0].mxu0
      %v3135 = vpop.f32.mrb[0].mxu0
      %v3136 = vadd.f32 0.0, %v3135
      %v3137 = vpop.f32.mrb[0].mxu0
      %3138 = vmatprep.mubr.bf16.mxu0 0
      %3139 = vmatmul.mubr.bf16.gmra.mrb[0].mxu0 %v1560
      %v3140 = vpop.f32.mrb[0].mxu0
      %v3141 = vadd.f32 0.0, %v3140
      %v3142 = vpop.f32.mrb[0].mxu0
      %v3143 = vpop.f32.mrb[0].mxu0
      %v3144 = vadd.f32 0.0, %v3143
      %v3145 = vpop.f32.mrb[0].mxu0
      %3146 = vmatprep.mubr.bf16.mxu0 0
      %3147 = vmatmul.mubr.bf16.gmra.mrb[0].mxu0 %v1563
      %v3148 = vpop.f32.mrb[0].mxu0
      %v3149 = vadd.f32 0.0, %v3148
      %v3150 = vpop.f32.mrb[0].mxu0
      %v3151 = vpop.f32.mrb[0].mxu0
      %v3152 = vadd.f32 0.0, %v3151
      %v3153 = vpop.f32.mrb[0].mxu0
      %3154 = vmatprep.mubr.bf16.mxu0 0
      %3155 = vmatmul.mubr.bf16.gmra.mrb[0].mxu0 %v1566
      %v3156 = vpop.f32.mrb[0].mxu0
      %v3157 = vadd.f32 0.0, %v3156
      %v3158 = vpop.f32.mrb[0].mxu0
      %v3159 = vpop.f32.mrb[0].mxu0
      %v3160 = vadd.f32 0.0, %v3159
      %v3161 = vpop.f32.mrb[0].mxu0
      %3162 = vmatprep.mubr.bf16.mxu0 0
      %3163 = vmatmul.mubr.bf16.gmra.mrb[0].mxu0 %v1569
      %v3164 = vpop.f32.mrb[0].mxu0
      %v3165 = vadd.f32 0.0, %v3164
      %v3166 = vpop.f32.mrb[0].mxu0
      %v3167 = vpop.f32.mrb[0].mxu0
      %v3168 = vadd.f32 0.0, %v3167
      %v3169 = vpop.f32.mrb[0].mxu0
      %3170 = vmatprep.mubr.bf16.mxu0 0
      %3171 = vmatmul.mubr.bf16.gmra.mrb[0].mxu0 %v1572
      %v3172 = vpop.f32.mrb[0].mxu0
      %v3173 = vadd.f32 0.0, %v3172
      %v3174 = vpop.f32.mrb[0].mxu0
      %v3175 = vpop.f32.mrb[0].mxu0
      %v3176 = vadd.f32 0.0, %v3175
      %v3177 = vpop.f32.mrb[0].mxu0
      %3178 = vmatprep.mubr.bf16.mxu0 0
      %3179 = vmatmul.mubr.bf16.gmra.mrb[0].mxu0 %v2302
      %v3180 = vpop.f32.mrb[0].mxu0
      %v3181 = vadd.f32 0.0, %v3180
      %v3182 = vpop.f32.mrb[0].mxu0
      %v3183 = vpop.f32.mrb[0].mxu0
      %v3184 = vadd.f32 0.0, %v3183
      %v3185 = vpop.f32.mrb[0].mxu0
      %3186 = vmatprep.mubr.bf16.mxu0 0
      %3187 = vmatmul.mubr.bf16.gmra.mrb[0].mxu0 %v3032
      %v3188 = vpop.f32.mrb[0].mxu0
      %v3189 = vadd.f32 0.0, %v3188
      %v3190 = vpop.f32.mrb[0].mxu0
      %v3191 = vpop.f32.mrb[0].mxu0
      %v3192 = vadd.f32 0.0, %v3191
      %v3193 = vpop.f32.mrb[0].mxu0
      %3194 = vdwg.mxu0
      %v3195 = vadd.f32 %v2955, %v3069
      %v3196 = vadd.f32 %v2956, %v3072
      %v3197 = vadd.f32 %v2957, %v3077
      %v3198 = vadd.f32 %v2958, %v3080
      %v3199 = vadd.f32 %v2959, %v3085
      %v3200 = vadd.f32 %v2960, %v3088
      %v3201 = vadd.f32 %v2961, %v3093
      %v3202 = vadd.f32 %v2962, %v3096
      %v3203 = vadd.f32 %v2963, %v3101
      %v3204 = vadd.f32 %v2964, %v3104
      %v3205 = vadd.f32 %v2965, %v3109
      %v3206 = vadd.f32 %v2966, %v3112
      %v3207 = vadd.f32 %v2967, %v3117
      %v3208 = vadd.f32 %v2968, %v3120
      %v3209 = vadd.f32 %v2969, %v3125
      %v3210 = vadd.f32 %v2970, %v3128
      %v3211 = vadd.f32 %v2971, %v3133
      %v3212 = vadd.f32 %v2972, %v3136
      %v3213 = vadd.f32 %v2973, %v3141
      %v3214 = vadd.f32 %v2974, %v3144
      %v3215 = vadd.f32 %v2975, %v3149
      %v3216 = vadd.f32 %v2976, %v3152
      %v3217 = vadd.f32 %v2977, %v3157
      %v3218 = vadd.f32 %v2978, %v3160
      %v3219 = vadd.f32 %v2979, %v3165
      %v3220 = vadd.f32 %v2980, %v3168
      %v3221 = vadd.f32 %v2981, %v3173
      %v3222 = vadd.f32 %v2982, %v3176
      %v3223 = vadd.f32 %v2983, %v3181
      %v3224 = vadd.f32 %v2984, %v3184
      %v3225 = vadd.f32 %v2985, %v3189
      %v3226 = vadd.f32 %v2986, %v3192
      %v3227 = vld [vmem:[%s247] sm:$0x1]
      %v3229 = vlaneseq
      %v3230 = vshrl.u32 %v3229, 7
      %v3231 = vsub.s32 0, %v3230
      %v3232 = vrot.slane %v3227, %v3231
      %v3234 = vadd.f32 %v3195, %v3232
      %v3235 = vadd.f32 %v3196, %v3232
      %v3236 = vadd.f32 %v3197, %v3232
      %v3237 = vadd.f32 %v3198, %v3232
      %v3238 = vadd.f32 %v3199, %v3232
      %v3239 = vadd.f32 %v3200, %v3232
      %v3240 = vadd.f32 %v3201, %v3232
      %v3241 = vadd.f32 %v3202, %v3232
      %v3242 = vadd.f32 %v3203, %v3232
      %v3243 = vadd.f32 %v3204, %v3232
      %v3244 = vadd.f32 %v3205, %v3232
      %v3245 = vadd.f32 %v3206, %v3232
      %v3246 = vadd.f32 %v3207, %v3232
      %v3247 = vadd.f32 %v3208, %v3232
      %v3248 = vadd.f32 %v3209, %v3232
      %v3249 = vadd.f32 %v3210, %v3232
      %v3250 = vadd.f32 %v3211, %v3232
      %v3251 = vadd.f32 %v3212, %v3232
      %v3252 = vadd.f32 %v3213, %v3232
      %v3253 = vadd.f32 %v3214, %v3232
      %v3254 = vadd.f32 %v3215, %v3232
      %v3255 = vadd.f32 %v3216, %v3232
      %v3256 = vadd.f32 %v3217, %v3232
      %v3257 = vadd.f32 %v3218, %v3232
      %v3258 = vadd.f32 %v3219, %v3232
      %v3259 = vadd.f32 %v3220, %v3232
      %v3260 = vadd.f32 %v3221, %v3232
      %v3261 = vadd.f32 %v3222, %v3232
      %v3262 = vadd.f32 %v3223, %v3232
      %v3263 = vadd.f32 %v3224, %v3232
      %v3264 = vadd.f32 %v3225, %v3232
      %v3265 = vadd.f32 %v3226, %v3232
      %v3266 = vpack.c.bf16 %v3235, %v3234
      %v3267 = vpack.c.bf16 %v3237, %v3236
      %v3268 = vpack.c.bf16 %v3239, %v3238
      %v3269 = vpack.c.bf16 %v3241, %v3240
      %v3270 = vpack.c.bf16 %v3243, %v3242
      %v3271 = vpack.c.bf16 %v3245, %v3244
      %v3272 = vpack.c.bf16 %v3247, %v3246
      %v3273 = vpack.c.bf16 %v3249, %v3248
      %v3274 = vpack.c.bf16 %v3251, %v3250
      %v3275 = vpack.c.bf16 %v3253, %v3252
      %v3276 = vpack.c.bf16 %v3255, %v3254
      %v3277 = vpack.c.bf16 %v3257, %v3256
      %v3278 = vpack.c.bf16 %v3259, %v3258
      %v3279 = vpack.c.bf16 %v3261, %v3260
      %v3280 = vpack.c.bf16 %v3263, %v3262
      %v3281 = vpack.c.bf16 %v3265, %v3264
      %v3298 = vunpack.c.l.b16 %v3266
      %v3299 = vunpack.c.h.b16 %v3266
      %v3300 = vunpack.c.l.b16 %v3267
      %v3301 = vunpack.c.h.b16 %v3267
      %v3302 = vunpack.c.l.b16 %v3268
      %v3303 = vunpack.c.h.b16 %v3268
      %v3304 = vunpack.c.l.b16 %v3269
      %v3305 = vunpack.c.h.b16 %v3269
      %v3306 = vunpack.c.l.b16 %v3270
      %v3307 = vunpack.c.h.b16 %v3270
      %v3308 = vunpack.c.l.b16 %v3271
      %v3309 = vunpack.c.h.b16 %v3271
      %v3310 = vunpack.c.l.b16 %v3272
      %v3311 = vunpack.c.h.b16 %v3272
      %v3312 = vunpack.c.l.b16 %v3273
      %v3313 = vunpack.c.h.b16 %v3273
      %v3314 = vunpack.c.l.b16 %v3274
      %v3315 = vunpack.c.h.b16 %v3274
      %v3316 = vunpack.c.l.b16 %v3275
      %v3317 = vunpack.c.h.b16 %v3275
      %v3318 = vunpack.c.l.b16 %v3276
      %v3319 = vunpack.c.h.b16 %v3276
      %v3320 = vunpack.c.l.b16 %v3277
      %v3321 = vunpack.c.h.b16 %v3277
      %v3322 = vunpack.c.l.b16 %v3278
      %v3323 = vunpack.c.h.b16 %v3278
      %v3324 = vunpack.c.l.b16 %v3279
      %v3325 = vunpack.c.h.b16 %v3279
      %v3326 = vunpack.c.l.b16 %v3280
      %v3327 = vunpack.c.h.b16 %v3280
      %v3328 = vunpack.c.l.b16 %v3281
      %v3329 = vunpack.c.h.b16 %v3281
      %v3330 = vpack.c.b16 %v3298, %v3298
      %v3331 = vpack.c.b16 %v3299, %v3299
      %v3332 = vpack.c.b16 %v3300, %v3300
      %v3333 = vpack.c.b16 %v3301, %v3301
      %v3334 = vpack.c.b16 %v3302, %v3302
      %v3335 = vpack.c.b16 %v3303, %v3303
      %v3336 = vpack.c.b16 %v3304, %v3304
      %v3337 = vpack.c.b16 %v3305, %v3305
      %v3338 = vpack.c.b16 %v3306, %v3306
      %v3339 = vpack.c.b16 %v3307, %v3307
      %v3340 = vpack.c.b16 %v3308, %v3308
      %v3341 = vpack.c.b16 %v3309, %v3309
      %v3342 = vpack.c.b16 %v3310, %v3310
      %v3343 = vpack.c.b16 %v3311, %v3311
      %v3344 = vpack.c.b16 %v3312, %v3312
      %v3345 = vpack.c.b16 %v3313, %v3313
      %v3346 = vpack.c.b16 %v3314, %v3314
      %v3347 = vpack.c.b16 %v3315, %v3315
      %v3348 = vpack.c.b16 %v3316, %v3316
      %v3349 = vpack.c.b16 %v3317, %v3317
      %v3350 = vpack.c.b16 %v3318, %v3318
      %v3351 = vpack.c.b16 %v3319, %v3319
      %v3352 = vpack.c.b16 %v3320, %v3320
      %v3353 = vpack.c.b16 %v3321, %v3321
      %v3354 = vpack.c.b16 %v3322, %v3322
      %v3355 = vpack.c.b16 %v3323, %v3323
      %v3356 = vpack.c.b16 %v3324, %v3324
      %v3357 = vpack.c.b16 %v3325, %v3325
      %v3358 = vpack.c.b16 %v3326, %v3326
      %v3359 = vpack.c.b16 %v3327, %v3327
      %v3360 = vpack.c.b16 %v3328, %v3328
      %v3361 = vpack.c.b16 %v3329, %v3329
      %vm3394 = vcmask 519168
      %3395 = vst.msk [vmem:[%s255] sm:$0xf] %vm3394, %v3330
      %3396 = vst.msk [vmem:[%s255 + $0x4] sm:$0xf] %vm3394, %v3331
      %3397 = vst.msk [vmem:[%s255 + $0x8] sm:$0xf] %vm3394, %v3332
      %3398 = vst.msk [vmem:[%s255 + $0xc] sm:$0xf] %vm3394, %v3333
      %3399 = vst.msk [vmem:[%s255 + $0x10] sm:$0xf] %vm3394, %v3334
      %3400 = vst.msk [vmem:[%s255 + $0x14] sm:$0xf] %vm3394, %v3335
      %3401 = vst.msk [vmem:[%s255 + $0x18] sm:$0xf] %vm3394, %v3336
      %3402 = vst.msk [vmem:[%s255 + $0x1c] sm:$0xf] %vm3394, %v3337
      %3403 = vst.msk [vmem:[%s255 + $0x20] sm:$0xf] %vm3394, %v3338
      %3404 = vst.msk [vmem:[%s255 + $0x24] sm:$0xf] %vm3394, %v3339
      %3405 = vst.msk [vmem:[%s255 + $0x28] sm:$0xf] %vm3394, %v3340
      %3406 = vst.msk [vmem:[%s255 + $0x2c] sm:$0xf] %vm3394, %v3341
      %3407 = vst.msk [vmem:[%s255 + $0x30] sm:$0xf] %vm3394, %v3342
      %3408 = vst.msk [vmem:[%s255 + $0x34] sm:$0xf] %vm3394, %v3343
      %3409 = vst.msk [vmem:[%s255 + $0x38] sm:$0xf] %vm3394, %v3344
      %3410 = vst.msk [vmem:[%s255 + $0x3c] sm:$0xf] %vm3394, %v3345
      %3411 = vst.msk [vmem:[%s255 + $0x40] sm:$0xf] %vm3394, %v3346
      %3412 = vst.msk [vmem:[%s255 + $0x44] sm:$0xf] %vm3394, %v3347
      %3413 = vst.msk [vmem:[%s255 + $0x48] sm:$0xf] %vm3394, %v3348
      %3414 = vst.msk [vmem:[%s255 + $0x4c] sm:$0xf] %vm3394, %v3349
      %3415 = vst.msk [vmem:[%s255 + $0x50] sm:$0xf] %vm3394, %v3350
      %3416 = vst.msk [vmem:[%s255 + $0x54] sm:$0xf] %vm3394, %v3351
      %3417 = vst.msk [vmem:[%s255 + $0x58] sm:$0xf] %vm3394, %v3352
      %3418 = vst.msk [vmem:[%s255 + $0x5c] sm:$0xf] %vm3394, %v3353
      %3419 = vst.msk [vmem:[%s255 + $0x60] sm:$0xf] %vm3394, %v3354
      %3420 = vst.msk [vmem:[%s255 + $0x64] sm:$0xf] %vm3394, %v3355
      %3421 = vst.msk [vmem:[%s255 + $0x68] sm:$0xf] %vm3394, %v3356
      %3422 = vst.msk [vmem:[%s255 + $0x6c] sm:$0xf] %vm3394, %v3357
      %3423 = vst.msk [vmem:[%s255 + $0x70] sm:$0xf] %vm3394, %v3358
      %3424 = vst.msk [vmem:[%s255 + $0x74] sm:$0xf] %vm3394, %v3359
      %3425 = vst.msk [vmem:[%s255 + $0x78] sm:$0xf] %vm3394, %v3360
      %3426 = vst.msk [vmem:[%s255 + $0x7c] sm:$0xf] %vm3394, %v3361
      %p3427 = scmp.eq.s32.totalorder %s21, 0
      // Predicated region
      $region33: #{decoder_block_forward.4} parent=31 // pred_check
        %p3428 = pneg %p3427
      $region34: #{decoder_block_forward.4} parent=31 // pred_check_branch
        %3430 = sbr.rel (%p3428) target = $region36
      $region35: #{decoder_block_forward.4} parent=31 // pred_region
        %vm3431 = vcmask 517120
        %3432 = vst.msk [vmem:[%s259] sm:$0x3] %vm3431, 0.0
      $region36: #{decoder_block_forward.4} parent=31 // pred_fallthru
        _
      %v3433 = vsel %vm791, %v3234, 0.0
      %v3434 = vsel %vm791, %v3235, 0.0
      %v3435 = vadd.f32 %v3433, %v3434
      %v3436 = vsel %vm791, %v3236, 0.0
      %v3437 = vadd.f32 %v3435, %v3436
      %v3438 = vsel %vm791, %v3237, 0.0
      %v3439 = vadd.f32 %v3437, %v3438
      %v3440 = vsel %vm791, %v3238, 0.0
      %v3441 = vadd.f32 %v3439, %v3440
      %v3442 = vsel %vm791, %v3239, 0.0
      %v3443 = vadd.f32 %v3441, %v3442
      %v3444 = vsel %vm791, %v3240, 0.0
      %v3445 = vadd.f32 %v3443, %v3444
      %v3446 = vsel %vm791, %v3241, 0.0
      %v3447 = vadd.f32 %v3445, %v3446
      %v3448 = vsel %vm791, %v3242, 0.0
      %v3449 = vadd.f32 %v3447, %v3448
      %v3450 = vsel %vm791, %v3243, 0.0
      %v3451 = vadd.f32 %v3449, %v3450
      %v3452 = vsel %vm791, %v3244, 0.0
      %v3453 = vadd.f32 %v3451, %v3452
      %v3454 = vsel %vm791, %v3245, 0.0
      %v3455 = vadd.f32 %v3453, %v3454
      %v3456 = vsel %vm791, %v3246, 0.0
      %v3457 = vadd.f32 %v3455, %v3456
      %v3458 = vsel %vm791, %v3247, 0.0
      %v3459 = vadd.f32 %v3457, %v3458
      %v3460 = vsel %vm791, %v3248, 0.0
      %v3461 = vadd.f32 %v3459, %v3460
      %v3462 = vsel %vm791, %v3249, 0.0
      %v3463 = vadd.f32 %v3461, %v3462
      %v3464 = vsel %vm791, %v3250, 0.0
      %v3465 = vadd.f32 %v3463, %v3464
      %v3466 = vsel %vm791, %v3251, 0.0
      %v3467 = vadd.f32 %v3465, %v3466
      %v3468 = vsel %vm791, %v3252, 0.0
      %v3469 = vadd.f32 %v3467, %v3468
      %v3470 = vsel %vm791, %v3253, 0.0
      %v3471 = vadd.f32 %v3469, %v3470
      %v3472 = vsel %vm791, %v3254, 0.0
      %v3473 = vadd.f32 %v3471, %v3472
      %v3474 = vsel %vm791, %v3255, 0.0
      %v3475 = vadd.f32 %v3473, %v3474
      %v3476 = vsel %vm791, %v3256, 0.0
      %v3477 = vadd.f32 %v3475, %v3476
      %v3478 = vsel %vm791, %v3257, 0.0
      %v3479 = vadd.f32 %v3477, %v3478
      %v3480 = vsel %vm791, %v3258, 0.0
      %v3481 = vadd.f32 %v3479, %v3480
      %v3482 = vsel %vm791, %v3259, 0.0
      %v3483 = vadd.f32 %v3481, %v3482
      %v3484 = vsel %vm791, %v3260, 0.0
      %v3485 = vadd.f32 %v3483, %v3484
      %v3486 = vsel %vm791, %v3261, 0.0
      %v3487 = vadd.f32 %v3485, %v3486
      %v3488 = vsel %vm791, %v3262, 0.0
      %v3489 = vadd.f32 %v3487, %v3488
      %v3490 = vsel %vm791, %v3263, 0.0
      %v3491 = vadd.f32 %v3489, %v3490
      %v3492 = vsel %vm791, %v3264, 0.0
      %v3493 = vadd.f32 %v3491, %v3492
      %v3494 = vsel %vm791, %v3265, 0.0
      %v3495 = vadd.f32 %v3493, %v3494
      %v3496 = vrot.slane %v3495, 4
      %v3497 = vadd.f32 %v3495, %v3496
      %v3498 = vrot.slane %v3497, 2
      %v3499 = vadd.f32 %v3497, %v3498
      %v3500 = vrot.slane %v3499, 1
      %v3501 = vadd.f32 %v3499, %v3500
      %v3502 = vmul.f32 %v3234, %v3234
      %v3503 = vmul.f32 %v3235, %v3235
      %v3504 = vmul.f32 %v3236, %v3236
      %v3505 = vmul.f32 %v3237, %v3237
      %v3506 = vmul.f32 %v3238, %v3238
      %v3507 = vmul.f32 %v3239, %v3239
      %v3508 = vmul.f32 %v3240, %v3240
      %v3509 = vmul.f32 %v3241, %v3241
      %v3510 = vmul.f32 %v3242, %v3242
      %v3511 = vmul.f32 %v3243, %v3243
      %v3512 = vmul.f32 %v3244, %v3244
      %v3513 = vmul.f32 %v3245, %v3245
      %v3514 = vmul.f32 %v3246, %v3246
      %v3515 = vmul.f32 %v3247, %v3247
      %v3516 = vmul.f32 %v3248, %v3248
      %v3517 = vmul.f32 %v3249, %v3249
      %v3518 = vmul.f32 %v3250, %v3250
      %v3519 = vmul.f32 %v3251, %v3251
      %v3520 = vmul.f32 %v3252, %v3252
      %v3521 = vmul.f32 %v3253, %v3253
      %v3522 = vmul.f32 %v3254, %v3254
      %v3523 = vmul.f32 %v3255, %v3255
      %v3524 = vmul.f32 %v3256, %v3256
      %v3525 = vmul.f32 %v3257, %v3257
      %v3526 = vmul.f32 %v3258, %v3258
      %v3527 = vmul.f32 %v3259, %v3259
      %v3528 = vmul.f32 %v3260, %v3260
      %v3529 = vmul.f32 %v3261, %v3261
      %v3530 = vmul.f32 %v3262, %v3262
      %v3531 = vmul.f32 %v3263, %v3263
      %v3532 = vmul.f32 %v3264, %v3264
      %v3533 = vmul.f32 %v3265, %v3265
      %v3534 = vsel %vm791, %v3502, 0.0
      %v3535 = vsel %vm791, %v3503, 0.0
      %v3536 = vadd.f32 %v3534, %v3535
      %v3537 = vsel %vm791, %v3504, 0.0
      %v3538 = vadd.f32 %v3536, %v3537
      %v3539 = vsel %vm791, %v3505, 0.0
      %v3540 = vadd.f32 %v3538, %v3539
      %v3541 = vsel %vm791, %v3506, 0.0
      %v3542 = vadd.f32 %v3540, %v3541
      %v3543 = vsel %vm791, %v3507, 0.0
      %v3544 = vadd.f32 %v3542, %v3543
      %v3545 = vsel %vm791, %v3508, 0.0
      %v3546 = vadd.f32 %v3544, %v3545
      %v3547 = vsel %vm791, %v3509, 0.0
      %v3548 = vadd.f32 %v3546, %v3547
      %v3549 = vsel %vm791, %v3510, 0.0
      %v3550 = vadd.f32 %v3548, %v3549
      %v3551 = vsel %vm791, %v3511, 0.0
      %v3552 = vadd.f32 %v3550, %v3551
      %v3553 = vsel %vm791, %v3512, 0.0
      %v3554 = vadd.f32 %v3552, %v3553
      %v3555 = vsel %vm791, %v3513, 0.0
      %v3556 = vadd.f32 %v3554, %v3555
      %v3557 = vsel %vm791, %v3514, 0.0
      %v3558 = vadd.f32 %v3556, %v3557
      %v3559 = vsel %vm791, %v3515, 0.0
      %v3560 = vadd.f32 %v3558, %v3559
      %v3561 = vsel %vm791, %v3516, 0.0
      %v3562 = vadd.f32 %v3560, %v3561
      %v3563 = vsel %vm791, %v3517, 0.0
      %v3564 = vadd.f32 %v3562, %v3563
      %v3565 = vsel %vm791, %v3518, 0.0
      %v3566 = vadd.f32 %v3564, %v3565
      %v3567 = vsel %vm791, %v3519, 0.0
      %v3568 = vadd.f32 %v3566, %v3567
      %v3569 = vsel %vm791, %v3520, 0.0
      %v3570 = vadd.f32 %v3568, %v3569
      %v3571 = vsel %vm791, %v3521, 0.0
      %v3572 = vadd.f32 %v3570, %v3571
      %v3573 = vsel %vm791, %v3522, 0.0
      %v3574 = vadd.f32 %v3572, %v3573
      %v3575 = vsel %vm791, %v3523, 0.0
      %v3576 = vadd.f32 %v3574, %v3575
      %v3577 = vsel %vm791, %v3524, 0.0
      %v3578 = vadd.f32 %v3576, %v3577
      %v3579 = vsel %vm791, %v3525, 0.0
      %v3580 = vadd.f32 %v3578, %v3579
      %v3581 = vsel %vm791, %v3526, 0.0
      %v3582 = vadd.f32 %v3580, %v3581
      %v3583 = vsel %vm791, %v3527, 0.0
      %v3584 = vadd.f32 %v3582, %v3583
      %v3585 = vsel %vm791, %v3528, 0.0
      %v3586 = vadd.f32 %v3584, %v3585
      %v3587 = vsel %vm791, %v3529, 0.0
      %v3588 = vadd.f32 %v3586, %v3587
      %v3589 = vsel %vm791, %v3530, 0.0
      %v3590 = vadd.f32 %v3588, %v3589
      %v3591 = vsel %vm791, %v3531, 0.0
      %v3592 = vadd.f32 %v3590, %v3591
      %v3593 = vsel %vm791, %v3532, 0.0
      %v3594 = vadd.f32 %v3592, %v3593
      %v3595 = vsel %vm791, %v3533, 0.0
      %v3596 = vadd.f32 %v3594, %v3595
      %v3597 = vrot.slane %v3596, 4
      %v3598 = vadd.f32 %v3596, %v3597
      %v3599 = vrot.slane %v3598, 2
      %v3600 = vadd.f32 %v3598, %v3599
      %v3601 = vrot.slane %v3600, 1
      %v3602 = vadd.f32 %v3600, %v3601
      %v3603 = vld [vmem:[%s259] sm:$0x3]
      %vm3604 = vcmask 1040384
      %v3605 = vsel %vm3604, %v3501, %v3602
      %v3606 = vadd.f32 %v3603, %v3605
      %vm3607 = vcmask 517120
      %3608 = vst.msk [vmem:[%s259] sm:$0x3] %vm3607, %v3606
      %p3609 = scmp.lt.s32.totalorder %s21, 1
      %s3610 = scalar_select %p3609, %s21, 1
      %p3611 = scmp.lt.s32.totalorder %s20, 0
      %s3612 = scalar_select %p3611, %s20, 0
      %s3613 = smul.addr %s3610, 32
      %s3614 = sadd.s32 %s3612, %s3613
      %s3615 = smul.addr %s3614, 4
      %s3616 = scalar_lea.vmem %s3, %s3615
      %p3617 = scmp.lt.s32.totalorder %s20, 0
      %s3618 = scalar_select %p3617, %s20, 0
      %s3619 = smul.addr %s3618, 2
      %s3620 = scalar_lea.vmem %s4, %s3619
      // Predicated region
      $region37: #{decoder_block_forward.4} parent=31 // pred_check
        %p3621 = pneg %p126
      $region38: #{decoder_block_forward.4} parent=31 // pred_check_branch
        %3623 = sbr.rel (%p3621) target = $region40
      $region39: #{decoder_block_forward.4} parent=31 // pred_region
        _
      $region40: #{decoder_block_forward.4} parent=31 // pred_fallthru
        _
      // Predicated region
      $region41: #{decoder_block_forward.4} parent=31 // pred_check
        %p3624 = pneg %p152
      $region42: #{decoder_block_forward.4} parent=31 // pred_check_branch
        %3626 = sbr.rel (%p3624) target = $region44
      $region43: #{decoder_block_forward.4} parent=31 // pred_region
        _
      $region44: #{decoder_block_forward.4} parent=31 // pred_fallthru
        _
      // Predicated region
      $region45: #{decoder_block_forward.4} parent=31 // pred_check
        %p3627 = pneg %p152
      $region46: #{decoder_block_forward.4} parent=31 // pred_check_branch
        %3629 = sbr.rel (%p3627) target = $region48
      $region47: #{decoder_block_forward.4} parent=31 // pred_region
        %p3630 = scmp.lt.s32.totalorder %s20, 0
        %s3631 = scalar_select %p3630, %s20, 0
        %s3632 = smul.addr %s3631, 2
        %s3633 = scalar_lea.vmem %s4, %s3632
      $region48: #{decoder_block_forward.4} parent=31 // pred_fallthru
        _
    $region32: #{decoder_block_forward.4} parent=5 // pred_fallthru
      _
    %p3634 = scmp.le.s32.totalorder 2, %s11
    // Predicated region
    $region49: #{decoder_block_forward.4} parent=5 // pred_check
      %p3635 = pneg %p3634
    $region50: #{decoder_block_forward.4} parent=5 // pred_check_branch
      %3637 = sbr.rel (%p3635) target = $region52
    $region51: #{decoder_block_forward.4} parent=5 // pred_region
      %s3638 = ssub.s32 %s11, 2
      // Predicated region
      $region53: #{decoder_block_forward.4} parent=51 // pred_check
        %p3639 = pneg %p132
      $region54: #{decoder_block_forward.4} parent=51 // pred_check_branch
        %3641 = sbr.rel (%p3639) target = $region56
      $region55: #{decoder_block_forward.4} parent=51 // pred_region
        %p3642 = scmp.lt.s32.totalorder %s23, 1
        %s3643 = scalar_select %p3642, %s23, 1
        %p3644 = scmp.lt.s32.totalorder %s22, 0
        %s3645 = scalar_select %p3644, %s22, 0
        %s3646 = smul.addr %s3643, 32
        %s3647 = sadd.s32 %s3645, %s3646
        %s3648 = smul.addr %s3647, 4
        %s3649 = scalar_lea.vmem %s3, %s3648
      $region56: #{decoder_block_forward.4} parent=51 // pred_fallthru
        _
    $region52: #{decoder_block_forward.4} parent=5 // pred_fallthru
      _
  $region6: #{decoder_block_forward.4} parent=0 // loop_footer
    %s15 = sadd.s32 1, %s11
  $region7: #{decoder_block_forward.4} parent=0 // loop_footer_branch
    %10 = sbr.rel target = $region3
  $region8: #{decoder_block_forward.4} parent=0 // loop_exit
    _

</llo_original>
